<compile_context>
chip_gen: v7x
topology: tpu7x:2x2x1
jax: 0.10.0
libtpu: 0.0.40
codegen_flags: <defaults>
</compile_context>

<pallas_src>
import jax
import jax.numpy as jnp
from jax.experimental import pallas as pl
from jax.experimental.pallas import tpu as pltpu


# ----------------------------- in-kernel math ------------------------------

_SQRT_2_OVER_PI = 0.7978845608028654


def _gelu(x):
    # tanh-approx GELU: transcendental goes to the EUP instead of a long VPU
    # polynomial.  Max deviation from torch.nn.GELU() (exact erf) ~1e-3.
    return 0.5 * x * (1.0 + jnp.tanh(_SQRT_2_OVER_PI * (x + 0.044715 * x * x * x)))


def _layer_norm(v, g, b, eps=1e-5):
    mu = jnp.mean(v, axis=-1, keepdims=True)
    var = jnp.mean((v - mu) ** 2, axis=-1, keepdims=True)
    return (v - mu) * jax.lax.rsqrt(var + eps) * g + b


def _linear(v, w, b):
    return jnp.dot(v, w, preferred_element_type=jnp.float32) + b


def _batched_transpose(x, bt, rows):
    """Per-batch 2-D transpose of a batch-folded matrix.

    x: (bt*rows, cols) -> (bt*cols, rows).  Static unroll over the small batch
    tile; only 2-D transposes + 8-aligned sublane concats (safe Mosaic ops).
    """
    if bt == 1:
        return x.T
    parts = [x[b * rows:(b + 1) * rows, :].T for b in range(bt)]
    return jnp.concatenate(parts, axis=0)


# --------------------------------- kernel ----------------------------------

def dual_mlp_mixer_kernel(x_ref, *refs):
    (emb_w, emb_b,
     b1w1, b1b1, b1w2, b1b2,
     b2w1, b2b1, b2w2, b2b2,
     ln1g, ln1b, ln2g, ln2b, ln3g, ln3b, ln4g, ln4b,
     g1w, g1b, g2w, g2b,
     og1w, og1b, og2w, og2b,
     outw, outb,
     out_ref) = refs

    bt, L, _ = x_ref.shape
    D = emb_w.shape[1]
    n_layers = b1w1.shape[0]

    # ---- fold the batch tile into the matmul M dimension ----
    # channel-mixing layout: (bt*L, D); token-mixing layout: (bt*D, L)
    if bt == 1:
        x2d = x_ref[0]                                              # (L, F)
    else:
        x2d = jnp.concatenate([x_ref[b] for b in range(bt)], axis=0)  # (bt*L, F)

    # input embedding: one matmul for the whole batch tile
    f2 = _linear(x2d, emb_w[...], emb_b[...])                       # (bt*L, D)
    f1 = _batched_transpose(f2, bt, L)                              # (bt*D, L)

    # TODO(synk): Dropout layers are eval-mode identities (training-mode
    # dropout masks are not implemented in-kernel).
    for li in range(n_layers):                  # static unroll (n_layers == 2)
        # block1: token mixing over L
        h1 = _gelu(_linear(f1, b1w1[li], b1b1[li]))                 # (bt*D, 2L)
        h1 = _linear(h1, b1w2[li], b1b2[li])                        # (bt*D, L)
        x1 = _layer_norm(h1 + f1, ln1g[li], ln1b[li])               # (bt*D, L)

        # block2: channel mixing over D
        h2 = _gelu(_linear(f2, b2w1[li], b2b1[li]))                 # (bt*L, 2D)
        h2 = _linear(h2, b2w2[li], b2b2[li])                        # (bt*L, D)
        x2 = _layer_norm(h2 + f2, ln2g[li], ln2b[li])               # (bt*L, D)

        # gat2(x2): gate over D, add (transposed) into the token branch
        gx2 = jax.nn.sigmoid(_linear(x2, g2w[li], g2b[li])) * x2    # (bt*L, D)
        x1 = _layer_norm(x1 + _batched_transpose(gx2, bt, L),
                         ln3g[li], ln3b[li])                        # (bt*D, L)

        # gat1(x1): gate over L, add (transposed) into the channel branch
        gx1 = jax.nn.sigmoid(_linear(x1, g1w[li], g1b[li])) * x1    # (bt*D, L)
        x2 = _layer_norm(x2 + _batched_transpose(gx1, bt, D),
                         ln4g[li], ln4b[li])                        # (bt*L, D)

        # carry layouts as-is across layers (no transpose round-trip)
        f1, f2 = x1, x2

    # ---- output gating + head ----
    og1 = jax.nn.sigmoid(_linear(f1, og1w[...], og1b[...])) * f1    # (bt*D, L)
    og2 = jax.nn.sigmoid(_linear(f2, og2w[...], og2b[...])) * f2    # (bt*L, D)

    fsum = _batched_transpose(og1, bt, D) + og2                     # (bt*L, D)

    # Linear(L*D -> 1): lane reduce over D, then one tiny selector matmul to
    # group-sum the L rows of each batch element; single (bt, 1) store.
    wtile = jnp.tile(outw[...], (bt, 1))                            # (bt*L, D)
    rowsum = jnp.sum(fsum * wtile, axis=1, keepdims=True)           # (bt*L, 1)
    col = jax.lax.broadcasted_iota(jnp.int32, (bt, bt * L), 1)
    row = jax.lax.broadcasted_iota(jnp.int32, (bt, bt * L), 0)
    sel_t = jnp.where((col >= row * L) & (col < (row + 1) * L), 1.0, 0.0)
    y = jnp.dot(sel_t, rowsum, preferred_element_type=jnp.float32)  # (bt, 1)
    out_ref[...] = y + outb[...]                                    # single store


# -------------------------------- wrapper -----------------------------------

def dual_mlp_mixer(x, params, *, batch_tile=None):
    B, L, F = x.shape
    if batch_tile is None:
        # Largest tile that keeps output blocks (8, 128)-friendly: multiples of
        # 8 when possible, otherwise the whole (small) batch in one grid step.
        batch_tile = 8 if (B % 8 == 0) else B
    assert B % batch_tile == 0, "batch must be divisible by batch_tile"
    grid = (B // batch_tile,)
    n_params = len(params)

    return pl.pallas_call(
        dual_mlp_mixer_kernel,
        out_shape=jax.ShapeDtypeStruct((B, 1), jnp.float32),
        grid=grid,
        in_specs=(
            [pl.BlockSpec((batch_tile, L, F), lambda i: (i, 0, 0))]
            + [pl.BlockSpec(memory_space=pltpu.MemorySpace.VMEM)] * n_params
        ),
        out_specs=pl.BlockSpec((batch_tile, 1), lambda i: (i, 0)),
        compiler_params=pltpu.CompilerParams(
            dimension_semantics=("parallel",),   # megacore batch split on v7x
        ),
    )(x, *params)


@jax.jit
def forward(x, *params):
    # PyTorch forward returns (None, output(x)); we return just the prediction.
    return dual_mlp_mixer(x, list(params))


# --------------------------- parameter construction -------------------------

def make_params(key, window_size, input_feature, d_model, n_layers=2):
    L, F, D, NL = window_size, input_feature, d_model, n_layers

    def uni(k, shape, fan_in):
        s = 1.0 / (fan_in ** 0.5)
        return jax.random.uniform(k, shape, jnp.float32, -s, s)

    keys = iter(jax.random.split(key, 32))
    params = [
        uni(next(keys), (F, D), F),             # input_embedding W  (in, out)
        uni(next(keys), (1, D), F),             # input_embedding b
        uni(next(keys), (NL, L, 2 * L), L),     # block1 lin1 W
        uni(next(keys), (NL, 1, 2 * L), L),     # block1 lin1 b
        uni(next(keys), (NL, 2 * L, L), 2 * L), # block1 lin2 W
        uni(next(keys), (NL, 1, L), 2 * L),     # block1 lin2 b
        uni(next(keys), (NL, D, 2 * D), D),     # block2 lin1 W
        uni(next(keys), (NL, 1, 2 * D), D),     # block2 lin1 b
        uni(next(keys), (NL, 2 * D, D), 2 * D), # block2 lin2 W
        uni(next(keys), (NL, 1, D), 2 * D),     # block2 lin2 b
        jnp.ones((NL, 1, L), jnp.float32),      # ln1 gamma
        jnp.zeros((NL, 1, L), jnp.float32),     # ln1 beta
        jnp.ones((NL, 1, D), jnp.float32),      # ln2 gamma
        jnp.zeros((NL, 1, D), jnp.float32),     # ln2 beta
        jnp.ones((NL, 1, L), jnp.float32),      # ln3 gamma
        jnp.zeros((NL, 1, L), jnp.float32),     # ln3 beta
        jnp.ones((NL, 1, D), jnp.float32),      # ln4 gamma
        jnp.zeros((NL, 1, D), jnp.float32),     # ln4 beta
        uni(next(keys), (NL, L, L), L),         # gat1 W
        uni(next(keys), (NL, 1, L), L),         # gat1 b
        uni(next(keys), (NL, D, D), D),         # gat2 W
        uni(next(keys), (NL, 1, D), D),         # gat2 b
        uni(next(keys), (L, L), L),             # out_gat1 W
        uni(next(keys), (1, L), L),             # out_gat1 b
        uni(next(keys), (D, D), D),             # out_gat2 W
        uni(next(keys), (1, D), D),             # out_gat2 b
        uni(next(keys), (L, D), L * D),         # output head W, flatten-aware (L, D)
        uni(next(keys), (1, 1), L * D),         # output head b
    ]
    return params


# ----------------------------------- main ------------------------------------

if __name__ == "__main__":
    B = 2            # batch
    L = 8            # configs.input_length (window_size)
    F = 8            # input_feature
    D = 32           # configs.d_model

    key = jax.random.PRNGKey(0)
    kx, kp = jax.random.split(key)
    x = jax.random.normal(kx, (B, L, F), dtype=jnp.float32)
    params = make_params(kp, window_size=L, input_feature=F, d_model=D, n_layers=2)

    y = forward(x, *params)
    jax.block_until_ready(y)
    assert y.shape == (B, 1) and y.dtype == jnp.float32
    print("KERNEL_OK")
</pallas_src>

<mosaic_0001>
module attributes {stable_mosaic.version = 11 : i64} {
  func.func @dual_mlp_mixer_kernel(%arg0: i32, %arg1: memref<2x8x8xf32, #tpu.memory_space<vmem>>, %arg2: memref<8x32xf32, #tpu.memory_space<vmem>>, %arg3: memref<1x32xf32, #tpu.memory_space<vmem>>, %arg4: memref<2x8x16xf32, #tpu.memory_space<vmem>>, %arg5: memref<2x1x16xf32, #tpu.memory_space<vmem>>, %arg6: memref<2x16x8xf32, #tpu.memory_space<vmem>>, %arg7: memref<2x1x8xf32, #tpu.memory_space<vmem>>, %arg8: memref<2x32x64xf32, #tpu.memory_space<vmem>>, %arg9: memref<2x1x64xf32, #tpu.memory_space<vmem>>, %arg10: memref<2x64x32xf32, #tpu.memory_space<vmem>>, %arg11: memref<2x1x32xf32, #tpu.memory_space<vmem>>, %arg12: memref<2x1x8xf32, #tpu.memory_space<vmem>>, %arg13: memref<2x1x8xf32, #tpu.memory_space<vmem>>, %arg14: memref<2x1x32xf32, #tpu.memory_space<vmem>>, %arg15: memref<2x1x32xf32, #tpu.memory_space<vmem>>, %arg16: memref<2x1x8xf32, #tpu.memory_space<vmem>>, %arg17: memref<2x1x8xf32, #tpu.memory_space<vmem>>, %arg18: memref<2x1x32xf32, #tpu.memory_space<vmem>>, %arg19: memref<2x1x32xf32, #tpu.memory_space<vmem>>, %arg20: memref<2x8x8xf32, #tpu.memory_space<vmem>>, %arg21: memref<2x1x8xf32, #tpu.memory_space<vmem>>, %arg22: memref<2x32x32xf32, #tpu.memory_space<vmem>>, %arg23: memref<2x1x32xf32, #tpu.memory_space<vmem>>, %arg24: memref<8x8xf32, #tpu.memory_space<vmem>>, %arg25: memref<1x8xf32, #tpu.memory_space<vmem>>, %arg26: memref<32x32xf32, #tpu.memory_space<vmem>>, %arg27: memref<1x32xf32, #tpu.memory_space<vmem>>, %arg28: memref<8x32xf32, #tpu.memory_space<vmem>>, %arg29: memref<1x1xf32, #tpu.memory_space<vmem>>, %arg30: memref<2x1xf32, #tpu.memory_space<vmem>>) attributes {dimension_semantics = [#tpu.dimension_semantics<parallel>], iteration_bounds = array<i64: 1>, scalar_prefetch = 0 : i64, scratch_operands = 0 : i64, tpu.core_type = #tpu.core_type<tc>, window_params = [{transform_indices = @transform_0, window_bounds = array<i64: 2, 8, 8>}, {pipeline_mode = #tpu.pipeline_mode<synchronous>, transform_indices = @transform_1, window_bounds = array<i64: 8, 32>}, {pipeline_mode = #tpu.pipeline_mode<synchronous>, transform_indices = @transform_2, window_bounds = array<i64: 1, 32>}, {pipeline_mode = #tpu.pipeline_mode<synchronous>, transform_indices = @transform_3, window_bounds = array<i64: 2, 8, 16>}, {pipeline_mode = #tpu.pipeline_mode<synchronous>, transform_indices = @transform_4, window_bounds = array<i64: 2, 1, 16>}, {pipeline_mode = #tpu.pipeline_mode<synchronous>, transform_indices = @transform_5, window_bounds = array<i64: 2, 16, 8>}, {pipeline_mode = #tpu.pipeline_mode<synchronous>, transform_indices = @transform_6, window_bounds = array<i64: 2, 1, 8>}, {pipeline_mode = #tpu.pipeline_mode<synchronous>, transform_indices = @transform_7, window_bounds = array<i64: 2, 32, 64>}, {pipeline_mode = #tpu.pipeline_mode<synchronous>, transform_indices = @transform_8, window_bounds = array<i64: 2, 1, 64>}, {pipeline_mode = #tpu.pipeline_mode<synchronous>, transform_indices = @transform_9, window_bounds = array<i64: 2, 64, 32>}, {pipeline_mode = #tpu.pipeline_mode<synchronous>, transform_indices = @transform_10, window_bounds = array<i64: 2, 1, 32>}, {pipeline_mode = #tpu.pipeline_mode<synchronous>, transform_indices = @transform_11, window_bounds = array<i64: 2, 1, 8>}, {pipeline_mode = #tpu.pipeline_mode<synchronous>, transform_indices = @transform_12, window_bounds = array<i64: 2, 1, 8>}, {pipeline_mode = #tpu.pipeline_mode<synchronous>, transform_indices = @transform_13, window_bounds = array<i64: 2, 1, 32>}, {pipeline_mode = #tpu.pipeline_mode<synchronous>, transform_indices = @transform_14, window_bounds = array<i64: 2, 1, 32>}, {pipeline_mode = #tpu.pipeline_mode<synchronous>, transform_indices = @transform_15, window_bounds = array<i64: 2, 1, 8>}, {pipeline_mode = #tpu.pipeline_mode<synchronous>, transform_indices = @transform_16, window_bounds = array<i64: 2, 1, 8>}, {pipeline_mode = #tpu.pipeline_mode<synchronous>, transform_indices = @transform_17, window_bounds = array<i64: 2, 1, 32>}, {pipeline_mode = #tpu.pipeline_mode<synchronous>, transform_indices = @transform_18, window_bounds = array<i64: 2, 1, 32>}, {pipeline_mode = #tpu.pipeline_mode<synchronous>, transform_indices = @transform_19, window_bounds = array<i64: 2, 8, 8>}, {pipeline_mode = #tpu.pipeline_mode<synchronous>, transform_indices = @transform_20, window_bounds = array<i64: 2, 1, 8>}, {pipeline_mode = #tpu.pipeline_mode<synchronous>, transform_indices = @transform_21, window_bounds = array<i64: 2, 32, 32>}, {pipeline_mode = #tpu.pipeline_mode<synchronous>, transform_indices = @transform_22, window_bounds = array<i64: 2, 1, 32>}, {pipeline_mode = #tpu.pipeline_mode<synchronous>, transform_indices = @transform_23, window_bounds = array<i64: 8, 8>}, {pipeline_mode = #tpu.pipeline_mode<synchronous>, transform_indices = @transform_24, window_bounds = array<i64: 1, 8>}, {pipeline_mode = #tpu.pipeline_mode<synchronous>, transform_indices = @transform_25, window_bounds = array<i64: 32, 32>}, {pipeline_mode = #tpu.pipeline_mode<synchronous>, transform_indices = @transform_26, window_bounds = array<i64: 1, 32>}, {pipeline_mode = #tpu.pipeline_mode<synchronous>, transform_indices = @transform_27, window_bounds = array<i64: 8, 32>}, {pipeline_mode = #tpu.pipeline_mode<synchronous>, transform_indices = @transform_28, window_bounds = array<i64: 1, 1>}, {transform_indices = @transform_29, window_bounds = array<i64: 2, 1>}]} {
    %c0 = arith.constant 0 : index
    %c0_0 = arith.constant 0 : index
    %c0_1 = arith.constant 0 : index
    %0 = vector.load %arg1[%c0, %c0_0, %c0_1] : memref<2x8x8xf32, #tpu.memory_space<vmem>>, vector<1x8x8xf32>
    %1 = vector.shape_cast %0 : vector<1x8x8xf32> to vector<8x8xf32>
    %c1 = arith.constant 1 : index
    %c0_2 = arith.constant 0 : index
    %c0_3 = arith.constant 0 : index
    %2 = vector.load %arg1[%c1, %c0_2, %c0_3] : memref<2x8x8xf32, #tpu.memory_space<vmem>>, vector<1x8x8xf32>
    %3 = vector.shape_cast %2 : vector<1x8x8xf32> to vector<8x8xf32>
    %4 = tpu.concatenate %1, %3 in 0 : vector<8x8xf32>, vector<8x8xf32> -> vector<16x8xf32>
    %c0_4 = arith.constant 0 : index
    %c0_5 = arith.constant 0 : index
    %5 = vector.load %arg2[%c0_4, %c0_5] : memref<8x32xf32, #tpu.memory_space<vmem>>, vector<8x32xf32>
    %c0_6 = arith.constant 0 : index
    %c0_7 = arith.constant 0 : index
    %6 = vector.load %arg3[%c0_6, %c0_7] : memref<1x32xf32, #tpu.memory_space<vmem>>, vector<1x32xf32>
    %cst = arith.constant dense<0.000000e+00> : vector<16x32xf32>
    %7 = tpu.matmul %4, %5, %cst {dimension_numbers = #tpu.dot_dimension_numbers<[1], [0], [0], [1], [0, 0, 1, 1], [], []>} : vector<16x8xf32>, vector<8x32xf32>, vector<16x32xf32> -> vector<16x32xf32>
    %8 = vector.broadcast %6 : vector<1x32xf32> to vector<16x32xf32>
    %9 = arith.addf %7, %8 : vector<16x32xf32>
    %10 = vector.extract_strided_slice %9 {offsets = [0, 0], sizes = [8, 32], strides = [1, 1]} : vector<16x32xf32> to vector<8x32xf32>
    %11 = tpu.transpose %10, [1, 0] : vector<8x32xf32> -> vector<32x8xf32>
    %12 = vector.extract_strided_slice %9 {offsets = [8, 0], sizes = [8, 32], strides = [1, 1]} : vector<16x32xf32> to vector<8x32xf32>
    %13 = tpu.transpose %12, [1, 0] : vector<8x32xf32> -> vector<32x8xf32>
    %14 = tpu.concatenate %11, %13 in 0 : vector<32x8xf32>, vector<32x8xf32> -> vector<64x8xf32>
    %c0_8 = arith.constant 0 : index
    %c0_9 = arith.constant 0 : index
    %c0_10 = arith.constant 0 : index
    %15 = vector.load %arg4[%c0_8, %c0_9, %c0_10] : memref<2x8x16xf32, #tpu.memory_space<vmem>>, vector<1x8x16xf32>
    %16 = vector.shape_cast %15 : vector<1x8x16xf32> to vector<8x16xf32>
    %c0_11 = arith.constant 0 : index
    %c0_12 = arith.constant 0 : index
    %c0_13 = arith.constant 0 : index
    %17 = vector.load %arg5[%c0_11, %c0_12, %c0_13] : memref<2x1x16xf32, #tpu.memory_space<vmem>>, vector<1x1x16xf32>
    %18 = vector.shape_cast %17 : vector<1x1x16xf32> to vector<1x16xf32>
    %cst_14 = arith.constant dense<0.000000e+00> : vector<64x16xf32>
    %19 = tpu.matmul %14, %16, %cst_14 {dimension_numbers = #tpu.dot_dimension_numbers<[1], [0], [0], [1], [0, 0, 1, 1], [], []>} : vector<64x8xf32>, vector<8x16xf32>, vector<64x16xf32> -> vector<64x16xf32>
    %20 = vector.broadcast %18 : vector<1x16xf32> to vector<64x16xf32>
    %21 = arith.addf %19, %20 : vector<64x16xf32>
    %cst_15 = arith.constant 5.000000e-01 : f32
    %22 = vector.broadcast %cst_15 : f32 to vector<64x16xf32>
    %23 = arith.mulf %22, %21 : vector<64x16xf32>
    %cst_16 = arith.constant 4.471500e-02 : f32
    %24 = vector.broadcast %cst_16 : f32 to vector<64x16xf32>
    %25 = arith.mulf %24, %21 : vector<64x16xf32>
    %26 = arith.mulf %25, %21 : vector<64x16xf32>
    %27 = arith.mulf %26, %21 : vector<64x16xf32>
    %28 = arith.addf %21, %27 : vector<64x16xf32>
    %cst_17 = arith.constant 0.797884583 : f32
    %29 = vector.broadcast %cst_17 : f32 to vector<64x16xf32>
    %30 = arith.mulf %29, %28 : vector<64x16xf32>
    %31 = math.tanh %30 : vector<64x16xf32>
    %cst_18 = arith.constant 1.000000e+00 : f32
    %32 = vector.broadcast %cst_18 : f32 to vector<64x16xf32>
    %33 = arith.addf %32, %31 : vector<64x16xf32>
    %34 = arith.mulf %23, %33 : vector<64x16xf32>
    %c0_19 = arith.constant 0 : index
    %c0_20 = arith.constant 0 : index
    %c0_21 = arith.constant 0 : index
    %35 = vector.load %arg6[%c0_19, %c0_20, %c0_21] : memref<2x16x8xf32, #tpu.memory_space<vmem>>, vector<1x16x8xf32>
    %36 = vector.shape_cast %35 : vector<1x16x8xf32> to vector<16x8xf32>
    %c0_22 = arith.constant 0 : index
    %c0_23 = arith.constant 0 : index
    %c0_24 = arith.constant 0 : index
    %37 = vector.load %arg7[%c0_22, %c0_23, %c0_24] : memref<2x1x8xf32, #tpu.memory_space<vmem>>, vector<1x1x8xf32>
    %38 = vector.shape_cast %37 : vector<1x1x8xf32> to vector<1x8xf32>
    %cst_25 = arith.constant dense<0.000000e+00> : vector<64x8xf32>
    %39 = tpu.matmul %34, %36, %cst_25 {dimension_numbers = #tpu.dot_dimension_numbers<[1], [0], [0], [1], [0, 0, 1, 1], [], []>} : vector<64x16xf32>, vector<16x8xf32>, vector<64x8xf32> -> vector<64x8xf32>
    %40 = vector.broadcast %38 : vector<1x8xf32> to vector<64x8xf32>
    %41 = arith.addf %39, %40 : vector<64x8xf32>
    %42 = arith.addf %41, %14 : vector<64x8xf32>
    %c0_26 = arith.constant 0 : index
    %c0_27 = arith.constant 0 : index
    %c0_28 = arith.constant 0 : index
    %43 = vector.load %arg12[%c0_26, %c0_27, %c0_28] : memref<2x1x8xf32, #tpu.memory_space<vmem>>, vector<1x1x8xf32>
    %44 = vector.shape_cast %43 : vector<1x1x8xf32> to vector<1x8xf32>
    %c0_29 = arith.constant 0 : index
    %c0_30 = arith.constant 0 : index
    %c0_31 = arith.constant 0 : index
    %45 = vector.load %arg13[%c0_29, %c0_30, %c0_31] : memref<2x1x8xf32, #tpu.memory_space<vmem>>, vector<1x1x8xf32>
    %46 = vector.shape_cast %45 : vector<1x1x8xf32> to vector<1x8xf32>
    %cst_32 = arith.constant dense<0.000000e+00> : vector<64xf32>
    %47 = vector.multi_reduction <add>, %42, %cst_32 [1] : vector<64x8xf32> to vector<64xf32>
    %48 = vector.shape_cast %47 : vector<64xf32> to vector<64x1xf32>
    %cst_33 = arith.constant 8.000000e+00 : f32
    %49 = vector.broadcast %cst_33 : f32 to vector<64x1xf32>
    %50 = arith.divf %48, %49 : vector<64x1xf32>
    %51 = vector.broadcast %50 : vector<64x1xf32> to vector<64x8xf32>
    %52 = arith.subf %42, %51 : vector<64x8xf32>
    %53 = arith.mulf %52, %52 : vector<64x8xf32>
    %cst_34 = arith.constant dense<0.000000e+00> : vector<64xf32>
    %54 = vector.multi_reduction <add>, %53, %cst_34 [1] : vector<64x8xf32> to vector<64xf32>
    %55 = vector.shape_cast %54 : vector<64xf32> to vector<64x1xf32>
    %cst_35 = arith.constant 8.000000e+00 : f32
    %56 = vector.broadcast %cst_35 : f32 to vector<64x1xf32>
    %57 = arith.divf %55, %56 : vector<64x1xf32>
    %58 = vector.broadcast %50 : vector<64x1xf32> to vector<64x8xf32>
    %59 = arith.subf %42, %58 : vector<64x8xf32>
    %cst_36 = arith.constant 9.99999974E-6 : f32
    %60 = vector.broadcast %cst_36 : f32 to vector<64x1xf32>
    %61 = arith.addf %57, %60 : vector<64x1xf32>
    %62 = math.rsqrt %61 : vector<64x1xf32>
    %63 = vector.broadcast %62 : vector<64x1xf32> to vector<64x8xf32>
    %64 = arith.mulf %59, %63 : vector<64x8xf32>
    %65 = vector.broadcast %44 : vector<1x8xf32> to vector<64x8xf32>
    %66 = arith.mulf %64, %65 : vector<64x8xf32>
    %67 = vector.broadcast %46 : vector<1x8xf32> to vector<64x8xf32>
    %68 = arith.addf %66, %67 : vector<64x8xf32>
    %c0_37 = arith.constant 0 : index
    %c0_38 = arith.constant 0 : index
    %c0_39 = arith.constant 0 : index
    %69 = vector.load %arg8[%c0_37, %c0_38, %c0_39] : memref<2x32x64xf32, #tpu.memory_space<vmem>>, vector<1x32x64xf32>
    %70 = vector.shape_cast %69 : vector<1x32x64xf32> to vector<32x64xf32>
    %c0_40 = arith.constant 0 : index
    %c0_41 = arith.constant 0 : index
    %c0_42 = arith.constant 0 : index
    %71 = vector.load %arg9[%c0_40, %c0_41, %c0_42] : memref<2x1x64xf32, #tpu.memory_space<vmem>>, vector<1x1x64xf32>
    %72 = vector.shape_cast %71 : vector<1x1x64xf32> to vector<1x64xf32>
    %cst_43 = arith.constant dense<0.000000e+00> : vector<16x64xf32>
    %73 = tpu.matmul %9, %70, %cst_43 {dimension_numbers = #tpu.dot_dimension_numbers<[1], [0], [0], [1], [0, 0, 1, 1], [], []>} : vector<16x32xf32>, vector<32x64xf32>, vector<16x64xf32> -> vector<16x64xf32>
    %74 = vector.broadcast %72 : vector<1x64xf32> to vector<16x64xf32>
    %75 = arith.addf %73, %74 : vector<16x64xf32>
    %cst_44 = arith.constant 5.000000e-01 : f32
    %76 = vector.broadcast %cst_44 : f32 to vector<16x64xf32>
    %77 = arith.mulf %76, %75 : vector<16x64xf32>
    %cst_45 = arith.constant 4.471500e-02 : f32
    %78 = vector.broadcast %cst_45 : f32 to vector<16x64xf32>
    %79 = arith.mulf %78, %75 : vector<16x64xf32>
    %80 = arith.mulf %79, %75 : vector<16x64xf32>
    %81 = arith.mulf %80, %75 : vector<16x64xf32>
    %82 = arith.addf %75, %81 : vector<16x64xf32>
    %cst_46 = arith.constant 0.797884583 : f32
    %83 = vector.broadcast %cst_46 : f32 to vector<16x64xf32>
    %84 = arith.mulf %83, %82 : vector<16x64xf32>
    %85 = math.tanh %84 : vector<16x64xf32>
    %cst_47 = arith.constant 1.000000e+00 : f32
    %86 = vector.broadcast %cst_47 : f32 to vector<16x64xf32>
    %87 = arith.addf %86, %85 : vector<16x64xf32>
    %88 = arith.mulf %77, %87 : vector<16x64xf32>
    %c0_48 = arith.constant 0 : index
    %c0_49 = arith.constant 0 : index
    %c0_50 = arith.constant 0 : index
    %89 = vector.load %arg10[%c0_48, %c0_49, %c0_50] : memref<2x64x32xf32, #tpu.memory_space<vmem>>, vector<1x64x32xf32>
    %90 = vector.shape_cast %89 : vector<1x64x32xf32> to vector<64x32xf32>
    %c0_51 = arith.constant 0 : index
    %c0_52 = arith.constant 0 : index
    %c0_53 = arith.constant 0 : index
    %91 = vector.load %arg11[%c0_51, %c0_52, %c0_53] : memref<2x1x32xf32, #tpu.memory_space<vmem>>, vector<1x1x32xf32>
    %92 = vector.shape_cast %91 : vector<1x1x32xf32> to vector<1x32xf32>
    %cst_54 = arith.constant dense<0.000000e+00> : vector<16x32xf32>
    %93 = tpu.matmul %88, %90, %cst_54 {dimension_numbers = #tpu.dot_dimension_numbers<[1], [0], [0], [1], [0, 0, 1, 1], [], []>} : vector<16x64xf32>, vector<64x32xf32>, vector<16x32xf32> -> vector<16x32xf32>
    %94 = vector.broadcast %92 : vector<1x32xf32> to vector<16x32xf32>
    %95 = arith.addf %93, %94 : vector<16x32xf32>
    %96 = arith.addf %95, %9 : vector<16x32xf32>
    %c0_55 = arith.constant 0 : index
    %c0_56 = arith.constant 0 : index
    %c0_57 = arith.constant 0 : index
    %97 = vector.load %arg14[%c0_55, %c0_56, %c0_57] : memref<2x1x32xf32, #tpu.memory_space<vmem>>, vector<1x1x32xf32>
    %98 = vector.shape_cast %97 : vector<1x1x32xf32> to vector<1x32xf32>
    %c0_58 = arith.constant 0 : index
    %c0_59 = arith.constant 0 : index
    %c0_60 = arith.constant 0 : index
    %99 = vector.load %arg15[%c0_58, %c0_59, %c0_60] : memref<2x1x32xf32, #tpu.memory_space<vmem>>, vector<1x1x32xf32>
    %100 = vector.shape_cast %99 : vector<1x1x32xf32> to vector<1x32xf32>
    %cst_61 = arith.constant dense<0.000000e+00> : vector<16xf32>
    %101 = vector.multi_reduction <add>, %96, %cst_61 [1] : vector<16x32xf32> to vector<16xf32>
    %102 = vector.shape_cast %101 : vector<16xf32> to vector<16x1xf32>
    %cst_62 = arith.constant 3.200000e+01 : f32
    %103 = vector.broadcast %cst_62 : f32 to vector<16x1xf32>
    %104 = arith.divf %102, %103 : vector<16x1xf32>
    %105 = vector.broadcast %104 : vector<16x1xf32> to vector<16x32xf32>
    %106 = arith.subf %96, %105 : vector<16x32xf32>
    %107 = arith.mulf %106, %106 : vector<16x32xf32>
    %cst_63 = arith.constant dense<0.000000e+00> : vector<16xf32>
    %108 = vector.multi_reduction <add>, %107, %cst_63 [1] : vector<16x32xf32> to vector<16xf32>
    %109 = vector.shape_cast %108 : vector<16xf32> to vector<16x1xf32>
    %cst_64 = arith.constant 3.200000e+01 : f32
    %110 = vector.broadcast %cst_64 : f32 to vector<16x1xf32>
    %111 = arith.divf %109, %110 : vector<16x1xf32>
    %112 = vector.broadcast %104 : vector<16x1xf32> to vector<16x32xf32>
    %113 = arith.subf %96, %112 : vector<16x32xf32>
    %cst_65 = arith.constant 9.99999974E-6 : f32
    %114 = vector.broadcast %cst_65 : f32 to vector<16x1xf32>
    %115 = arith.addf %111, %114 : vector<16x1xf32>
    %116 = math.rsqrt %115 : vector<16x1xf32>
    %117 = vector.broadcast %116 : vector<16x1xf32> to vector<16x32xf32>
    %118 = arith.mulf %113, %117 : vector<16x32xf32>
    %119 = vector.broadcast %98 : vector<1x32xf32> to vector<16x32xf32>
    %120 = arith.mulf %118, %119 : vector<16x32xf32>
    %121 = vector.broadcast %100 : vector<1x32xf32> to vector<16x32xf32>
    %122 = arith.addf %120, %121 : vector<16x32xf32>
    %c0_66 = arith.constant 0 : index
    %c0_67 = arith.constant 0 : index
    %c0_68 = arith.constant 0 : index
    %123 = vector.load %arg22[%c0_66, %c0_67, %c0_68] : memref<2x32x32xf32, #tpu.memory_space<vmem>>, vector<1x32x32xf32>
    %124 = vector.shape_cast %123 : vector<1x32x32xf32> to vector<32x32xf32>
    %c0_69 = arith.constant 0 : index
    %c0_70 = arith.constant 0 : index
    %c0_71 = arith.constant 0 : index
    %125 = vector.load %arg23[%c0_69, %c0_70, %c0_71] : memref<2x1x32xf32, #tpu.memory_space<vmem>>, vector<1x1x32xf32>
    %126 = vector.shape_cast %125 : vector<1x1x32xf32> to vector<1x32xf32>
    %cst_72 = arith.constant dense<0.000000e+00> : vector<16x32xf32>
    %127 = tpu.matmul %122, %124, %cst_72 {dimension_numbers = #tpu.dot_dimension_numbers<[1], [0], [0], [1], [0, 0, 1, 1], [], []>} : vector<16x32xf32>, vector<32x32xf32>, vector<16x32xf32> -> vector<16x32xf32>
    %128 = vector.broadcast %126 : vector<1x32xf32> to vector<16x32xf32>
    %129 = arith.addf %127, %128 : vector<16x32xf32>
    %130 = arith.negf %129 : vector<16x32xf32>
    %131 = math.exp %130 : vector<16x32xf32>
    %cst_73 = arith.constant 1.000000e+00 : f32
    %132 = vector.broadcast %cst_73 : f32 to vector<16x32xf32>
    %133 = arith.addf %132, %131 : vector<16x32xf32>
    %134 = arith.divf %132, %133 : vector<16x32xf32>
    %135 = arith.mulf %134, %122 : vector<16x32xf32>
    %136 = vector.extract_strided_slice %135 {offsets = [0, 0], sizes = [8, 32], strides = [1, 1]} : vector<16x32xf32> to vector<8x32xf32>
    %137 = tpu.transpose %136, [1, 0] : vector<8x32xf32> -> vector<32x8xf32>
    %138 = vector.extract_strided_slice %135 {offsets = [8, 0], sizes = [8, 32], strides = [1, 1]} : vector<16x32xf32> to vector<8x32xf32>
    %139 = tpu.transpose %138, [1, 0] : vector<8x32xf32> -> vector<32x8xf32>
    %140 = tpu.concatenate %137, %139 in 0 : vector<32x8xf32>, vector<32x8xf32> -> vector<64x8xf32>
    %141 = arith.addf %68, %140 : vector<64x8xf32>
    %c0_74 = arith.constant 0 : index
    %c0_75 = arith.constant 0 : index
    %c0_76 = arith.constant 0 : index
    %142 = vector.load %arg16[%c0_74, %c0_75, %c0_76] : memref<2x1x8xf32, #tpu.memory_space<vmem>>, vector<1x1x8xf32>
    %143 = vector.shape_cast %142 : vector<1x1x8xf32> to vector<1x8xf32>
    %c0_77 = arith.constant 0 : index
    %c0_78 = arith.constant 0 : index
    %c0_79 = arith.constant 0 : index
    %144 = vector.load %arg17[%c0_77, %c0_78, %c0_79] : memref<2x1x8xf32, #tpu.memory_space<vmem>>, vector<1x1x8xf32>
    %145 = vector.shape_cast %144 : vector<1x1x8xf32> to vector<1x8xf32>
    %cst_80 = arith.constant dense<0.000000e+00> : vector<64xf32>
    %146 = vector.multi_reduction <add>, %141, %cst_80 [1] : vector<64x8xf32> to vector<64xf32>
    %147 = vector.shape_cast %146 : vector<64xf32> to vector<64x1xf32>
    %cst_81 = arith.constant 8.000000e+00 : f32
    %148 = vector.broadcast %cst_81 : f32 to vector<64x1xf32>
    %149 = arith.divf %147, %148 : vector<64x1xf32>
    %150 = vector.broadcast %149 : vector<64x1xf32> to vector<64x8xf32>
    %151 = arith.subf %141, %150 : vector<64x8xf32>
    %152 = arith.mulf %151, %151 : vector<64x8xf32>
    %cst_82 = arith.constant dense<0.000000e+00> : vector<64xf32>
    %153 = vector.multi_reduction <add>, %152, %cst_82 [1] : vector<64x8xf32> to vector<64xf32>
    %154 = vector.shape_cast %153 : vector<64xf32> to vector<64x1xf32>
    %cst_83 = arith.constant 8.000000e+00 : f32
    %155 = vector.broadcast %cst_83 : f32 to vector<64x1xf32>
    %156 = arith.divf %154, %155 : vector<64x1xf32>
    %157 = vector.broadcast %149 : vector<64x1xf32> to vector<64x8xf32>
    %158 = arith.subf %141, %157 : vector<64x8xf32>
    %cst_84 = arith.constant 9.99999974E-6 : f32
    %159 = vector.broadcast %cst_84 : f32 to vector<64x1xf32>
    %160 = arith.addf %156, %159 : vector<64x1xf32>
    %161 = math.rsqrt %160 : vector<64x1xf32>
    %162 = vector.broadcast %161 : vector<64x1xf32> to vector<64x8xf32>
    %163 = arith.mulf %158, %162 : vector<64x8xf32>
    %164 = vector.broadcast %143 : vector<1x8xf32> to vector<64x8xf32>
    %165 = arith.mulf %163, %164 : vector<64x8xf32>
    %166 = vector.broadcast %145 : vector<1x8xf32> to vector<64x8xf32>
    %167 = arith.addf %165, %166 : vector<64x8xf32>
    %c0_85 = arith.constant 0 : index
    %c0_86 = arith.constant 0 : index
    %c0_87 = arith.constant 0 : index
    %168 = vector.load %arg20[%c0_85, %c0_86, %c0_87] : memref<2x8x8xf32, #tpu.memory_space<vmem>>, vector<1x8x8xf32>
    %169 = vector.shape_cast %168 : vector<1x8x8xf32> to vector<8x8xf32>
    %c0_88 = arith.constant 0 : index
    %c0_89 = arith.constant 0 : index
    %c0_90 = arith.constant 0 : index
    %170 = vector.load %arg21[%c0_88, %c0_89, %c0_90] : memref<2x1x8xf32, #tpu.memory_space<vmem>>, vector<1x1x8xf32>
    %171 = vector.shape_cast %170 : vector<1x1x8xf32> to vector<1x8xf32>
    %cst_91 = arith.constant dense<0.000000e+00> : vector<64x8xf32>
    %172 = tpu.matmul %167, %169, %cst_91 {dimension_numbers = #tpu.dot_dimension_numbers<[1], [0], [0], [1], [0, 0, 1, 1], [], []>} : vector<64x8xf32>, vector<8x8xf32>, vector<64x8xf32> -> vector<64x8xf32>
    %173 = vector.broadcast %171 : vector<1x8xf32> to vector<64x8xf32>
    %174 = arith.addf %172, %173 : vector<64x8xf32>
    %175 = arith.negf %174 : vector<64x8xf32>
    %176 = math.exp %175 : vector<64x8xf32>
    %cst_92 = arith.constant 1.000000e+00 : f32
    %177 = vector.broadcast %cst_92 : f32 to vector<64x8xf32>
    %178 = arith.addf %177, %176 : vector<64x8xf32>
    %179 = arith.divf %177, %178 : vector<64x8xf32>
    %180 = arith.mulf %179, %167 : vector<64x8xf32>
    %181 = vector.extract_strided_slice %180 {offsets = [0, 0], sizes = [32, 8], strides = [1, 1]} : vector<64x8xf32> to vector<32x8xf32>
    %182 = tpu.transpose %181, [1, 0] : vector<32x8xf32> -> vector<8x32xf32>
    %183 = vector.extract_strided_slice %180 {offsets = [32, 0], sizes = [32, 8], strides = [1, 1]} : vector<64x8xf32> to vector<32x8xf32>
    %184 = tpu.transpose %183, [1, 0] : vector<32x8xf32> -> vector<8x32xf32>
    %185 = tpu.concatenate %182, %184 in 0 : vector<8x32xf32>, vector<8x32xf32> -> vector<16x32xf32>
    %186 = arith.addf %122, %185 : vector<16x32xf32>
    %c0_93 = arith.constant 0 : index
    %c0_94 = arith.constant 0 : index
    %c0_95 = arith.constant 0 : index
    %187 = vector.load %arg18[%c0_93, %c0_94, %c0_95] : memref<2x1x32xf32, #tpu.memory_space<vmem>>, vector<1x1x32xf32>
    %188 = vector.shape_cast %187 : vector<1x1x32xf32> to vector<1x32xf32>
    %c0_96 = arith.constant 0 : index
    %c0_97 = arith.constant 0 : index
    %c0_98 = arith.constant 0 : index
    %189 = vector.load %arg19[%c0_96, %c0_97, %c0_98] : memref<2x1x32xf32, #tpu.memory_space<vmem>>, vector<1x1x32xf32>
    %190 = vector.shape_cast %189 : vector<1x1x32xf32> to vector<1x32xf32>
    %cst_99 = arith.constant dense<0.000000e+00> : vector<16xf32>
    %191 = vector.multi_reduction <add>, %186, %cst_99 [1] : vector<16x32xf32> to vector<16xf32>
    %192 = vector.shape_cast %191 : vector<16xf32> to vector<16x1xf32>
    %cst_100 = arith.constant 3.200000e+01 : f32
    %193 = vector.broadcast %cst_100 : f32 to vector<16x1xf32>
    %194 = arith.divf %192, %193 : vector<16x1xf32>
    %195 = vector.broadcast %194 : vector<16x1xf32> to vector<16x32xf32>
    %196 = arith.subf %186, %195 : vector<16x32xf32>
    %197 = arith.mulf %196, %196 : vector<16x32xf32>
    %cst_101 = arith.constant dense<0.000000e+00> : vector<16xf32>
    %198 = vector.multi_reduction <add>, %197, %cst_101 [1] : vector<16x32xf32> to vector<16xf32>
    %199 = vector.shape_cast %198 : vector<16xf32> to vector<16x1xf32>
    %cst_102 = arith.constant 3.200000e+01 : f32
    %200 = vector.broadcast %cst_102 : f32 to vector<16x1xf32>
    %201 = arith.divf %199, %200 : vector<16x1xf32>
    %202 = vector.broadcast %194 : vector<16x1xf32> to vector<16x32xf32>
    %203 = arith.subf %186, %202 : vector<16x32xf32>
    %cst_103 = arith.constant 9.99999974E-6 : f32
    %204 = vector.broadcast %cst_103 : f32 to vector<16x1xf32>
    %205 = arith.addf %201, %204 : vector<16x1xf32>
    %206 = math.rsqrt %205 : vector<16x1xf32>
    %207 = vector.broadcast %206 : vector<16x1xf32> to vector<16x32xf32>
    %208 = arith.mulf %203, %207 : vector<16x32xf32>
    %209 = vector.broadcast %188 : vector<1x32xf32> to vector<16x32xf32>
    %210 = arith.mulf %208, %209 : vector<16x32xf32>
    %211 = vector.broadcast %190 : vector<1x32xf32> to vector<16x32xf32>
    %212 = arith.addf %210, %211 : vector<16x32xf32>
    %c1_104 = arith.constant 1 : index
    %c0_105 = arith.constant 0 : index
    %c0_106 = arith.constant 0 : index
    %213 = vector.load %arg4[%c1_104, %c0_105, %c0_106] : memref<2x8x16xf32, #tpu.memory_space<vmem>>, vector<1x8x16xf32>
    %214 = vector.shape_cast %213 : vector<1x8x16xf32> to vector<8x16xf32>
    %c1_107 = arith.constant 1 : index
    %c0_108 = arith.constant 0 : index
    %c0_109 = arith.constant 0 : index
    %215 = vector.load %arg5[%c1_107, %c0_108, %c0_109] : memref<2x1x16xf32, #tpu.memory_space<vmem>>, vector<1x1x16xf32>
    %216 = vector.shape_cast %215 : vector<1x1x16xf32> to vector<1x16xf32>
    %cst_110 = arith.constant dense<0.000000e+00> : vector<64x16xf32>
    %217 = tpu.matmul %167, %214, %cst_110 {dimension_numbers = #tpu.dot_dimension_numbers<[1], [0], [0], [1], [0, 0, 1, 1], [], []>} : vector<64x8xf32>, vector<8x16xf32>, vector<64x16xf32> -> vector<64x16xf32>
    %218 = vector.broadcast %216 : vector<1x16xf32> to vector<64x16xf32>
    %219 = arith.addf %217, %218 : vector<64x16xf32>
    %cst_111 = arith.constant 5.000000e-01 : f32
    %220 = vector.broadcast %cst_111 : f32 to vector<64x16xf32>
    %221 = arith.mulf %220, %219 : vector<64x16xf32>
    %cst_112 = arith.constant 4.471500e-02 : f32
    %222 = vector.broadcast %cst_112 : f32 to vector<64x16xf32>
    %223 = arith.mulf %222, %219 : vector<64x16xf32>
    %224 = arith.mulf %223, %219 : vector<64x16xf32>
    %225 = arith.mulf %224, %219 : vector<64x16xf32>
    %226 = arith.addf %219, %225 : vector<64x16xf32>
    %cst_113 = arith.constant 0.797884583 : f32
    %227 = vector.broadcast %cst_113 : f32 to vector<64x16xf32>
    %228 = arith.mulf %227, %226 : vector<64x16xf32>
    %229 = math.tanh %228 : vector<64x16xf32>
    %cst_114 = arith.constant 1.000000e+00 : f32
    %230 = vector.broadcast %cst_114 : f32 to vector<64x16xf32>
    %231 = arith.addf %230, %229 : vector<64x16xf32>
    %232 = arith.mulf %221, %231 : vector<64x16xf32>
    %c1_115 = arith.constant 1 : index
    %c0_116 = arith.constant 0 : index
    %c0_117 = arith.constant 0 : index
    %233 = vector.load %arg6[%c1_115, %c0_116, %c0_117] : memref<2x16x8xf32, #tpu.memory_space<vmem>>, vector<1x16x8xf32>
    %234 = vector.shape_cast %233 : vector<1x16x8xf32> to vector<16x8xf32>
    %c1_118 = arith.constant 1 : index
    %c0_119 = arith.constant 0 : index
    %c0_120 = arith.constant 0 : index
    %235 = vector.load %arg7[%c1_118, %c0_119, %c0_120] : memref<2x1x8xf32, #tpu.memory_space<vmem>>, vector<1x1x8xf32>
    %236 = vector.shape_cast %235 : vector<1x1x8xf32> to vector<1x8xf32>
    %cst_121 = arith.constant dense<0.000000e+00> : vector<64x8xf32>
    %237 = tpu.matmul %232, %234, %cst_121 {dimension_numbers = #tpu.dot_dimension_numbers<[1], [0], [0], [1], [0, 0, 1, 1], [], []>} : vector<64x16xf32>, vector<16x8xf32>, vector<64x8xf32> -> vector<64x8xf32>
    %238 = vector.broadcast %236 : vector<1x8xf32> to vector<64x8xf32>
    %239 = arith.addf %237, %238 : vector<64x8xf32>
    %240 = arith.addf %239, %167 : vector<64x8xf32>
    %c1_122 = arith.constant 1 : index
    %c0_123 = arith.constant 0 : index
    %c0_124 = arith.constant 0 : index
    %241 = vector.load %arg12[%c1_122, %c0_123, %c0_124] : memref<2x1x8xf32, #tpu.memory_space<vmem>>, vector<1x1x8xf32>
    %242 = vector.shape_cast %241 : vector<1x1x8xf32> to vector<1x8xf32>
    %c1_125 = arith.constant 1 : index
    %c0_126 = arith.constant 0 : index
    %c0_127 = arith.constant 0 : index
    %243 = vector.load %arg13[%c1_125, %c0_126, %c0_127] : memref<2x1x8xf32, #tpu.memory_space<vmem>>, vector<1x1x8xf32>
    %244 = vector.shape_cast %243 : vector<1x1x8xf32> to vector<1x8xf32>
    %cst_128 = arith.constant dense<0.000000e+00> : vector<64xf32>
    %245 = vector.multi_reduction <add>, %240, %cst_128 [1] : vector<64x8xf32> to vector<64xf32>
    %246 = vector.shape_cast %245 : vector<64xf32> to vector<64x1xf32>
    %cst_129 = arith.constant 8.000000e+00 : f32
    %247 = vector.broadcast %cst_129 : f32 to vector<64x1xf32>
    %248 = arith.divf %246, %247 : vector<64x1xf32>
    %249 = vector.broadcast %248 : vector<64x1xf32> to vector<64x8xf32>
    %250 = arith.subf %240, %249 : vector<64x8xf32>
    %251 = arith.mulf %250, %250 : vector<64x8xf32>
    %cst_130 = arith.constant dense<0.000000e+00> : vector<64xf32>
    %252 = vector.multi_reduction <add>, %251, %cst_130 [1] : vector<64x8xf32> to vector<64xf32>
    %253 = vector.shape_cast %252 : vector<64xf32> to vector<64x1xf32>
    %cst_131 = arith.constant 8.000000e+00 : f32
    %254 = vector.broadcast %cst_131 : f32 to vector<64x1xf32>
    %255 = arith.divf %253, %254 : vector<64x1xf32>
    %256 = vector.broadcast %248 : vector<64x1xf32> to vector<64x8xf32>
    %257 = arith.subf %240, %256 : vector<64x8xf32>
    %cst_132 = arith.constant 9.99999974E-6 : f32
    %258 = vector.broadcast %cst_132 : f32 to vector<64x1xf32>
    %259 = arith.addf %255, %258 : vector<64x1xf32>
    %260 = math.rsqrt %259 : vector<64x1xf32>
    %261 = vector.broadcast %260 : vector<64x1xf32> to vector<64x8xf32>
    %262 = arith.mulf %257, %261 : vector<64x8xf32>
    %263 = vector.broadcast %242 : vector<1x8xf32> to vector<64x8xf32>
    %264 = arith.mulf %262, %263 : vector<64x8xf32>
    %265 = vector.broadcast %244 : vector<1x8xf32> to vector<64x8xf32>
    %266 = arith.addf %264, %265 : vector<64x8xf32>
    %c1_133 = arith.constant 1 : index
    %c0_134 = arith.constant 0 : index
    %c0_135 = arith.constant 0 : index
    %267 = vector.load %arg8[%c1_133, %c0_134, %c0_135] : memref<2x32x64xf32, #tpu.memory_space<vmem>>, vector<1x32x64xf32>
    %268 = vector.shape_cast %267 : vector<1x32x64xf32> to vector<32x64xf32>
    %c1_136 = arith.constant 1 : index
    %c0_137 = arith.constant 0 : index
    %c0_138 = arith.constant 0 : index
    %269 = vector.load %arg9[%c1_136, %c0_137, %c0_138] : memref<2x1x64xf32, #tpu.memory_space<vmem>>, vector<1x1x64xf32>
    %270 = vector.shape_cast %269 : vector<1x1x64xf32> to vector<1x64xf32>
    %cst_139 = arith.constant dense<0.000000e+00> : vector<16x64xf32>
    %271 = tpu.matmul %212, %268, %cst_139 {dimension_numbers = #tpu.dot_dimension_numbers<[1], [0], [0], [1], [0, 0, 1, 1], [], []>} : vector<16x32xf32>, vector<32x64xf32>, vector<16x64xf32> -> vector<16x64xf32>
    %272 = vector.broadcast %270 : vector<1x64xf32> to vector<16x64xf32>
    %273 = arith.addf %271, %272 : vector<16x64xf32>
    %cst_140 = arith.constant 5.000000e-01 : f32
    %274 = vector.broadcast %cst_140 : f32 to vector<16x64xf32>
    %275 = arith.mulf %274, %273 : vector<16x64xf32>
    %cst_141 = arith.constant 4.471500e-02 : f32
    %276 = vector.broadcast %cst_141 : f32 to vector<16x64xf32>
    %277 = arith.mulf %276, %273 : vector<16x64xf32>
    %278 = arith.mulf %277, %273 : vector<16x64xf32>
    %279 = arith.mulf %278, %273 : vector<16x64xf32>
    %280 = arith.addf %273, %279 : vector<16x64xf32>
    %cst_142 = arith.constant 0.797884583 : f32
    %281 = vector.broadcast %cst_142 : f32 to vector<16x64xf32>
    %282 = arith.mulf %281, %280 : vector<16x64xf32>
    %283 = math.tanh %282 : vector<16x64xf32>
    %cst_143 = arith.constant 1.000000e+00 : f32
    %284 = vector.broadcast %cst_143 : f32 to vector<16x64xf32>
    %285 = arith.addf %284, %283 : vector<16x64xf32>
    %286 = arith.mulf %275, %285 : vector<16x64xf32>
    %c1_144 = arith.constant 1 : index
    %c0_145 = arith.constant 0 : index
    %c0_146 = arith.constant 0 : index
    %287 = vector.load %arg10[%c1_144, %c0_145, %c0_146] : memref<2x64x32xf32, #tpu.memory_space<vmem>>, vector<1x64x32xf32>
    %288 = vector.shape_cast %287 : vector<1x64x32xf32> to vector<64x32xf32>
    %c1_147 = arith.constant 1 : index
    %c0_148 = arith.constant 0 : index
    %c0_149 = arith.constant 0 : index
    %289 = vector.load %arg11[%c1_147, %c0_148, %c0_149] : memref<2x1x32xf32, #tpu.memory_space<vmem>>, vector<1x1x32xf32>
    %290 = vector.shape_cast %289 : vector<1x1x32xf32> to vector<1x32xf32>
    %cst_150 = arith.constant dense<0.000000e+00> : vector<16x32xf32>
    %291 = tpu.matmul %286, %288, %cst_150 {dimension_numbers = #tpu.dot_dimension_numbers<[1], [0], [0], [1], [0, 0, 1, 1], [], []>} : vector<16x64xf32>, vector<64x32xf32>, vector<16x32xf32> -> vector<16x32xf32>
    %292 = vector.broadcast %290 : vector<1x32xf32> to vector<16x32xf32>
    %293 = arith.addf %291, %292 : vector<16x32xf32>
    %294 = arith.addf %293, %212 : vector<16x32xf32>
    %c1_151 = arith.constant 1 : index
    %c0_152 = arith.constant 0 : index
    %c0_153 = arith.constant 0 : index
    %295 = vector.load %arg14[%c1_151, %c0_152, %c0_153] : memref<2x1x32xf32, #tpu.memory_space<vmem>>, vector<1x1x32xf32>
    %296 = vector.shape_cast %295 : vector<1x1x32xf32> to vector<1x32xf32>
    %c1_154 = arith.constant 1 : index
    %c0_155 = arith.constant 0 : index
    %c0_156 = arith.constant 0 : index
    %297 = vector.load %arg15[%c1_154, %c0_155, %c0_156] : memref<2x1x32xf32, #tpu.memory_space<vmem>>, vector<1x1x32xf32>
    %298 = vector.shape_cast %297 : vector<1x1x32xf32> to vector<1x32xf32>
    %cst_157 = arith.constant dense<0.000000e+00> : vector<16xf32>
    %299 = vector.multi_reduction <add>, %294, %cst_157 [1] : vector<16x32xf32> to vector<16xf32>
    %300 = vector.shape_cast %299 : vector<16xf32> to vector<16x1xf32>
    %cst_158 = arith.constant 3.200000e+01 : f32
    %301 = vector.broadcast %cst_158 : f32 to vector<16x1xf32>
    %302 = arith.divf %300, %301 : vector<16x1xf32>
    %303 = vector.broadcast %302 : vector<16x1xf32> to vector<16x32xf32>
    %304 = arith.subf %294, %303 : vector<16x32xf32>
    %305 = arith.mulf %304, %304 : vector<16x32xf32>
    %cst_159 = arith.constant dense<0.000000e+00> : vector<16xf32>
    %306 = vector.multi_reduction <add>, %305, %cst_159 [1] : vector<16x32xf32> to vector<16xf32>
    %307 = vector.shape_cast %306 : vector<16xf32> to vector<16x1xf32>
    %cst_160 = arith.constant 3.200000e+01 : f32
    %308 = vector.broadcast %cst_160 : f32 to vector<16x1xf32>
    %309 = arith.divf %307, %308 : vector<16x1xf32>
    %310 = vector.broadcast %302 : vector<16x1xf32> to vector<16x32xf32>
    %311 = arith.subf %294, %310 : vector<16x32xf32>
    %cst_161 = arith.constant 9.99999974E-6 : f32
    %312 = vector.broadcast %cst_161 : f32 to vector<16x1xf32>
    %313 = arith.addf %309, %312 : vector<16x1xf32>
    %314 = math.rsqrt %313 : vector<16x1xf32>
    %315 = vector.broadcast %314 : vector<16x1xf32> to vector<16x32xf32>
    %316 = arith.mulf %311, %315 : vector<16x32xf32>
    %317 = vector.broadcast %296 : vector<1x32xf32> to vector<16x32xf32>
    %318 = arith.mulf %316, %317 : vector<16x32xf32>
    %319 = vector.broadcast %298 : vector<1x32xf32> to vector<16x32xf32>
    %320 = arith.addf %318, %319 : vector<16x32xf32>
    %c1_162 = arith.constant 1 : index
    %c0_163 = arith.constant 0 : index
    %c0_164 = arith.constant 0 : index
    %321 = vector.load %arg22[%c1_162, %c0_163, %c0_164] : memref<2x32x32xf32, #tpu.memory_space<vmem>>, vector<1x32x32xf32>
    %322 = vector.shape_cast %321 : vector<1x32x32xf32> to vector<32x32xf32>
    %c1_165 = arith.constant 1 : index
    %c0_166 = arith.constant 0 : index
    %c0_167 = arith.constant 0 : index
    %323 = vector.load %arg23[%c1_165, %c0_166, %c0_167] : memref<2x1x32xf32, #tpu.memory_space<vmem>>, vector<1x1x32xf32>
    %324 = vector.shape_cast %323 : vector<1x1x32xf32> to vector<1x32xf32>
    %cst_168 = arith.constant dense<0.000000e+00> : vector<16x32xf32>
    %325 = tpu.matmul %320, %322, %cst_168 {dimension_numbers = #tpu.dot_dimension_numbers<[1], [0], [0], [1], [0, 0, 1, 1], [], []>} : vector<16x32xf32>, vector<32x32xf32>, vector<16x32xf32> -> vector<16x32xf32>
    %326 = vector.broadcast %324 : vector<1x32xf32> to vector<16x32xf32>
    %327 = arith.addf %325, %326 : vector<16x32xf32>
    %328 = arith.negf %327 : vector<16x32xf32>
    %329 = math.exp %328 : vector<16x32xf32>
    %cst_169 = arith.constant 1.000000e+00 : f32
    %330 = vector.broadcast %cst_169 : f32 to vector<16x32xf32>
    %331 = arith.addf %330, %329 : vector<16x32xf32>
    %332 = arith.divf %330, %331 : vector<16x32xf32>
    %333 = arith.mulf %332, %320 : vector<16x32xf32>
    %334 = vector.extract_strided_slice %333 {offsets = [0, 0], sizes = [8, 32], strides = [1, 1]} : vector<16x32xf32> to vector<8x32xf32>
    %335 = tpu.transpose %334, [1, 0] : vector<8x32xf32> -> vector<32x8xf32>
    %336 = vector.extract_strided_slice %333 {offsets = [8, 0], sizes = [8, 32], strides = [1, 1]} : vector<16x32xf32> to vector<8x32xf32>
    %337 = tpu.transpose %336, [1, 0] : vector<8x32xf32> -> vector<32x8xf32>
    %338 = tpu.concatenate %335, %337 in 0 : vector<32x8xf32>, vector<32x8xf32> -> vector<64x8xf32>
    %339 = arith.addf %266, %338 : vector<64x8xf32>
    %c1_170 = arith.constant 1 : index
    %c0_171 = arith.constant 0 : index
    %c0_172 = arith.constant 0 : index
    %340 = vector.load %arg16[%c1_170, %c0_171, %c0_172] : memref<2x1x8xf32, #tpu.memory_space<vmem>>, vector<1x1x8xf32>
    %341 = vector.shape_cast %340 : vector<1x1x8xf32> to vector<1x8xf32>
    %c1_173 = arith.constant 1 : index
    %c0_174 = arith.constant 0 : index
    %c0_175 = arith.constant 0 : index
    %342 = vector.load %arg17[%c1_173, %c0_174, %c0_175] : memref<2x1x8xf32, #tpu.memory_space<vmem>>, vector<1x1x8xf32>
    %343 = vector.shape_cast %342 : vector<1x1x8xf32> to vector<1x8xf32>
    %cst_176 = arith.constant dense<0.000000e+00> : vector<64xf32>
    %344 = vector.multi_reduction <add>, %339, %cst_176 [1] : vector<64x8xf32> to vector<64xf32>
    %345 = vector.shape_cast %344 : vector<64xf32> to vector<64x1xf32>
    %cst_177 = arith.constant 8.000000e+00 : f32
    %346 = vector.broadcast %cst_177 : f32 to vector<64x1xf32>
    %347 = arith.divf %345, %346 : vector<64x1xf32>
    %348 = vector.broadcast %347 : vector<64x1xf32> to vector<64x8xf32>
    %349 = arith.subf %339, %348 : vector<64x8xf32>
    %350 = arith.mulf %349, %349 : vector<64x8xf32>
    %cst_178 = arith.constant dense<0.000000e+00> : vector<64xf32>
    %351 = vector.multi_reduction <add>, %350, %cst_178 [1] : vector<64x8xf32> to vector<64xf32>
    %352 = vector.shape_cast %351 : vector<64xf32> to vector<64x1xf32>
    %cst_179 = arith.constant 8.000000e+00 : f32
    %353 = vector.broadcast %cst_179 : f32 to vector<64x1xf32>
    %354 = arith.divf %352, %353 : vector<64x1xf32>
    %355 = vector.broadcast %347 : vector<64x1xf32> to vector<64x8xf32>
    %356 = arith.subf %339, %355 : vector<64x8xf32>
    %cst_180 = arith.constant 9.99999974E-6 : f32
    %357 = vector.broadcast %cst_180 : f32 to vector<64x1xf32>
    %358 = arith.addf %354, %357 : vector<64x1xf32>
    %359 = math.rsqrt %358 : vector<64x1xf32>
    %360 = vector.broadcast %359 : vector<64x1xf32> to vector<64x8xf32>
    %361 = arith.mulf %356, %360 : vector<64x8xf32>
    %362 = vector.broadcast %341 : vector<1x8xf32> to vector<64x8xf32>
    %363 = arith.mulf %361, %362 : vector<64x8xf32>
    %364 = vector.broadcast %343 : vector<1x8xf32> to vector<64x8xf32>
    %365 = arith.addf %363, %364 : vector<64x8xf32>
    %c1_181 = arith.constant 1 : index
    %c0_182 = arith.constant 0 : index
    %c0_183 = arith.constant 0 : index
    %366 = vector.load %arg20[%c1_181, %c0_182, %c0_183] : memref<2x8x8xf32, #tpu.memory_space<vmem>>, vector<1x8x8xf32>
    %367 = vector.shape_cast %366 : vector<1x8x8xf32> to vector<8x8xf32>
    %c1_184 = arith.constant 1 : index
    %c0_185 = arith.constant 0 : index
    %c0_186 = arith.constant 0 : index
    %368 = vector.load %arg21[%c1_184, %c0_185, %c0_186] : memref<2x1x8xf32, #tpu.memory_space<vmem>>, vector<1x1x8xf32>
    %369 = vector.shape_cast %368 : vector<1x1x8xf32> to vector<1x8xf32>
    %cst_187 = arith.constant dense<0.000000e+00> : vector<64x8xf32>
    %370 = tpu.matmul %365, %367, %cst_187 {dimension_numbers = #tpu.dot_dimension_numbers<[1], [0], [0], [1], [0, 0, 1, 1], [], []>} : vector<64x8xf32>, vector<8x8xf32>, vector<64x8xf32> -> vector<64x8xf32>
    %371 = vector.broadcast %369 : vector<1x8xf32> to vector<64x8xf32>
    %372 = arith.addf %370, %371 : vector<64x8xf32>
    %373 = arith.negf %372 : vector<64x8xf32>
    %374 = math.exp %373 : vector<64x8xf32>
    %cst_188 = arith.constant 1.000000e+00 : f32
    %375 = vector.broadcast %cst_188 : f32 to vector<64x8xf32>
    %376 = arith.addf %375, %374 : vector<64x8xf32>
    %377 = arith.divf %375, %376 : vector<64x8xf32>
    %378 = arith.mulf %377, %365 : vector<64x8xf32>
    %379 = vector.extract_strided_slice %378 {offsets = [0, 0], sizes = [32, 8], strides = [1, 1]} : vector<64x8xf32> to vector<32x8xf32>
    %380 = tpu.transpose %379, [1, 0] : vector<32x8xf32> -> vector<8x32xf32>
    %381 = vector.extract_strided_slice %378 {offsets = [32, 0], sizes = [32, 8], strides = [1, 1]} : vector<64x8xf32> to vector<32x8xf32>
    %382 = tpu.transpose %381, [1, 0] : vector<32x8xf32> -> vector<8x32xf32>
    %383 = tpu.concatenate %380, %382 in 0 : vector<8x32xf32>, vector<8x32xf32> -> vector<16x32xf32>
    %384 = arith.addf %320, %383 : vector<16x32xf32>
    %c1_189 = arith.constant 1 : index
    %c0_190 = arith.constant 0 : index
    %c0_191 = arith.constant 0 : index
    %385 = vector.load %arg18[%c1_189, %c0_190, %c0_191] : memref<2x1x32xf32, #tpu.memory_space<vmem>>, vector<1x1x32xf32>
    %386 = vector.shape_cast %385 : vector<1x1x32xf32> to vector<1x32xf32>
    %c1_192 = arith.constant 1 : index
    %c0_193 = arith.constant 0 : index
    %c0_194 = arith.constant 0 : index
    %387 = vector.load %arg19[%c1_192, %c0_193, %c0_194] : memref<2x1x32xf32, #tpu.memory_space<vmem>>, vector<1x1x32xf32>
    %388 = vector.shape_cast %387 : vector<1x1x32xf32> to vector<1x32xf32>
    %cst_195 = arith.constant dense<0.000000e+00> : vector<16xf32>
    %389 = vector.multi_reduction <add>, %384, %cst_195 [1] : vector<16x32xf32> to vector<16xf32>
    %390 = vector.shape_cast %389 : vector<16xf32> to vector<16x1xf32>
    %cst_196 = arith.constant 3.200000e+01 : f32
    %391 = vector.broadcast %cst_196 : f32 to vector<16x1xf32>
    %392 = arith.divf %390, %391 : vector<16x1xf32>
    %393 = vector.broadcast %392 : vector<16x1xf32> to vector<16x32xf32>
    %394 = arith.subf %384, %393 : vector<16x32xf32>
    %395 = arith.mulf %394, %394 : vector<16x32xf32>
    %cst_197 = arith.constant dense<0.000000e+00> : vector<16xf32>
    %396 = vector.multi_reduction <add>, %395, %cst_197 [1] : vector<16x32xf32> to vector<16xf32>
    %397 = vector.shape_cast %396 : vector<16xf32> to vector<16x1xf32>
    %cst_198 = arith.constant 3.200000e+01 : f32
    %398 = vector.broadcast %cst_198 : f32 to vector<16x1xf32>
    %399 = arith.divf %397, %398 : vector<16x1xf32>
    %400 = vector.broadcast %392 : vector<16x1xf32> to vector<16x32xf32>
    %401 = arith.subf %384, %400 : vector<16x32xf32>
    %cst_199 = arith.constant 9.99999974E-6 : f32
    %402 = vector.broadcast %cst_199 : f32 to vector<16x1xf32>
    %403 = arith.addf %399, %402 : vector<16x1xf32>
    %404 = math.rsqrt %403 : vector<16x1xf32>
    %405 = vector.broadcast %404 : vector<16x1xf32> to vector<16x32xf32>
    %406 = arith.mulf %401, %405 : vector<16x32xf32>
    %407 = vector.broadcast %386 : vector<1x32xf32> to vector<16x32xf32>
    %408 = arith.mulf %406, %407 : vector<16x32xf32>
    %409 = vector.broadcast %388 : vector<1x32xf32> to vector<16x32xf32>
    %410 = arith.addf %408, %409 : vector<16x32xf32>
    %c0_200 = arith.constant 0 : index
    %c0_201 = arith.constant 0 : index
    %411 = vector.load %arg24[%c0_200, %c0_201] : memref<8x8xf32, #tpu.memory_space<vmem>>, vector<8x8xf32>
    %c0_202 = arith.constant 0 : index
    %c0_203 = arith.constant 0 : index
    %412 = vector.load %arg25[%c0_202, %c0_203] : memref<1x8xf32, #tpu.memory_space<vmem>>, vector<1x8xf32>
    %cst_204 = arith.constant dense<0.000000e+00> : vector<64x8xf32>
    %413 = tpu.matmul %365, %411, %cst_204 {dimension_numbers = #tpu.dot_dimension_numbers<[1], [0], [0], [1], [0, 0, 1, 1], [], []>} : vector<64x8xf32>, vector<8x8xf32>, vector<64x8xf32> -> vector<64x8xf32>
    %414 = vector.broadcast %412 : vector<1x8xf32> to vector<64x8xf32>
    %415 = arith.addf %413, %414 : vector<64x8xf32>
    %416 = arith.negf %415 : vector<64x8xf32>
    %417 = math.exp %416 : vector<64x8xf32>
    %cst_205 = arith.constant 1.000000e+00 : f32
    %418 = vector.broadcast %cst_205 : f32 to vector<64x8xf32>
    %419 = arith.addf %418, %417 : vector<64x8xf32>
    %420 = arith.divf %418, %419 : vector<64x8xf32>
    %421 = arith.mulf %420, %365 : vector<64x8xf32>
    %c0_206 = arith.constant 0 : index
    %c0_207 = arith.constant 0 : index
    %422 = vector.load %arg26[%c0_206, %c0_207] : memref<32x32xf32, #tpu.memory_space<vmem>>, vector<32x32xf32>
    %c0_208 = arith.constant 0 : index
    %c0_209 = arith.constant 0 : index
    %423 = vector.load %arg27[%c0_208, %c0_209] : memref<1x32xf32, #tpu.memory_space<vmem>>, vector<1x32xf32>
    %cst_210 = arith.constant dense<0.000000e+00> : vector<16x32xf32>
    %424 = tpu.matmul %410, %422, %cst_210 {dimension_numbers = #tpu.dot_dimension_numbers<[1], [0], [0], [1], [0, 0, 1, 1], [], []>} : vector<16x32xf32>, vector<32x32xf32>, vector<16x32xf32> -> vector<16x32xf32>
    %425 = vector.broadcast %423 : vector<1x32xf32> to vector<16x32xf32>
    %426 = arith.addf %424, %425 : vector<16x32xf32>
    %427 = arith.negf %426 : vector<16x32xf32>
    %428 = math.exp %427 : vector<16x32xf32>
    %cst_211 = arith.constant 1.000000e+00 : f32
    %429 = vector.broadcast %cst_211 : f32 to vector<16x32xf32>
    %430 = arith.addf %429, %428 : vector<16x32xf32>
    %431 = arith.divf %429, %430 : vector<16x32xf32>
    %432 = arith.mulf %431, %410 : vector<16x32xf32>
    %433 = vector.extract_strided_slice %421 {offsets = [0, 0], sizes = [32, 8], strides = [1, 1]} : vector<64x8xf32> to vector<32x8xf32>
    %434 = tpu.transpose %433, [1, 0] : vector<32x8xf32> -> vector<8x32xf32>
    %435 = vector.extract_strided_slice %421 {offsets = [32, 0], sizes = [32, 8], strides = [1, 1]} : vector<64x8xf32> to vector<32x8xf32>
    %436 = tpu.transpose %435, [1, 0] : vector<32x8xf32> -> vector<8x32xf32>
    %437 = tpu.concatenate %434, %436 in 0 : vector<8x32xf32>, vector<8x32xf32> -> vector<16x32xf32>
    %438 = arith.addf %437, %432 : vector<16x32xf32>
    %c0_212 = arith.constant 0 : index
    %c0_213 = arith.constant 0 : index
    %439 = vector.load %arg28[%c0_212, %c0_213] : memref<8x32xf32, #tpu.memory_space<vmem>>, vector<8x32xf32>
    %440 = tpu.concatenate %439, %439 in 0 : vector<8x32xf32>, vector<8x32xf32> -> vector<16x32xf32>
    %441 = arith.mulf %438, %440 : vector<16x32xf32>
    %cst_214 = arith.constant dense<0.000000e+00> : vector<16xf32>
    %442 = vector.multi_reduction <add>, %441, %cst_214 [1] : vector<16x32xf32> to vector<16xf32>
    %443 = vector.shape_cast %442 : vector<16xf32> to vector<16x1xf32>
    %444 = tpu.iota {dimensions = array<i32: 1>} : vector<2x16xi32>
    %445 = tpu.iota {dimensions = array<i32: 0>} : vector<2x16xi32>
    %c8_i32 = arith.constant 8 : i32
    %446 = vector.broadcast %c8_i32 : i32 to vector<2x16xi32>
    %447 = arith.muli %445, %446 : vector<2x16xi32>
    %448 = arith.cmpi sge, %444, %447 : vector<2x16xi32>
    %c1_i32 = arith.constant 1 : i32
    %449 = vector.broadcast %c1_i32 : i32 to vector<2x16xi32>
    %450 = arith.addi %445, %449 : vector<2x16xi32>
    %c8_i32_215 = arith.constant 8 : i32
    %451 = vector.broadcast %c8_i32_215 : i32 to vector<2x16xi32>
    %452 = arith.muli %450, %451 : vector<2x16xi32>
    %453 = arith.cmpi slt, %444, %452 : vector<2x16xi32>
    %454 = arith.andi %448, %453 : vector<2x16xi1>
    %cst_216 = arith.constant 1.000000e+00 : f32
    %cst_217 = arith.constant 0.000000e+00 : f32
    %455 = vector.broadcast %cst_216 : f32 to vector<2x16xf32>
    %456 = vector.broadcast %cst_217 : f32 to vector<2x16xf32>
    %457 = arith.select %454, %455, %456 : vector<2x16xi1>, vector<2x16xf32>
    %cst_218 = arith.constant dense<0.000000e+00> : vector<2x1xf32>
    %458 = tpu.matmul %457, %443, %cst_218 {dimension_numbers = #tpu.dot_dimension_numbers<[1], [0], [0], [1], [0, 0, 1, 1], [], []>} : vector<2x16xf32>, vector<16x1xf32>, vector<2x1xf32> -> vector<2x1xf32>
    %c0_219 = arith.constant 0 : index
    %c0_220 = arith.constant 0 : index
    %459 = vector.load %arg29[%c0_219, %c0_220] : memref<1x1xf32, #tpu.memory_space<vmem>>, vector<1x1xf32>
    %460 = vector.broadcast %459 : vector<1x1xf32> to vector<2x1xf32>
    %461 = arith.addf %458, %460 : vector<2x1xf32>
    %c0_221 = arith.constant 0 : index
    %c0_222 = arith.constant 0 : index
    %462 = vector.load %arg30[%c0_221, %c0_222] : memref<2x1xf32, #tpu.memory_space<vmem>>, vector<2x1xf32>
    tpu.vector_store %arg30[%c0_221, %c0_222], %461 {strides = array<i32>} : memref<2x1xf32, #tpu.memory_space<vmem>>, vector<2x1xf32>,
    return
  }
  func.func @transform_0(%arg0: i32) -> (i32, i32, i32) {
    %c0_i32 = arith.constant 0 : i32
    %c0_i32_0 = arith.constant 0 : i32
    %c0_i32_1 = arith.constant 0 : i32
    return %arg0, %c0_i32, %c0_i32_0 : i32, i32, i32
  }
  func.func @transform_1(%arg0: i32) -> (i32, i32) {
    %c0_i32 = arith.constant 0 : i32
    %c0_i32_0 = arith.constant 0 : i32
    %c0_i32_1 = arith.constant 0 : i32
    return %c0_i32, %c0_i32_0 : i32, i32
  }
  func.func @transform_2(%arg0: i32) -> (i32, i32) {
    %c0_i32 = arith.constant 0 : i32
    %c0_i32_0 = arith.constant 0 : i32
    %c0_i32_1 = arith.constant 0 : i32
    return %c0_i32, %c0_i32_0 : i32, i32
  }
  func.func @transform_3(%arg0: i32) -> (i32, i32, i32) {
    %c0_i32 = arith.constant 0 : i32
    %c0_i32_0 = arith.constant 0 : i32
    %c0_i32_1 = arith.constant 0 : i32
    %c0_i32_2 = arith.constant 0 : i32
    return %c0_i32, %c0_i32_0, %c0_i32_1 : i32, i32, i32
  }
  func.func @transform_4(%arg0: i32) -> (i32, i32, i32) {
    %c0_i32 = arith.constant 0 : i32
    %c0_i32_0 = arith.constant 0 : i32
    %c0_i32_1 = arith.constant 0 : i32
    %c0_i32_2 = arith.constant 0 : i32
    return %c0_i32, %c0_i32_0, %c0_i32_1 : i32, i32, i32
  }
  func.func @transform_5(%arg0: i32) -> (i32, i32, i32) {
    %c0_i32 = arith.constant 0 : i32
    %c0_i32_0 = arith.constant 0 : i32
    %c0_i32_1 = arith.constant 0 : i32
    %c0_i32_2 = arith.constant 0 : i32
    return %c0_i32, %c0_i32_0, %c0_i32_1 : i32, i32, i32
  }
  func.func @transform_6(%arg0: i32) -> (i32, i32, i32) {
    %c0_i32 = arith.constant 0 : i32
    %c0_i32_0 = arith.constant 0 : i32
    %c0_i32_1 = arith.constant 0 : i32
    %c0_i32_2 = arith.constant 0 : i32
    return %c0_i32, %c0_i32_0, %c0_i32_1 : i32, i32, i32
  }
  func.func @transform_7(%arg0: i32) -> (i32, i32, i32) {
    %c0_i32 = arith.constant 0 : i32
    %c0_i32_0 = arith.constant 0 : i32
    %c0_i32_1 = arith.constant 0 : i32
    %c0_i32_2 = arith.constant 0 : i32
    return %c0_i32, %c0_i32_0, %c0_i32_1 : i32, i32, i32
  }
  func.func @transform_8(%arg0: i32) -> (i32, i32, i32) {
    %c0_i32 = arith.constant 0 : i32
    %c0_i32_0 = arith.constant 0 : i32
    %c0_i32_1 = arith.constant 0 : i32
    %c0_i32_2 = arith.constant 0 : i32
    return %c0_i32, %c0_i32_0, %c0_i32_1 : i32, i32, i32
  }
  func.func @transform_9(%arg0: i32) -> (i32, i32, i32) {
    %c0_i32 = arith.constant 0 : i32
    %c0_i32_0 = arith.constant 0 : i32
    %c0_i32_1 = arith.constant 0 : i32
    %c0_i32_2 = arith.constant 0 : i32
    return %c0_i32, %c0_i32_0, %c0_i32_1 : i32, i32, i32
  }
  func.func @transform_10(%arg0: i32) -> (i32, i32, i32) {
    %c0_i32 = arith.constant 0 : i32
    %c0_i32_0 = arith.constant 0 : i32
    %c0_i32_1 = arith.constant 0 : i32
    %c0_i32_2 = arith.constant 0 : i32
    return %c0_i32, %c0_i32_0, %c0_i32_1 : i32, i32, i32
  }
  func.func @transform_11(%arg0: i32) -> (i32, i32, i32) {
    %c0_i32 = arith.constant 0 : i32
    %c0_i32_0 = arith.constant 0 : i32
    %c0_i32_1 = arith.constant 0 : i32
    %c0_i32_2 = arith.constant 0 : i32
    return %c0_i32, %c0_i32_0, %c0_i32_1 : i32, i32, i32
  }
  func.func @transform_12(%arg0: i32) -> (i32, i32, i32) {
    %c0_i32 = arith.constant 0 : i32
    %c0_i32_0 = arith.constant 0 : i32
    %c0_i32_1 = arith.constant 0 : i32
    %c0_i32_2 = arith.constant 0 : i32
    return %c0_i32, %c0_i32_0, %c0_i32_1 : i32, i32, i32
  }
  func.func @transform_13(%arg0: i32) -> (i32, i32, i32) {
    %c0_i32 = arith.constant 0 : i32
    %c0_i32_0 = arith.constant 0 : i32
    %c0_i32_1 = arith.constant 0 : i32
    %c0_i32_2 = arith.constant 0 : i32
    return %c0_i32, %c0_i32_0, %c0_i32_1 : i32, i32, i32
  }
  func.func @transform_14(%arg0: i32) -> (i32, i32, i32) {
    %c0_i32 = arith.constant 0 : i32
    %c0_i32_0 = arith.constant 0 : i32
    %c0_i32_1 = arith.constant 0 : i32
    %c0_i32_2 = arith.constant 0 : i32
    return %c0_i32, %c0_i32_0, %c0_i32_1 : i32, i32, i32
  }
  func.func @transform_15(%arg0: i32) -> (i32, i32, i32) {
    %c0_i32 = arith.constant 0 : i32
    %c0_i32_0 = arith.constant 0 : i32
    %c0_i32_1 = arith.constant 0 : i32
    %c0_i32_2 = arith.constant 0 : i32
    return %c0_i32, %c0_i32_0, %c0_i32_1 : i32, i32, i32
  }
  func.func @transform_16(%arg0: i32) -> (i32, i32, i32) {
    %c0_i32 = arith.constant 0 : i32
    %c0_i32_0 = arith.constant 0 : i32
    %c0_i32_1 = arith.constant 0 : i32
    %c0_i32_2 = arith.constant 0 : i32
    return %c0_i32, %c0_i32_0, %c0_i32_1 : i32, i32, i32
  }
  func.func @transform_17(%arg0: i32) -> (i32, i32, i32) {
    %c0_i32 = arith.constant 0 : i32
    %c0_i32_0 = arith.constant 0 : i32
    %c0_i32_1 = arith.constant 0 : i32
    %c0_i32_2 = arith.constant 0 : i32
    return %c0_i32, %c0_i32_0, %c0_i32_1 : i32, i32, i32
  }
  func.func @transform_18(%arg0: i32) -> (i32, i32, i32) {
    %c0_i32 = arith.constant 0 : i32
    %c0_i32_0 = arith.constant 0 : i32
    %c0_i32_1 = arith.constant 0 : i32
    %c0_i32_2 = arith.constant 0 : i32
    return %c0_i32, %c0_i32_0, %c0_i32_1 : i32, i32, i32
  }
  func.func @transform_19(%arg0: i32) -> (i32, i32, i32) {
    %c0_i32 = arith.constant 0 : i32
    %c0_i32_0 = arith.constant 0 : i32
    %c0_i32_1 = arith.constant 0 : i32
    %c0_i32_2 = arith.constant 0 : i32
    return %c0_i32, %c0_i32_0, %c0_i32_1 : i32, i32, i32
  }
  func.func @transform_20(%arg0: i32) -> (i32, i32, i32) {
    %c0_i32 = arith.constant 0 : i32
    %c0_i32_0 = arith.constant 0 : i32
    %c0_i32_1 = arith.constant 0 : i32
    %c0_i32_2 = arith.constant 0 : i32
    return %c0_i32, %c0_i32_0, %c0_i32_1 : i32, i32, i32
  }
  func.func @transform_21(%arg0: i32) -> (i32, i32, i32) {
    %c0_i32 = arith.constant 0 : i32
    %c0_i32_0 = arith.constant 0 : i32
    %c0_i32_1 = arith.constant 0 : i32
    %c0_i32_2 = arith.constant 0 : i32
    return %c0_i32, %c0_i32_0, %c0_i32_1 : i32, i32, i32
  }
  func.func @transform_22(%arg0: i32) -> (i32, i32, i32) {
    %c0_i32 = arith.constant 0 : i32
    %c0_i32_0 = arith.constant 0 : i32
    %c0_i32_1 = arith.constant 0 : i32
    %c0_i32_2 = arith.constant 0 : i32
    return %c0_i32, %c0_i32_0, %c0_i32_1 : i32, i32, i32
  }
  func.func @transform_23(%arg0: i32) -> (i32, i32) {
    %c0_i32 = arith.constant 0 : i32
    %c0_i32_0 = arith.constant 0 : i32
    %c0_i32_1 = arith.constant 0 : i32
    return %c0_i32, %c0_i32_0 : i32, i32
  }
  func.func @transform_24(%arg0: i32) -> (i32, i32) {
    %c0_i32 = arith.constant 0 : i32
    %c0_i32_0 = arith.constant 0 : i32
    %c0_i32_1 = arith.constant 0 : i32
    return %c0_i32, %c0_i32_0 : i32, i32
  }
  func.func @transform_25(%arg0: i32) -> (i32, i32) {
    %c0_i32 = arith.constant 0 : i32
    %c0_i32_0 = arith.constant 0 : i32
    %c0_i32_1 = arith.constant 0 : i32
    return %c0_i32, %c0_i32_0 : i32, i32
  }
  func.func @transform_26(%arg0: i32) -> (i32, i32) {
    %c0_i32 = arith.constant 0 : i32
    %c0_i32_0 = arith.constant 0 : i32
    %c0_i32_1 = arith.constant 0 : i32
    return %c0_i32, %c0_i32_0 : i32, i32
  }
  func.func @transform_27(%arg0: i32) -> (i32, i32) {
    %c0_i32 = arith.constant 0 : i32
    %c0_i32_0 = arith.constant 0 : i32
    %c0_i32_1 = arith.constant 0 : i32
    return %c0_i32, %c0_i32_0 : i32, i32
  }
  func.func @transform_28(%arg0: i32) -> (i32, i32) {
    %c0_i32 = arith.constant 0 : i32
    %c0_i32_0 = arith.constant 0 : i32
    %c0_i32_1 = arith.constant 0 : i32
    return %c0_i32, %c0_i32_0 : i32, i32
  }
  func.func @transform_29(%arg0: i32) -> (i32, i32) {
    %c0_i32 = arith.constant 0 : i32
    %c0_i32_0 = arith.constant 0 : i32
    return %arg0, %c0_i32 : i32, i32
  }
}

</mosaic_0001>

<llo_original>
// kernel: forward.1
$region0: #{forward.1}
  #allocation0 [shape = 'u32[]', space=smem, size = 0x4, offset = 0x4, fixed_abs, tag = 'smem constant byte address 0x4 - core index']
  #allocation1 [shape = 'u32[144,128]{1,0:T(1,128)}', space=vmem, size = 0x12000, scoped, tag = 'internal scratch']
  #allocation2 [shape = 'f32[1,1]{1,0:T(1,128)S(1)}', space=vmem, size = 0x200, scoped, tag = 'scoped memory for forward.1']
  %s0 = inlined_call_operand.smem [shape: u32[30], index: -1, kind: input, shape index: {}]
  %s1 = sld [smem:[%s0]]
  %s2 = scalar_lea.smem %s0, 1
  %s3 = sld [smem:[%s2]]
  %s4 = scalar_lea.smem %s0, 2
  %s5 = sld [smem:[%s4]]
  %s6 = scalar_lea.smem %s0, 3
  %s7 = sld [smem:[%s6]]
  %s8 = scalar_lea.smem %s0, 4
  %s9 = sld [smem:[%s8]]
  %s10 = scalar_lea.smem %s0, 5
  %s11 = sld [smem:[%s10]]
  %s12 = scalar_lea.smem %s0, 6
  %s13 = sld [smem:[%s12]]
  %s14 = scalar_lea.smem %s0, 7
  %s15 = sld [smem:[%s14]]
  %s16 = scalar_lea.smem %s0, 8
  %s17 = sld [smem:[%s16]]
  %s18 = scalar_lea.smem %s0, 9
  %s19 = sld [smem:[%s18]]
  %s20 = scalar_lea.smem %s0, 10
  %s21 = sld [smem:[%s20]]
  %s22 = scalar_lea.smem %s0, 11
  %s23 = sld [smem:[%s22]]
  %s24 = scalar_lea.smem %s0, 12
  %s25 = sld [smem:[%s24]]
  %s26 = scalar_lea.smem %s0, 13
  %s27 = sld [smem:[%s26]]
  %s28 = scalar_lea.smem %s0, 14
  %s29 = sld [smem:[%s28]]
  %s30 = scalar_lea.smem %s0, 15
  %s31 = sld [smem:[%s30]]
  %s32 = scalar_lea.smem %s0, 16
  %s33 = sld [smem:[%s32]]
  %s34 = scalar_lea.smem %s0, 17
  %s35 = sld [smem:[%s34]]
  %s36 = scalar_lea.smem %s0, 18
  %s37 = sld [smem:[%s36]]
  %s38 = scalar_lea.smem %s0, 19
  %s39 = sld [smem:[%s38]]
  %s40 = scalar_lea.smem %s0, 20
  %s41 = sld [smem:[%s40]]
  %s42 = scalar_lea.smem %s0, 21
  %s43 = sld [smem:[%s42]]
  %s44 = scalar_lea.smem %s0, 22
  %s45 = sld [smem:[%s44]]
  %s46 = scalar_lea.smem %s0, 23
  %s47 = sld [smem:[%s46]]
  %s48 = scalar_lea.smem %s0, 24
  %s49 = sld [smem:[%s48]]
  %s50 = scalar_lea.smem %s0, 25
  %s51 = sld [smem:[%s50]]
  %s52 = scalar_lea.smem %s0, 26
  %s53 = sld [smem:[%s52]]
  %s54 = scalar_lea.smem %s0, 27
  %s55 = sld [smem:[%s54]]
  %s56 = scalar_lea.smem %s0, 28
  %s57 = sld [smem:[%s56]]
  %s58 = scalar_lea.smem %s0, 29
  %s59 = sld [smem:[%s58]]
  %s60 = sld [smem:[#allocation0]]
  $region158: #{forward.1} parent=0
    _
  %s62 = ssub.s32 1, %s60
  %s63 = scalar_select 0, %s62, %s60
  %v64 = vstv %s57
  %65 = vst [vmem:[#allocation2] sm:$0x1] %v64
  $region1: #{forward.1} parent=0
    #allocation3 [shape = 'u8[4096]{0}', space=vmem, size = 0x1000, scoped, tag = 'input window, operand 1, single buffered']
    #allocation4 [shape = 's32[1]{0}', space=sflag, size = 0x4, scoped, tag = 'scoped memory for forward.1']
    #allocation5 [shape = 'u8[512]{0}', space=vmem, size = 0x400, scoped, tag = 'input window, operand 2, single buffered']
    #allocation6 [shape = 's32[1]{0}', space=sflag, size = 0x4, scoped, tag = 'scoped memory for forward.1']
    #allocation7 [shape = 'u8[1024]{0}', space=vmem, size = 0x400, scoped, tag = 'input window, operand 4, single buffered']
    #allocation8 [shape = 'u8[1024]{0}', space=vmem, size = 0x400, scoped, tag = 'input window, operand 6, single buffered']
    #allocation9 [shape = 's32[1]{0}', space=sflag, size = 0x4, scoped, tag = 'scoped memory for forward.1']
    #allocation10 [shape = 'u8[1024]{0}', space=vmem, size = 0x400, scoped, tag = 'input window, operand 8, single buffered']
    #allocation11 [shape = 'u8[1024]{0}', space=vmem, size = 0x400, scoped, tag = 'input window, operand 10, single buffered']
    #allocation12 [shape = 's32[1]{0}', space=sflag, size = 0x4, scoped, tag = 'scoped memory for forward.1']
    #allocation13 [shape = 'u8[1024]{0}', space=vmem, size = 0x400, scoped, tag = 'input window, operand 11, single buffered']
    #allocation14 [shape = 'u8[1024]{0}', space=vmem, size = 0x400, scoped, tag = 'input window, operand 12, single buffered']
    #allocation15 [shape = 's32[1]{0}', space=sflag, size = 0x4, scoped, tag = 'scoped memory for forward.1']
    %66 = vsyncpa [#allocation4], 0
    %67 = vsyncpa [#allocation6], 0
    %68 = vsyncpa [#allocation9], 0
    %69 = vsyncpa [#allocation12], 0
    %70 = vsyncpa [#allocation15], 0
    // Predicated region
    $region2: #{forward.1} parent=1 // pred_check
      _
    $region3: #{forward.1} parent=1 // pred_check_branch
      %72 = sbr.rel (0) target = $region5
    $region4: #{forward.1} parent=1 // pred_region
      _
    $region5: #{forward.1} parent=1 // pred_fallthru
      _
    // Predicated region
    $region6: #{forward.1} parent=1 // pred_check
      _
    $region7: #{forward.1} parent=1 // pred_check_branch
      %74 = sbr.rel (0) target = $region9
    $region8: #{forward.1} parent=1 // pred_region
      %s76 = ssub.s32 128, 128
      %77 = vsyncadd [#allocation4], %s76
      %s79 = sshll.u32 [#allocation3], 4
      %s80 = int_to_ptr.vmem [resolvable:$true] %s79
      %82 = dma.hbm_to_vmem [thread:$0]  %s3, 128, %s80, [#allocation4]
    $region9: #{forward.1} parent=1 // pred_fallthru
      _
    // Predicated region
    $region10: #{forward.1} parent=1 // pred_check
      _
    $region11: #{forward.1} parent=1 // pred_check_branch
      %84 = sbr.rel (0) target = $region13
    $region12: #{forward.1} parent=1 // pred_region
      %s86 = ssub.s32 16, 16
      %87 = vsyncadd [#allocation6], %s86
      %s89 = sshll.u32 [#allocation5], 4
      %s90 = int_to_ptr.vmem [resolvable:$true] %s89
      %92 = dma.hbm_to_vmem [thread:$0]  %s5, 16, %s90, [#allocation6]
    $region13: #{forward.1} parent=1 // pred_fallthru
      _
    // Predicated region
    $region14: #{forward.1} parent=1 // pred_check
      _
    $region15: #{forward.1} parent=1 // pred_check_branch
      %94 = sbr.rel (0) target = $region17
    $region16: #{forward.1} parent=1 // pred_region
      _
    $region17: #{forward.1} parent=1 // pred_fallthru
      _
    // Predicated region
    $region18: #{forward.1} parent=1 // pred_check
      _
    $region19: #{forward.1} parent=1 // pred_check_branch
      %96 = sbr.rel (0) target = $region21
    $region20: #{forward.1} parent=1 // pred_region
      %s98 = ssub.s32 32, 32
      %99 = vsyncadd [#allocation6], %s98
      %s100 = sshll.u32 [#allocation7], 4
      %s101 = int_to_ptr.vmem [resolvable:$true] %s100
      %106 = dma.hbm_to_vmem [thread:$0]  %s9, 32, %s101, [#allocation6], 16, 16, 1
    $region21: #{forward.1} parent=1 // pred_fallthru
      _
    // Predicated region
    $region22: #{forward.1} parent=1 // pred_check
      _
    $region23: #{forward.1} parent=1 // pred_check_branch
      %108 = sbr.rel (0) target = $region25
    $region24: #{forward.1} parent=1 // pred_region
      _
    $region25: #{forward.1} parent=1 // pred_fallthru
      _
    // Predicated region
    $region26: #{forward.1} parent=1 // pred_check
      _
    $region27: #{forward.1} parent=1 // pred_check_branch
      %110 = sbr.rel (0) target = $region29
    $region28: #{forward.1} parent=1 // pred_region
      %s112 = ssub.s32 32, 32
      %113 = vsyncadd [#allocation9], %s112
      %s114 = sshll.u32 [#allocation8], 4
      %s115 = int_to_ptr.vmem [resolvable:$true] %s114
      %120 = dma.hbm_to_vmem [thread:$0]  %s13, 32, %s115, [#allocation9], 16, 16, 1
    $region29: #{forward.1} parent=1 // pred_fallthru
      _
    // Predicated region
    $region30: #{forward.1} parent=1 // pred_check
      _
    $region31: #{forward.1} parent=1 // pred_check_branch
      %122 = sbr.rel (0) target = $region33
    $region32: #{forward.1} parent=1 // pred_region
      _
    $region33: #{forward.1} parent=1 // pred_fallthru
      _
    // Predicated region
    $region34: #{forward.1} parent=1 // pred_check
      _
    $region35: #{forward.1} parent=1 // pred_check_branch
      %124 = sbr.rel (0) target = $region37
    $region36: #{forward.1} parent=1 // pred_region
      %s126 = ssub.s32 32, 32
      %127 = vsyncadd [#allocation9], %s126
      %s128 = sshll.u32 [#allocation10], 4
      %s129 = int_to_ptr.vmem [resolvable:$true] %s128
      %134 = dma.hbm_to_vmem [thread:$0]  %s17, 32, %s129, [#allocation9], 16, 16, 1
    $region37: #{forward.1} parent=1 // pred_fallthru
      _
    // Predicated region
    $region38: #{forward.1} parent=1 // pred_check
      _
    $region39: #{forward.1} parent=1 // pred_check_branch
      %136 = sbr.rel (0) target = $region41
    $region40: #{forward.1} parent=1 // pred_region
      _
    $region41: #{forward.1} parent=1 // pred_fallthru
      _
    // Predicated region
    $region42: #{forward.1} parent=1 // pred_check
      _
    $region43: #{forward.1} parent=1 // pred_check_branch
      %138 = sbr.rel (0) target = $region45
    $region44: #{forward.1} parent=1 // pred_region
      %s140 = ssub.s32 32, 32
      %141 = vsyncadd [#allocation12], %s140
      %s142 = sshll.u32 [#allocation11], 4
      %s143 = int_to_ptr.vmem [resolvable:$true] %s142
      %148 = dma.hbm_to_vmem [thread:$0]  %s21, 32, %s143, [#allocation12], 16, 16, 1
    $region45: #{forward.1} parent=1 // pred_fallthru
      _
    // Predicated region
    $region46: #{forward.1} parent=1 // pred_check
      _
    $region47: #{forward.1} parent=1 // pred_check_branch
      %150 = sbr.rel (0) target = $region49
    $region48: #{forward.1} parent=1 // pred_region
      %s152 = ssub.s32 32, 32
      %153 = vsyncadd [#allocation12], %s152
      %s154 = sshll.u32 [#allocation13], 4
      %s155 = int_to_ptr.vmem [resolvable:$true] %s154
      %160 = dma.hbm_to_vmem [thread:$0]  %s23, 32, %s155, [#allocation12], 16, 16, 1
    $region49: #{forward.1} parent=1 // pred_fallthru
      _
    // Predicated region
    $region50: #{forward.1} parent=1 // pred_check
      _
    $region51: #{forward.1} parent=1 // pred_check_branch
      %162 = sbr.rel (0) target = $region53
    $region52: #{forward.1} parent=1 // pred_region
      %s164 = ssub.s32 32, 32
      %165 = vsyncadd [#allocation15], %s164
      %s166 = sshll.u32 [#allocation14], 4
      %s167 = int_to_ptr.vmem [resolvable:$true] %s166
      %172 = dma.hbm_to_vmem [thread:$0]  %s25, 32, %s167, [#allocation15], 16, 16, 1
    $region53: #{forward.1} parent=1 // pred_fallthru
      _
    // Predicated region
    $region54: #{forward.1} parent=1 // pred_check
      _
    $region55: #{forward.1} parent=1 // pred_check_branch
      %174 = sbr.rel (0) target = $region57
    $region56: #{forward.1} parent=1 // pred_region
      _
    $region57: #{forward.1} parent=1 // pred_fallthru
      _
    // Predicated region
    $region58: #{forward.1} parent=1 // pred_check
      _
    $region59: #{forward.1} parent=1 // pred_check_branch
      %176 = sbr.rel (0) target = $region61
    $region60: #{forward.1} parent=1 // pred_region
      _
    $region61: #{forward.1} parent=1 // pred_fallthru
      _
    // Predicated region
    $region62: #{forward.1} parent=1 // pred_check
      _
    $region63: #{forward.1} parent=1 // pred_check_branch
      %178 = sbr.rel (0) target = $region65
    $region64: #{forward.1} parent=1 // pred_region
      _
    $region65: #{forward.1} parent=1 // pred_fallthru
      _
    // Predicated region
    $region66: #{forward.1} parent=1 // pred_check
      _
    $region67: #{forward.1} parent=1 // pred_check_branch
      %180 = sbr.rel (0) target = $region69
    $region68: #{forward.1} parent=1 // pred_region
      _
    $region69: #{forward.1} parent=1 // pred_fallthru
      _
    // Predicated region
    $region70: #{forward.1} parent=1 // pred_check
      _
    $region71: #{forward.1} parent=1 // pred_check_branch
      %182 = sbr.rel (0) target = $region73
    $region72: #{forward.1} parent=1 // pred_region
      _
    $region73: #{forward.1} parent=1 // pred_fallthru
      _
    // Predicated region
    $region74: #{forward.1} parent=1 // pred_check
      _
    $region75: #{forward.1} parent=1 // pred_check_branch
      %184 = sbr.rel (0) target = $region77
    $region76: #{forward.1} parent=1 // pred_region
      _
    $region77: #{forward.1} parent=1 // pred_fallthru
      _
    // Predicated region
    $region78: #{forward.1} parent=1 // pred_check
      _
    $region79: #{forward.1} parent=1 // pred_check_branch
      %186 = sbr.rel (0) target = $region81
    $region80: #{forward.1} parent=1 // pred_region
      _
    $region81: #{forward.1} parent=1 // pred_fallthru
      _
    // Predicated region
    $region82: #{forward.1} parent=1 // pred_check
      _
    $region83: #{forward.1} parent=1 // pred_check_branch
      %188 = sbr.rel (0) target = $region85
    $region84: #{forward.1} parent=1 // pred_region
      _
    $region85: #{forward.1} parent=1 // pred_fallthru
      _
    // Predicated region
    $region86: #{forward.1} parent=1 // pred_check
      _
    $region87: #{forward.1} parent=1 // pred_check_branch
      %190 = sbr.rel (0) target = $region89
    $region88: #{forward.1} parent=1 // pred_region
      _
    $region89: #{forward.1} parent=1 // pred_fallthru
      _
    // Predicated region
    $region90: #{forward.1} parent=1 // pred_check
      _
    $region91: #{forward.1} parent=1 // pred_check_branch
      %192 = sbr.rel (0) target = $region93
    $region92: #{forward.1} parent=1 // pred_region
      _
    $region93: #{forward.1} parent=1 // pred_fallthru
      _
    // Predicated region
    $region94: #{forward.1} parent=1 // pred_check
      _
    $region95: #{forward.1} parent=1 // pred_check_branch
      %194 = sbr.rel (0) target = $region97
    $region96: #{forward.1} parent=1 // pred_region
      _
    $region97: #{forward.1} parent=1 // pred_fallthru
      _
    // Predicated region
    $region98: #{forward.1} parent=1 // pred_check
      _
    $region99: #{forward.1} parent=1 // pred_check_branch
      %196 = sbr.rel (0) target = $region101
    $region100: #{forward.1} parent=1 // pred_region
      _
    $region101: #{forward.1} parent=1 // pred_fallthru
      _
    // Predicated region
    $region102: #{forward.1} parent=1 // pred_check
      _
    $region103: #{forward.1} parent=1 // pred_check_branch
      %198 = sbr.rel (0) target = $region105
    $region104: #{forward.1} parent=1 // pred_region
      _
    $region105: #{forward.1} parent=1 // pred_fallthru
      _
    // Predicated region
    $region106: #{forward.1} parent=1 // pred_check
      _
    $region107: #{forward.1} parent=1 // pred_check_branch
      %200 = sbr.rel (0) target = $region109
    $region108: #{forward.1} parent=1 // pred_region
      _
    $region109: #{forward.1} parent=1 // pred_fallthru
      _
    // Predicated region
    $region110: #{forward.1} parent=1 // pred_check
      _
    $region111: #{forward.1} parent=1 // pred_check_branch
      %202 = sbr.rel (0) target = $region113
    $region112: #{forward.1} parent=1 // pred_region
      _
    $region113: #{forward.1} parent=1 // pred_fallthru
      _
    // Predicated region
    $region114: #{forward.1} parent=1 // pred_check
      _
    $region115: #{forward.1} parent=1 // pred_check_branch
      %204 = sbr.rel (0) target = $region117
    $region116: #{forward.1} parent=1 // pred_region
      _
    $region117: #{forward.1} parent=1 // pred_fallthru
      _
    // Predicated region
    $region118: #{forward.1} parent=1 // pred_check
      _
    $region119: #{forward.1} parent=1 // pred_check_branch
      %206 = sbr.rel (0) target = $region121
    $region120: #{forward.1} parent=1 // pred_region
      %207 = dma.done [#allocation4], 128
    $region121: #{forward.1} parent=1 // pred_fallthru
      _
    // Predicated region
    $region122: #{forward.1} parent=1 // pred_check
      _
    $region123: #{forward.1} parent=1 // pred_check_branch
      %209 = sbr.rel (0) target = $region125
    $region124: #{forward.1} parent=1 // pred_region
      %210 = dma.done [#allocation6], 16
    $region125: #{forward.1} parent=1 // pred_fallthru
      _
    // Predicated region
    $region126: #{forward.1} parent=1 // pred_check
      _
    $region127: #{forward.1} parent=1 // pred_check_branch
      %212 = sbr.rel (0) target = $region129
    $region128: #{forward.1} parent=1 // pred_region
      %213 = dma.done [#allocation6], 32
    $region129: #{forward.1} parent=1 // pred_fallthru
      _
    // Predicated region
    $region130: #{forward.1} parent=1 // pred_check
      _
    $region131: #{forward.1} parent=1 // pred_check_branch
      %215 = sbr.rel (0) target = $region133
    $region132: #{forward.1} parent=1 // pred_region
      %216 = dma.done [#allocation9], 32
    $region133: #{forward.1} parent=1 // pred_fallthru
      _
    // Predicated region
    $region134: #{forward.1} parent=1 // pred_check
      _
    $region135: #{forward.1} parent=1 // pred_check_branch
      %218 = sbr.rel (0) target = $region137
    $region136: #{forward.1} parent=1 // pred_region
      %219 = dma.done [#allocation9], 32
    $region137: #{forward.1} parent=1 // pred_fallthru
      _
    // Predicated region
    $region138: #{forward.1} parent=1 // pred_check
      _
    $region139: #{forward.1} parent=1 // pred_check_branch
      %221 = sbr.rel (0) target = $region141
    $region140: #{forward.1} parent=1 // pred_region
      %222 = dma.done [#allocation12], 32
    $region141: #{forward.1} parent=1 // pred_fallthru
      _
    // Predicated region
    $region142: #{forward.1} parent=1 // pred_check
      _
    $region143: #{forward.1} parent=1 // pred_check_branch
      %224 = sbr.rel (0) target = $region145
    $region144: #{forward.1} parent=1 // pred_region
      %225 = dma.done [#allocation12], 32
    $region145: #{forward.1} parent=1 // pred_fallthru
      _
    // Predicated region
    $region146: #{forward.1} parent=1 // pred_check
      _
    $region147: #{forward.1} parent=1 // pred_check_branch
      %227 = sbr.rel (0) target = $region149
    $region148: #{forward.1} parent=1 // pred_region
      %228 = dma.done [#allocation15], 32
    $region149: #{forward.1} parent=1 // pred_fallthru
      _
    %v229 = vld [vmem:[%s1] sm:$0xff]
    %s230 = scalar_lea.vmem %s1, 8
    %v231 = vld [vmem:[%s230] sm:$0xff]
    %v232 = vld [vmem:[#allocation3] sm:$0xff]
    %v233 = vld [vmem:[#allocation5] sm:$0x1]
    %v235 = vlaneseq
    %v236 = vshrl.u32 %v235, 7
    %v237 = vsub.s32 0, %v236
    %v238 = vrot.slane %v233, %v237
    %vm240 = vcmask 64512
    %v242 = vsel %vm240, %v229, 0
    %v245 = vsel %vm240, %v231, 0
    %247 = vmatprep.subr.mxu0 0.0
    %248 = vmatpush1.msra.mxu0 %v232
    %249 = vmatprep.subr.mxu0 0.0
    %250 = vmatpush1.msra.mxu0 0.0
    %251 = vmatprep.subr.mxu0 0.0
    %252 = vmatpush1.msra.mxu0 0.0
    %253 = vmatprep.subr.mxu0 0.0
    %254 = vmatpush1.msra.mxu0 0.0
    %255 = vmatprep.subr.mxu0 0.0
    %256 = vmatpush1.msra.mxu0 0.0
    %257 = vmatprep.subr.mxu0 0.0
    %258 = vmatpush1.msra.mxu0 0.0
    %259 = vmatprep.subr.mxu0 0.0
    %260 = vmatpush1.msra.mxu0 0.0
    %261 = vmatprep.subr.mxu0 0.0
    %262 = vmatpush1.msra.mxu0 0.0
    %263 = vmatprep.subr.mxu0 0.0
    %264 = vmatpush1.msra.mxu0 0.0
    %265 = vmatprep.subr.mxu0 0.0
    %266 = vmatpush1.msra.mxu0 0.0
    %267 = vmatprep.subr.mxu0 0.0
    %268 = vmatpush1.msra.mxu0 0.0
    %269 = vmatprep.subr.mxu0 0.0
    %270 = vmatpush1.msra.mxu0 0.0
    %271 = vmatprep.subr.mxu0 0.0
    %272 = vmatpush1.msra.mxu0 0.0
    %273 = vmatprep.subr.mxu0 0.0
    %274 = vmatpush1.msra.mxu0 0.0
    %275 = vmatprep.subr.mxu0 0.0
    %276 = vmatpush1.msra.mxu0 0.0
    %277 = vmatprep.subr.mxu0 0.0
    %278 = vmatpush1.msra.mxu0 0.0
    %279 = vmatprep.subr.mxu0 0.0
    %280 = vmatpush1.msra.mxu0 0.0
    %281 = vmatprep.subr.mxu0 0.0
    %282 = vmatpush1.msra.mxu0 0.0
    %283 = vmatprep.subr.mxu0 0.0
    %284 = vmatpush1.msra.mxu0 0.0
    %285 = vmatprep.subr.mxu0 0.0
    %286 = vmatpush1.msra.mxu0 0.0
    %287 = vmatprep.subr.mxu0 0.0
    %288 = vmatpush1.msra.mxu0 0.0
    %289 = vmatprep.subr.mxu0 0.0
    %290 = vmatpush1.msra.mxu0 0.0
    %291 = vmatprep.subr.mxu0 0.0
    %292 = vmatpush1.msra.mxu0 0.0
    %293 = vmatprep.subr.mxu0 0.0
    %294 = vmatpush1.msra.mxu0 0.0
    %295 = vmatprep.subr.mxu0 0.0
    %296 = vmatpush1.msra.mxu0 0.0
    %297 = vmatprep.subr.mxu0 0.0
    %298 = vmatpush1.msra.mxu0 0.0
    %299 = vmatprep.subr.mxu0 0.0
    %300 = vmatpush1.msra.mxu0 0.0
    %301 = vmatprep.subr.mxu0 0.0
    %302 = vmatpush1.msra.mxu0 0.0
    %303 = vmatprep.subr.mxu0 0.0
    %304 = vmatpush1.msra.mxu0 0.0
    %305 = vmatprep.subr.mxu0 0.0
    %306 = vmatpush1.msra.mxu0 0.0
    %307 = vmatprep.subr.mxu0 0.0
    %308 = vmatpush1.msra.mxu0 0.0
    %309 = vmatprep.subr.mxu0 0.0
    %310 = vmatpush1.msra.mxu0 0.0
    %311 = vmatprep.mubr.f32.mxu0 0.0
    %312 = vmatmul.mubr.f32.gmra.mrb[0].mxu0 %v242
    %v313 = vpop.f32.mrb[0].mxu0
    %v314 = vadd.f32 %v238, %v313
    %v315 = vpop.f32.mrb[0].mxu0
    %316 = vmatprep.mubr.f32.mxu0 0.0
    %317 = vmatmul.mubr.f32.gmra.mrb[0].mxu0 %v245
    %v318 = vpop.f32.mrb[0].mxu0
    %v319 = vadd.f32 %v238, %v318
    %v320 = vpop.f32.mrb[0].mxu0
    %321 = vdwg.mxu0
    %322 = vxpose.xlu0.b32.start [1/16] %v314, 128
    %323 = vxpose.xlu0.b32.cont [2/16] 0.0, 128
    %324 = vxpose.xlu0.b32.cont [3/16] 0.0, 128
    %325 = vxpose.xlu0.b32.cont [4/16] 0.0, 128
    %326 = vxpose.xlu0.b32.cont [5/16] 0.0, 128
    %327 = vxpose.xlu0.b32.cont [6/16] 0.0, 128
    %328 = vxpose.xlu0.b32.cont [7/16] 0.0, 128
    %329 = vxpose.xlu0.b32.cont [8/16] 0.0, 128
    %330 = vxpose.xlu0.b32.cont [9/16] 0.0, 128
    %331 = vxpose.xlu0.b32.cont [10/16] 0.0, 128
    %332 = vxpose.xlu0.b32.cont [11/16] 0.0, 128
    %333 = vxpose.xlu0.b32.cont [12/16] 0.0, 128
    %334 = vxpose.xlu0.b32.cont [13/16] 0.0, 128
    %335 = vxpose.xlu0.b32.cont [14/16] 0.0, 128
    %336 = vxpose.xlu0.b32.cont [15/16] 0.0, 128
    %337 = vxpose.xlu0.b32.end [16/16] 0.0, 128
    %v338 = vpop.trf.xlu0
    %v339 = vpop.trf.xlu0
    %v340 = vpop.trf.xlu0
    %v341 = vpop.trf.xlu0
    %v342 = vpop.trf.xlu0
    %v343 = vpop.trf.xlu0
    %v344 = vpop.trf.xlu0
    %v345 = vpop.trf.xlu0
    %v346 = vpop.trf.xlu0
    %v347 = vpop.trf.xlu0
    %v348 = vpop.trf.xlu0
    %v349 = vpop.trf.xlu0
    %v350 = vpop.trf.xlu0
    %v351 = vpop.trf.xlu0
    %v352 = vpop.trf.xlu0
    %v353 = vpop.trf.xlu0
    %354 = vxpose.xlu0.b32.start [1/16] %v319, 128
    %355 = vxpose.xlu0.b32.cont [2/16] 0.0, 128
    %356 = vxpose.xlu0.b32.cont [3/16] 0.0, 128
    %357 = vxpose.xlu0.b32.cont [4/16] 0.0, 128
    %358 = vxpose.xlu0.b32.cont [5/16] 0.0, 128
    %359 = vxpose.xlu0.b32.cont [6/16] 0.0, 128
    %360 = vxpose.xlu0.b32.cont [7/16] 0.0, 128
    %361 = vxpose.xlu0.b32.cont [8/16] 0.0, 128
    %362 = vxpose.xlu0.b32.cont [9/16] 0.0, 128
    %363 = vxpose.xlu0.b32.cont [10/16] 0.0, 128
    %364 = vxpose.xlu0.b32.cont [11/16] 0.0, 128
    %365 = vxpose.xlu0.b32.cont [12/16] 0.0, 128
    %366 = vxpose.xlu0.b32.cont [13/16] 0.0, 128
    %367 = vxpose.xlu0.b32.cont [14/16] 0.0, 128
    %368 = vxpose.xlu0.b32.cont [15/16] 0.0, 128
    %369 = vxpose.xlu0.b32.end [16/16] 0.0, 128
    %v370 = vpop.trf.xlu0
    %v371 = vpop.trf.xlu0
    %v372 = vpop.trf.xlu0
    %v373 = vpop.trf.xlu0
    %v374 = vpop.trf.xlu0
    %v375 = vpop.trf.xlu0
    %v376 = vpop.trf.xlu0
    %v377 = vpop.trf.xlu0
    %v378 = vpop.trf.xlu0
    %v379 = vpop.trf.xlu0
    %v380 = vpop.trf.xlu0
    %v381 = vpop.trf.xlu0
    %v382 = vpop.trf.xlu0
    %v383 = vpop.trf.xlu0
    %v384 = vpop.trf.xlu0
    %v385 = vpop.trf.xlu0
    %v386 = vld [vmem:[%s7] sm:$0xff]
    %v387 = vld [vmem:[#allocation7] sm:$0x1]
    %v389 = vlaneseq
    %v390 = vshrl.u32 %v389, 7
    %v391 = vsub.s32 0, %v390
    %v392 = vrot.slane %v387, %v391
    %v395 = vsel %vm240, %v338, 0
    %v398 = vsel %vm240, %v339, 0
    %v401 = vsel %vm240, %v340, 0
    %v404 = vsel %vm240, %v341, 0
    %v407 = vsel %vm240, %v370, 0
    %v410 = vsel %vm240, %v371, 0
    %v413 = vsel %vm240, %v372, 0
    %v416 = vsel %vm240, %v373, 0
    %418 = vmatprep.subr.mxu0 0.0
    %419 = vmatpush1.msra.mxu0 %v386
    %420 = vmatprep.subr.mxu0 0.0
    %421 = vmatpush1.msra.mxu0 0.0
    %422 = vmatprep.subr.mxu0 0.0
    %423 = vmatpush1.msra.mxu0 0.0
    %424 = vmatprep.subr.mxu0 0.0
    %425 = vmatpush1.msra.mxu0 0.0
    %426 = vmatprep.subr.mxu0 0.0
    %427 = vmatpush1.msra.mxu0 0.0
    %428 = vmatprep.subr.mxu0 0.0
    %429 = vmatpush1.msra.mxu0 0.0
    %430 = vmatprep.subr.mxu0 0.0
    %431 = vmatpush1.msra.mxu0 0.0
    %432 = vmatprep.subr.mxu0 0.0
    %433 = vmatpush1.msra.mxu0 0.0
    %434 = vmatprep.subr.mxu0 0.0
    %435 = vmatpush1.msra.mxu0 0.0
    %436 = vmatprep.subr.mxu0 0.0
    %437 = vmatpush1.msra.mxu0 0.0
    %438 = vmatprep.subr.mxu0 0.0
    %439 = vmatpush1.msra.mxu0 0.0
    %440 = vmatprep.subr.mxu0 0.0
    %441 = vmatpush1.msra.mxu0 0.0
    %442 = vmatprep.subr.mxu0 0.0
    %443 = vmatpush1.msra.mxu0 0.0
    %444 = vmatprep.subr.mxu0 0.0
    %445 = vmatpush1.msra.mxu0 0.0
    %446 = vmatprep.subr.mxu0 0.0
    %447 = vmatpush1.msra.mxu0 0.0
    %448 = vmatprep.subr.mxu0 0.0
    %449 = vmatpush1.msra.mxu0 0.0
    %450 = vmatprep.subr.mxu0 0.0
    %451 = vmatpush1.msra.mxu0 0.0
    %452 = vmatprep.subr.mxu0 0.0
    %453 = vmatpush1.msra.mxu0 0.0
    %454 = vmatprep.subr.mxu0 0.0
    %455 = vmatpush1.msra.mxu0 0.0
    %456 = vmatprep.subr.mxu0 0.0
    %457 = vmatpush1.msra.mxu0 0.0
    %458 = vmatprep.subr.mxu0 0.0
    %459 = vmatpush1.msra.mxu0 0.0
    %460 = vmatprep.subr.mxu0 0.0
    %461 = vmatpush1.msra.mxu0 0.0
    %462 = vmatprep.subr.mxu0 0.0
    %463 = vmatpush1.msra.mxu0 0.0
    %464 = vmatprep.subr.mxu0 0.0
    %465 = vmatpush1.msra.mxu0 0.0
    %466 = vmatprep.subr.mxu0 0.0
    %467 = vmatpush1.msra.mxu0 0.0
    %468 = vmatprep.subr.mxu0 0.0
    %469 = vmatpush1.msra.mxu0 0.0
    %470 = vmatprep.subr.mxu0 0.0
    %471 = vmatpush1.msra.mxu0 0.0
    %472 = vmatprep.subr.mxu0 0.0
    %473 = vmatpush1.msra.mxu0 0.0
    %474 = vmatprep.subr.mxu0 0.0
    %475 = vmatpush1.msra.mxu0 0.0
    %476 = vmatprep.subr.mxu0 0.0
    %477 = vmatpush1.msra.mxu0 0.0
    %478 = vmatprep.subr.mxu0 0.0
    %479 = vmatpush1.msra.mxu0 0.0
    %480 = vmatprep.subr.mxu0 0.0
    %481 = vmatpush1.msra.mxu0 0.0
    %482 = vmatprep.mubr.f32.mxu0 0.0
    %483 = vmatmul.mubr.f32.gmra.mrb[0].mxu0 %v395
    %v484 = vpop.f32.mrb[0].mxu0
    %v485 = vadd.f32 %v392, %v484
    %v486 = vpop.f32.mrb[0].mxu0
    %487 = vmatprep.mubr.f32.mxu0 0.0
    %488 = vmatmul.mubr.f32.gmra.mrb[0].mxu0 %v398
    %v489 = vpop.f32.mrb[0].mxu0
    %v490 = vadd.f32 %v392, %v489
    %v491 = vpop.f32.mrb[0].mxu0
    %492 = vmatprep.mubr.f32.mxu0 0.0
    %493 = vmatmul.mubr.f32.gmra.mrb[0].mxu0 %v401
    %v494 = vpop.f32.mrb[0].mxu0
    %v495 = vadd.f32 %v392, %v494
    %v496 = vpop.f32.mrb[0].mxu0
    %497 = vmatprep.mubr.f32.mxu0 0.0
    %498 = vmatmul.mubr.f32.gmra.mrb[0].mxu0 %v404
    %v499 = vpop.f32.mrb[0].mxu0
    %v500 = vadd.f32 %v392, %v499
    %v501 = vpop.f32.mrb[0].mxu0
    %502 = vmatprep.mubr.f32.mxu0 0.0
    %503 = vmatmul.mubr.f32.gmra.mrb[0].mxu0 %v407
    %v504 = vpop.f32.mrb[0].mxu0
    %v505 = vadd.f32 %v392, %v504
    %v506 = vpop.f32.mrb[0].mxu0
    %507 = vmatprep.mubr.f32.mxu0 0.0
    %508 = vmatmul.mubr.f32.gmra.mrb[0].mxu0 %v410
    %v509 = vpop.f32.mrb[0].mxu0
    %v510 = vadd.f32 %v392, %v509
    %v511 = vpop.f32.mrb[0].mxu0
    %512 = vmatprep.mubr.f32.mxu0 0.0
    %513 = vmatmul.mubr.f32.gmra.mrb[0].mxu0 %v413
    %v514 = vpop.f32.mrb[0].mxu0
    %v515 = vadd.f32 %v392, %v514
    %v516 = vpop.f32.mrb[0].mxu0
    %517 = vmatprep.mubr.f32.mxu0 0.0
    %518 = vmatmul.mubr.f32.gmra.mrb[0].mxu0 %v416
    %v519 = vpop.f32.mrb[0].mxu0
    %v520 = vadd.f32 %v392, %v519
    %v521 = vpop.f32.mrb[0].mxu0
    %522 = vdwg.mxu0
    %v523 = vmul.f32 %v485, 0.5
    %v524 = vmul.f32 %v490, 0.5
    %v525 = vmul.f32 %v495, 0.5
    %v526 = vmul.f32 %v500, 0.5
    %v527 = vmul.f32 %v505, 0.5
    %v528 = vmul.f32 %v510, 0.5
    %v529 = vmul.f32 %v515, 0.5
    %v530 = vmul.f32 %v520, 0.5
    %v531 = vmul.f32 %v485, 0.044715
    %v532 = vmul.f32 %v490, 0.044715
    %v533 = vmul.f32 %v495, 0.044715
    %v534 = vmul.f32 %v500, 0.044715
    %v535 = vmul.f32 %v505, 0.044715
    %v536 = vmul.f32 %v510, 0.044715
    %v537 = vmul.f32 %v515, 0.044715
    %v538 = vmul.f32 %v520, 0.044715
    %v539 = vmul.f32 %v531, %v485
    %v540 = vmul.f32 %v532, %v490
    %v541 = vmul.f32 %v533, %v495
    %v542 = vmul.f32 %v534, %v500
    %v543 = vmul.f32 %v535, %v505
    %v544 = vmul.f32 %v536, %v510
    %v545 = vmul.f32 %v537, %v515
    %v546 = vmul.f32 %v538, %v520
    %v547 = vmul.f32 %v539, %v485
    %v548 = vmul.f32 %v540, %v490
    %v549 = vmul.f32 %v541, %v495
    %v550 = vmul.f32 %v542, %v500
    %v551 = vmul.f32 %v543, %v505
    %v552 = vmul.f32 %v544, %v510
    %v553 = vmul.f32 %v545, %v515
    %v554 = vmul.f32 %v546, %v520
    %v555 = vadd.f32 %v485, %v547
    %v556 = vadd.f32 %v490, %v548
    %v557 = vadd.f32 %v495, %v549
    %v558 = vadd.f32 %v500, %v550
    %v559 = vadd.f32 %v505, %v551
    %v560 = vadd.f32 %v510, %v552
    %v561 = vadd.f32 %v515, %v553
    %v562 = vadd.f32 %v520, %v554
    %v563 = vmul.f32 %v555, 0.7978846
    %v564 = vmul.f32 %v556, 0.7978846
    %v565 = vmul.f32 %v557, 0.7978846
    %v566 = vmul.f32 %v558, 0.7978846
    %v567 = vmul.f32 %v559, 0.7978846
    %v568 = vmul.f32 %v560, 0.7978846
    %v569 = vmul.f32 %v561, 0.7978846
    %v570 = vmul.f32 %v562, 0.7978846
    %v571 = vtanh.pop %v563
    %v572 = vtanh.pop %v564
    %v573 = vtanh.pop %v565
    %v574 = vtanh.pop %v566
    %v575 = vtanh.pop %v567
    %v576 = vtanh.pop %v568
    %v577 = vtanh.pop %v569
    %v578 = vtanh.pop %v570
    %v579 = vadd.f32 %v571, 1.0
    %v580 = vadd.f32 %v572, 1.0
    %v581 = vadd.f32 %v573, 1.0
    %v582 = vadd.f32 %v574, 1.0
    %v583 = vadd.f32 %v575, 1.0
    %v584 = vadd.f32 %v576, 1.0
    %v585 = vadd.f32 %v577, 1.0
    %v586 = vadd.f32 %v578, 1.0
    %v587 = vmul.f32 %v523, %v579
    %v588 = vmul.f32 %v524, %v580
    %v589 = vmul.f32 %v525, %v581
    %v590 = vmul.f32 %v526, %v582
    %v591 = vmul.f32 %v527, %v583
    %v592 = vmul.f32 %v528, %v584
    %v593 = vmul.f32 %v529, %v585
    %v594 = vmul.f32 %v530, %v586
    %v595 = vld [vmem:[%s11] sm:$0xff]
    %v596 = vld [vmem:[%s11 + $0x8] sm:$0xff]
    %v597 = vld [vmem:[#allocation8] sm:$0x1]
    %v599 = vlaneseq
    %v600 = vshrl.u32 %v599, 7
    %v601 = vsub.s32 0, %v600
    %v602 = vrot.slane %v597, %v601
    %vm604 = vcmask 130048
    %v606 = vsel %vm604, %v587, 0
    %v609 = vsel %vm604, %v588, 0
    %v612 = vsel %vm604, %v589, 0
    %v615 = vsel %vm604, %v590, 0
    %v618 = vsel %vm604, %v591, 0
    %v621 = vsel %vm604, %v592, 0
    %v624 = vsel %vm604, %v593, 0
    %v627 = vsel %vm604, %v594, 0
    %629 = vmatprep.subr.mxu0 0.0
    %630 = vmatpush1.msra.mxu0 %v595
    %631 = vmatprep.subr.mxu0 0.0
    %632 = vmatpush1.msra.mxu0 %v596
    %633 = vmatprep.subr.mxu0 0.0
    %634 = vmatpush1.msra.mxu0 0.0
    %635 = vmatprep.subr.mxu0 0.0
    %636 = vmatpush1.msra.mxu0 0.0
    %637 = vmatprep.subr.mxu0 0.0
    %638 = vmatpush1.msra.mxu0 0.0
    %639 = vmatprep.subr.mxu0 0.0
    %640 = vmatpush1.msra.mxu0 0.0
    %641 = vmatprep.subr.mxu0 0.0
    %642 = vmatpush1.msra.mxu0 0.0
    %643 = vmatprep.subr.mxu0 0.0
    %644 = vmatpush1.msra.mxu0 0.0
    %645 = vmatprep.subr.mxu0 0.0
    %646 = vmatpush1.msra.mxu0 0.0
    %647 = vmatprep.subr.mxu0 0.0
    %648 = vmatpush1.msra.mxu0 0.0
    %649 = vmatprep.subr.mxu0 0.0
    %650 = vmatpush1.msra.mxu0 0.0
    %651 = vmatprep.subr.mxu0 0.0
    %652 = vmatpush1.msra.mxu0 0.0
    %653 = vmatprep.subr.mxu0 0.0
    %654 = vmatpush1.msra.mxu0 0.0
    %655 = vmatprep.subr.mxu0 0.0
    %656 = vmatpush1.msra.mxu0 0.0
    %657 = vmatprep.subr.mxu0 0.0
    %658 = vmatpush1.msra.mxu0 0.0
    %659 = vmatprep.subr.mxu0 0.0
    %660 = vmatpush1.msra.mxu0 0.0
    %661 = vmatprep.subr.mxu0 0.0
    %662 = vmatpush1.msra.mxu0 0.0
    %663 = vmatprep.subr.mxu0 0.0
    %664 = vmatpush1.msra.mxu0 0.0
    %665 = vmatprep.subr.mxu0 0.0
    %666 = vmatpush1.msra.mxu0 0.0
    %667 = vmatprep.subr.mxu0 0.0
    %668 = vmatpush1.msra.mxu0 0.0
    %669 = vmatprep.subr.mxu0 0.0
    %670 = vmatpush1.msra.mxu0 0.0
    %671 = vmatprep.subr.mxu0 0.0
    %672 = vmatpush1.msra.mxu0 0.0
    %673 = vmatprep.subr.mxu0 0.0
    %674 = vmatpush1.msra.mxu0 0.0
    %675 = vmatprep.subr.mxu0 0.0
    %676 = vmatpush1.msra.mxu0 0.0
    %677 = vmatprep.subr.mxu0 0.0
    %678 = vmatpush1.msra.mxu0 0.0
    %679 = vmatprep.subr.mxu0 0.0
    %680 = vmatpush1.msra.mxu0 0.0
    %681 = vmatprep.subr.mxu0 0.0
    %682 = vmatpush1.msra.mxu0 0.0
    %683 = vmatprep.subr.mxu0 0.0
    %684 = vmatpush1.msra.mxu0 0.0
    %685 = vmatprep.subr.mxu0 0.0
    %686 = vmatpush1.msra.mxu0 0.0
    %687 = vmatprep.subr.mxu0 0.0
    %688 = vmatpush1.msra.mxu0 0.0
    %689 = vmatprep.subr.mxu0 0.0
    %690 = vmatpush1.msra.mxu0 0.0
    %691 = vmatprep.subr.mxu0 0.0
    %692 = vmatpush1.msra.mxu0 0.0
    %693 = vmatprep.mubr.f32.mxu0 0.0
    %694 = vmatmul.mubr.f32.gmra.mrb[0].mxu0 %v606
    %v695 = vpop.f32.mrb[0].mxu0
    %v696 = vadd.f32 %v602, %v695
    %v697 = vpop.f32.mrb[0].mxu0
    %698 = vmatprep.mubr.f32.mxu0 0.0
    %699 = vmatmul.mubr.f32.gmra.mrb[0].mxu0 %v609
    %v700 = vpop.f32.mrb[0].mxu0
    %v701 = vadd.f32 %v602, %v700
    %v702 = vpop.f32.mrb[0].mxu0
    %703 = vmatprep.mubr.f32.mxu0 0.0
    %704 = vmatmul.mubr.f32.gmra.mrb[0].mxu0 %v612
    %v705 = vpop.f32.mrb[0].mxu0
    %v706 = vadd.f32 %v602, %v705
    %v707 = vpop.f32.mrb[0].mxu0
    %708 = vmatprep.mubr.f32.mxu0 0.0
    %709 = vmatmul.mubr.f32.gmra.mrb[0].mxu0 %v615
    %v710 = vpop.f32.mrb[0].mxu0
    %v711 = vadd.f32 %v602, %v710
    %v712 = vpop.f32.mrb[0].mxu0
    %713 = vmatprep.mubr.f32.mxu0 0.0
    %714 = vmatmul.mubr.f32.gmra.mrb[0].mxu0 %v618
    %v715 = vpop.f32.mrb[0].mxu0
    %v716 = vadd.f32 %v602, %v715
    %v717 = vpop.f32.mrb[0].mxu0
    %718 = vmatprep.mubr.f32.mxu0 0.0
    %719 = vmatmul.mubr.f32.gmra.mrb[0].mxu0 %v621
    %v720 = vpop.f32.mrb[0].mxu0
    %v721 = vadd.f32 %v602, %v720
    %v722 = vpop.f32.mrb[0].mxu0
    %723 = vmatprep.mubr.f32.mxu0 0.0
    %724 = vmatmul.mubr.f32.gmra.mrb[0].mxu0 %v624
    %v725 = vpop.f32.mrb[0].mxu0
    %v726 = vadd.f32 %v602, %v725
    %v727 = vpop.f32.mrb[0].mxu0
    %728 = vmatprep.mubr.f32.mxu0 0.0
    %729 = vmatmul.mubr.f32.gmra.mrb[0].mxu0 %v627
    %v730 = vpop.f32.mrb[0].mxu0
    %v731 = vadd.f32 %v602, %v730
    %v732 = vpop.f32.mrb[0].mxu0
    %733 = vdwg.mxu0
    %v734 = vadd.f32 %v696, %v338
    %v735 = vadd.f32 %v701, %v339
    %v736 = vadd.f32 %v706, %v340
    %v737 = vadd.f32 %v711, %v341
    %v738 = vadd.f32 %v716, %v370
    %v739 = vadd.f32 %v721, %v371
    %v740 = vadd.f32 %v726, %v372
    %v741 = vadd.f32 %v731, %v373
    %v742 = vld [vmem:[#allocation13] sm:$0x1]
    %v743 = vld [vmem:[#allocation14] sm:$0x1]
    %v744 = vsel %vm240, %v734, 0.0
    %745 = vadd.xlane.f32.xlu0 %v744
    %v746 = vpop.xlane.xlu0 %745
    %v747 = vsel %vm240, %v735, 0.0
    %748 = vadd.xlane.f32.xlu0 %v747
    %v749 = vpop.xlane.xlu0 %748
    %v750 = vsel %vm240, %v736, 0.0
    %751 = vadd.xlane.f32.xlu0 %v750
    %v752 = vpop.xlane.xlu0 %751
    %v753 = vsel %vm240, %v737, 0.0
    %754 = vadd.xlane.f32.xlu0 %v753
    %v755 = vpop.xlane.xlu0 %754
    %v756 = vsel %vm240, %v738, 0.0
    %757 = vadd.xlane.f32.xlu0 %v756
    %v758 = vpop.xlane.xlu0 %757
    %v759 = vsel %vm240, %v739, 0.0
    %760 = vadd.xlane.f32.xlu0 %v759
    %v761 = vpop.xlane.xlu0 %760
    %v762 = vsel %vm240, %v740, 0.0
    %763 = vadd.xlane.f32.xlu0 %v762
    %v764 = vpop.xlane.xlu0 %763
    %v765 = vsel %vm240, %v741, 0.0
    %766 = vadd.xlane.f32.xlu0 %v765
    %v767 = vpop.xlane.xlu0 %766
    %v768 = vrcp.pop 8.0
    %v769 = vmul.f32 %v746, %v768
    %v770 = vmul.f32 %v749, %v768
    %v771 = vmul.f32 %v752, %v768
    %v772 = vmul.f32 %v755, %v768
    %v773 = vmul.f32 %v758, %v768
    %v774 = vmul.f32 %v761, %v768
    %v775 = vmul.f32 %v764, %v768
    %v776 = vmul.f32 %v767, %v768
    %v777 = vsub.f32 %v734, %v769
    %v778 = vsub.f32 %v735, %v770
    %v779 = vsub.f32 %v736, %v771
    %v780 = vsub.f32 %v737, %v772
    %v781 = vsub.f32 %v738, %v773
    %v782 = vsub.f32 %v739, %v774
    %v783 = vsub.f32 %v740, %v775
    %v784 = vsub.f32 %v741, %v776
    %v785 = vmul.f32 %v777, %v777
    %v786 = vmul.f32 %v778, %v778
    %v787 = vmul.f32 %v779, %v779
    %v788 = vmul.f32 %v780, %v780
    %v789 = vmul.f32 %v781, %v781
    %v790 = vmul.f32 %v782, %v782
    %v791 = vmul.f32 %v783, %v783
    %v792 = vmul.f32 %v784, %v784
    %v793 = vsel %vm240, %v785, 0.0
    %794 = vadd.xlane.f32.xlu0 %v793
    %v795 = vpop.xlane.xlu0 %794
    %v796 = vsel %vm240, %v786, 0.0
    %797 = vadd.xlane.f32.xlu0 %v796
    %v798 = vpop.xlane.xlu0 %797
    %v799 = vsel %vm240, %v787, 0.0
    %800 = vadd.xlane.f32.xlu0 %v799
    %v801 = vpop.xlane.xlu0 %800
    %v802 = vsel %vm240, %v788, 0.0
    %803 = vadd.xlane.f32.xlu0 %v802
    %v804 = vpop.xlane.xlu0 %803
    %v805 = vsel %vm240, %v789, 0.0
    %806 = vadd.xlane.f32.xlu0 %v805
    %v807 = vpop.xlane.xlu0 %806
    %v808 = vsel %vm240, %v790, 0.0
    %809 = vadd.xlane.f32.xlu0 %v808
    %v810 = vpop.xlane.xlu0 %809
    %v811 = vsel %vm240, %v791, 0.0
    %812 = vadd.xlane.f32.xlu0 %v811
    %v813 = vpop.xlane.xlu0 %812
    %v814 = vsel %vm240, %v792, 0.0
    %815 = vadd.xlane.f32.xlu0 %v814
    %v816 = vpop.xlane.xlu0 %815
    %v817 = vmul.f32 %v795, %v768
    %v818 = vmul.f32 %v798, %v768
    %v819 = vmul.f32 %v801, %v768
    %v820 = vmul.f32 %v804, %v768
    %v821 = vmul.f32 %v807, %v768
    %v822 = vmul.f32 %v810, %v768
    %v823 = vmul.f32 %v813, %v768
    %v824 = vmul.f32 %v816, %v768
    %v825 = vadd.f32 %v817, 1e-05
    %v826 = vadd.f32 %v818, 1e-05
    %v827 = vadd.f32 %v819, 1e-05
    %v828 = vadd.f32 %v820, 1e-05
    %v829 = vadd.f32 %v821, 1e-05
    %v830 = vadd.f32 %v822, 1e-05
    %v831 = vadd.f32 %v823, 1e-05
    %v832 = vadd.f32 %v824, 1e-05
    %v833 = vrsqrt.pop %v825
    %v834 = vrsqrt.pop %v826
    %v835 = vrsqrt.pop %v827
    %v836 = vrsqrt.pop %v828
    %v837 = vrsqrt.pop %v829
    %v838 = vrsqrt.pop %v830
    %v839 = vrsqrt.pop %v831
    %v840 = vrsqrt.pop %v832
    %v841 = vmul.f32 %v777, %v833
    %v842 = vmul.f32 %v778, %v834
    %v843 = vmul.f32 %v779, %v835
    %v844 = vmul.f32 %v780, %v836
    %v845 = vmul.f32 %v781, %v837
    %v846 = vmul.f32 %v782, %v838
    %v847 = vmul.f32 %v783, %v839
    %v848 = vmul.f32 %v784, %v840
    %v850 = vlaneseq
    %v851 = vshrl.u32 %v850, 7
    %v852 = vsub.s32 0, %v851
    %v853 = vrot.slane %v742, %v852
    %v855 = vmul.f32 %v841, %v853
    %v856 = vmul.f32 %v842, %v853
    %v857 = vmul.f32 %v843, %v853
    %v858 = vmul.f32 %v844, %v853
    %v859 = vmul.f32 %v845, %v853
    %v860 = vmul.f32 %v846, %v853
    %v861 = vmul.f32 %v847, %v853
    %v862 = vmul.f32 %v848, %v853
    %v864 = vlaneseq
    %v865 = vshrl.u32 %v864, 7
    %v866 = vsub.s32 0, %v865
    %v867 = vrot.slane %v743, %v866
    %v869 = vadd.f32 %v855, %v867
    %v870 = vadd.f32 %v856, %v867
    %v871 = vadd.f32 %v857, %v867
    %v872 = vadd.f32 %v858, %v867
    %v873 = vadd.f32 %v859, %v867
    %v874 = vadd.f32 %v860, %v867
    %v875 = vadd.f32 %v861, %v867
    %v876 = vadd.f32 %v862, %v867
    %v877 = vld [vmem:[%s15] sm:$0xff]
    %v878 = vld [vmem:[%s15 + $0x8] sm:$0xff]
    %v879 = vld [vmem:[%s15 + $0x10] sm:$0xff]
    %v880 = vld [vmem:[%s15 + $0x18] sm:$0xff]
    %v881 = vld [vmem:[#allocation10] sm:$0x1]
    %v883 = vlaneseq
    %v884 = vshrl.u32 %v883, 7
    %v885 = vsub.s32 0, %v884
    %v886 = vrot.slane %v881, %v885
    %vm888 = vcmask 261120
    %v890 = vsel %vm888, %v314, 0
    %v893 = vsel %vm888, %v319, 0
    %895 = vmatprep.subr.mxu0 0.0
    %896 = vmatpush1.msra.mxu0 %v877
    %897 = vmatprep.subr.mxu0 0.0
    %898 = vmatpush1.msra.mxu0 %v878
    %899 = vmatprep.subr.mxu0 0.0
    %900 = vmatpush1.msra.mxu0 %v879
    %901 = vmatprep.subr.mxu0 0.0
    %902 = vmatpush1.msra.mxu0 %v880
    %903 = vmatprep.subr.mxu0 0.0
    %904 = vmatpush1.msra.mxu0 0.0
    %905 = vmatprep.subr.mxu0 0.0
    %906 = vmatpush1.msra.mxu0 0.0
    %907 = vmatprep.subr.mxu0 0.0
    %908 = vmatpush1.msra.mxu0 0.0
    %909 = vmatprep.subr.mxu0 0.0
    %910 = vmatpush1.msra.mxu0 0.0
    %911 = vmatprep.subr.mxu0 0.0
    %912 = vmatpush1.msra.mxu0 0.0
    %913 = vmatprep.subr.mxu0 0.0
    %914 = vmatpush1.msra.mxu0 0.0
    %915 = vmatprep.subr.mxu0 0.0
    %916 = vmatpush1.msra.mxu0 0.0
    %917 = vmatprep.subr.mxu0 0.0
    %918 = vmatpush1.msra.mxu0 0.0
    %919 = vmatprep.subr.mxu0 0.0
    %920 = vmatpush1.msra.mxu0 0.0
    %921 = vmatprep.subr.mxu0 0.0
    %922 = vmatpush1.msra.mxu0 0.0
    %923 = vmatprep.subr.mxu0 0.0
    %924 = vmatpush1.msra.mxu0 0.0
    %925 = vmatprep.subr.mxu0 0.0
    %926 = vmatpush1.msra.mxu0 0.0
    %927 = vmatprep.subr.mxu0 0.0
    %928 = vmatpush1.msra.mxu0 0.0
    %929 = vmatprep.subr.mxu0 0.0
    %930 = vmatpush1.msra.mxu0 0.0
    %931 = vmatprep.subr.mxu0 0.0
    %932 = vmatpush1.msra.mxu0 0.0
    %933 = vmatprep.subr.mxu0 0.0
    %934 = vmatpush1.msra.mxu0 0.0
    %935 = vmatprep.subr.mxu0 0.0
    %936 = vmatpush1.msra.mxu0 0.0
    %937 = vmatprep.subr.mxu0 0.0
    %938 = vmatpush1.msra.mxu0 0.0
    %939 = vmatprep.subr.mxu0 0.0
    %940 = vmatpush1.msra.mxu0 0.0
    %941 = vmatprep.subr.mxu0 0.0
    %942 = vmatpush1.msra.mxu0 0.0
    %943 = vmatprep.subr.mxu0 0.0
    %944 = vmatpush1.msra.mxu0 0.0
    %945 = vmatprep.subr.mxu0 0.0
    %946 = vmatpush1.msra.mxu0 0.0
    %947 = vmatprep.subr.mxu0 0.0
    %948 = vmatpush1.msra.mxu0 0.0
    %949 = vmatprep.subr.mxu0 0.0
    %950 = vmatpush1.msra.mxu0 0.0
    %951 = vmatprep.subr.mxu0 0.0
    %952 = vmatpush1.msra.mxu0 0.0
    %953 = vmatprep.subr.mxu0 0.0
    %954 = vmatpush1.msra.mxu0 0.0
    %955 = vmatprep.subr.mxu0 0.0
    %956 = vmatpush1.msra.mxu0 0.0
    %957 = vmatprep.subr.mxu0 0.0
    %958 = vmatpush1.msra.mxu0 0.0
    %959 = vmatprep.mubr.f32.mxu0 0.0
    %960 = vmatmul.mubr.f32.gmra.mrb[0].mxu0 %v890
    %v961 = vpop.f32.mrb[0].mxu0
    %v962 = vadd.f32 %v886, %v961
    %v963 = vpop.f32.mrb[0].mxu0
    %964 = vmatprep.mubr.f32.mxu0 0.0
    %965 = vmatmul.mubr.f32.gmra.mrb[0].mxu0 %v893
    %v966 = vpop.f32.mrb[0].mxu0
    %v967 = vadd.f32 %v886, %v966
    %v968 = vpop.f32.mrb[0].mxu0
    %969 = vdwg.mxu0
    %v970 = vmul.f32 %v962, 0.5
    %v971 = vmul.f32 %v967, 0.5
    %v972 = vmul.f32 %v962, 0.044715
    %v973 = vmul.f32 %v967, 0.044715
    %v974 = vmul.f32 %v972, %v962
    %v975 = vmul.f32 %v973, %v967
    %v976 = vmul.f32 %v974, %v962
    %v977 = vmul.f32 %v975, %v967
    %v978 = vadd.f32 %v962, %v976
    %v979 = vadd.f32 %v967, %v977
    %v980 = vmul.f32 %v978, 0.7978846
    %v981 = vmul.f32 %v979, 0.7978846
    %v982 = vtanh.pop %v980
    %v983 = vtanh.pop %v981
    %v984 = vadd.f32 %v982, 1.0
    %v985 = vadd.f32 %v983, 1.0
    %v986 = vmul.f32 %v970, %v984
    %v987 = vmul.f32 %v971, %v985
    %v988 = vld [vmem:[%s19] sm:$0xff]
    %v989 = vld [vmem:[%s19 + $0x8] sm:$0xff]
    %v990 = vld [vmem:[%s19 + $0x10] sm:$0xff]
    %v991 = vld [vmem:[%s19 + $0x18] sm:$0xff]
    %v992 = vld [vmem:[%s19 + $0x20] sm:$0xff]
    %v993 = vld [vmem:[%s19 + $0x28] sm:$0xff]
    %v994 = vld [vmem:[%s19 + $0x30] sm:$0xff]
    %v995 = vld [vmem:[%s19 + $0x38] sm:$0xff]
    %v996 = vld [vmem:[#allocation11] sm:$0x1]
    %v998 = vlaneseq
    %v999 = vshrl.u32 %v998, 7
    %v1000 = vsub.s32 0, %v999
    %v1001 = vrot.slane %v996, %v1000
    %vm1003 = vcmask 523264
    %v1005 = vsel %vm1003, %v986, 0
    %v1008 = vsel %vm1003, %v987, 0
    %1010 = vmatprep.subr.mxu0 0.0
    %1011 = vmatpush1.msra.mxu0 %v988
    %1012 = vmatprep.subr.mxu0 0.0
    %1013 = vmatpush1.msra.mxu0 %v989
    %1014 = vmatprep.subr.mxu0 0.0
    %1015 = vmatpush1.msra.mxu0 %v990
    %1016 = vmatprep.subr.mxu0 0.0
    %1017 = vmatpush1.msra.mxu0 %v991
    %1018 = vmatprep.subr.mxu0 0.0
    %1019 = vmatpush1.msra.mxu0 %v992
    %1020 = vmatprep.subr.mxu0 0.0
    %1021 = vmatpush1.msra.mxu0 %v993
    %1022 = vmatprep.subr.mxu0 0.0
    %1023 = vmatpush1.msra.mxu0 %v994
    %1024 = vmatprep.subr.mxu0 0.0
    %1025 = vmatpush1.msra.mxu0 %v995
    %1026 = vmatprep.subr.mxu0 0.0
    %1027 = vmatpush1.msra.mxu0 0.0
    %1028 = vmatprep.subr.mxu0 0.0
    %1029 = vmatpush1.msra.mxu0 0.0
    %1030 = vmatprep.subr.mxu0 0.0
    %1031 = vmatpush1.msra.mxu0 0.0
    %1032 = vmatprep.subr.mxu0 0.0
    %1033 = vmatpush1.msra.mxu0 0.0
    %1034 = vmatprep.subr.mxu0 0.0
    %1035 = vmatpush1.msra.mxu0 0.0
    %1036 = vmatprep.subr.mxu0 0.0
    %1037 = vmatpush1.msra.mxu0 0.0
    %1038 = vmatprep.subr.mxu0 0.0
    %1039 = vmatpush1.msra.mxu0 0.0
    %1040 = vmatprep.subr.mxu0 0.0
    %1041 = vmatpush1.msra.mxu0 0.0
    %1042 = vmatprep.subr.mxu0 0.0
    %1043 = vmatpush1.msra.mxu0 0.0
    %1044 = vmatprep.subr.mxu0 0.0
    %1045 = vmatpush1.msra.mxu0 0.0
    %1046 = vmatprep.subr.mxu0 0.0
    %1047 = vmatpush1.msra.mxu0 0.0
    %1048 = vmatprep.subr.mxu0 0.0
    %1049 = vmatpush1.msra.mxu0 0.0
    %1050 = vmatprep.subr.mxu0 0.0
    %1051 = vmatpush1.msra.mxu0 0.0
    %1052 = vmatprep.subr.mxu0 0.0
    %1053 = vmatpush1.msra.mxu0 0.0
    %1054 = vmatprep.subr.mxu0 0.0
    %1055 = vmatpush1.msra.mxu0 0.0
    %1056 = vmatprep.subr.mxu0 0.0
    %1057 = vmatpush1.msra.mxu0 0.0
    %1058 = vmatprep.subr.mxu0 0.0
    %1059 = vmatpush1.msra.mxu0 0.0
    %1060 = vmatprep.subr.mxu0 0.0
    %1061 = vmatpush1.msra.mxu0 0.0
    %1062 = vmatprep.subr.mxu0 0.0
    %1063 = vmatpush1.msra.mxu0 0.0
    %1064 = vmatprep.subr.mxu0 0.0
    %1065 = vmatpush1.msra.mxu0 0.0
    %1066 = vmatprep.subr.mxu0 0.0
    %1067 = vmatpush1.msra.mxu0 0.0
    %1068 = vmatprep.subr.mxu0 0.0
    %1069 = vmatpush1.msra.mxu0 0.0
    %1070 = vmatprep.subr.mxu0 0.0
    %1071 = vmatpush1.msra.mxu0 0.0
    %1072 = vmatprep.subr.mxu0 0.0
    %1073 = vmatpush1.msra.mxu0 0.0
    %1074 = vmatprep.mubr.f32.mxu0 0.0
    %1075 = vmatmul.mubr.f32.gmra.mrb[0].mxu0 %v1005
    %v1076 = vpop.f32.mrb[0].mxu0
    %v1077 = vadd.f32 %v1001, %v1076
    %v1078 = vpop.f32.mrb[0].mxu0
    %1079 = vmatprep.mubr.f32.mxu0 0.0
    %1080 = vmatmul.mubr.f32.gmra.mrb[0].mxu0 %v1008
    %v1081 = vpop.f32.mrb[0].mxu0
    %v1082 = vadd.f32 %v1001, %v1081
    %v1083 = vpop.f32.mrb[0].mxu0
    %1084 = vdwg.mxu0
    %v1085 = vadd.f32 %v1077, %v314
    %v1086 = vadd.f32 %v1082, %v319
    %v1087 = vld [vmem:[%s27] sm:$0x1]
    %v1088 = vld [vmem:[%s29] sm:$0x1]
    %v1089 = vsel %vm888, %v1085, 0.0
    %1090 = vadd.xlane.f32.xlu0 %v1089
    %v1091 = vpop.xlane.xlu0 %1090
    %v1092 = vsel %vm888, %v1086, 0.0
    %1093 = vadd.xlane.f32.xlu0 %v1092
    %v1094 = vpop.xlane.xlu0 %1093
    %v1095 = vrcp.pop 32.0
    %v1096 = vmul.f32 %v1091, %v1095
    %v1097 = vmul.f32 %v1094, %v1095
    %v1098 = vsub.f32 %v1085, %v1096
    %v1099 = vsub.f32 %v1086, %v1097
    %v1100 = vmul.f32 %v1098, %v1098
    %v1101 = vmul.f32 %v1099, %v1099
    %v1102 = vsel %vm888, %v1100, 0.0
    %1103 = vadd.xlane.f32.xlu0 %v1102
    %v1104 = vpop.xlane.xlu0 %1103
    %v1105 = vsel %vm888, %v1101, 0.0
    %1106 = vadd.xlane.f32.xlu0 %v1105
    %v1107 = vpop.xlane.xlu0 %1106
    %v1108 = vmul.f32 %v1104, %v1095
    %v1109 = vmul.f32 %v1107, %v1095
    %v1110 = vadd.f32 %v1108, 1e-05
    %v1111 = vadd.f32 %v1109, 1e-05
    %v1112 = vrsqrt.pop %v1110
    %v1113 = vrsqrt.pop %v1111
    %v1114 = vmul.f32 %v1098, %v1112
    %v1115 = vmul.f32 %v1099, %v1113
    %v1117 = vlaneseq
    %v1118 = vshrl.u32 %v1117, 7
    %v1119 = vsub.s32 0, %v1118
    %v1120 = vrot.slane %v1087, %v1119
    %v1122 = vmul.f32 %v1114, %v1120
    %v1123 = vmul.f32 %v1115, %v1120
    %v1125 = vlaneseq
    %v1126 = vshrl.u32 %v1125, 7
    %v1127 = vsub.s32 0, %v1126
    %v1128 = vrot.slane %v1088, %v1127
    %v1130 = vadd.f32 %v1122, %v1128
    %v1131 = vadd.f32 %v1123, %v1128
    %v1132 = vld [vmem:[%s43] sm:$0xff]
    %v1133 = vld [vmem:[%s43 + $0x8] sm:$0xff]
    %v1134 = vld [vmem:[%s43 + $0x10] sm:$0xff]
    %v1135 = vld [vmem:[%s43 + $0x18] sm:$0xff]
    %v1136 = vld [vmem:[%s45] sm:$0x1]
    %v1138 = vlaneseq
    %v1139 = vshrl.u32 %v1138, 7
    %v1140 = vsub.s32 0, %v1139
    %v1141 = vrot.slane %v1136, %v1140
    %v1144 = vsel %vm888, %v1130, 0
    %v1147 = vsel %vm888, %v1131, 0
    %1149 = vmatprep.subr.mxu0 0.0
    %1150 = vmatpush1.msra.mxu0 %v1132
    %1151 = vmatprep.subr.mxu0 0.0
    %1152 = vmatpush1.msra.mxu0 %v1133
    %1153 = vmatprep.subr.mxu0 0.0
    %1154 = vmatpush1.msra.mxu0 %v1134
    %1155 = vmatprep.subr.mxu0 0.0
    %1156 = vmatpush1.msra.mxu0 %v1135
    %1157 = vmatprep.subr.mxu0 0.0
    %1158 = vmatpush1.msra.mxu0 0.0
    %1159 = vmatprep.subr.mxu0 0.0
    %1160 = vmatpush1.msra.mxu0 0.0
    %1161 = vmatprep.subr.mxu0 0.0
    %1162 = vmatpush1.msra.mxu0 0.0
    %1163 = vmatprep.subr.mxu0 0.0
    %1164 = vmatpush1.msra.mxu0 0.0
    %1165 = vmatprep.subr.mxu0 0.0
    %1166 = vmatpush1.msra.mxu0 0.0
    %1167 = vmatprep.subr.mxu0 0.0
    %1168 = vmatpush1.msra.mxu0 0.0
    %1169 = vmatprep.subr.mxu0 0.0
    %1170 = vmatpush1.msra.mxu0 0.0
    %1171 = vmatprep.subr.mxu0 0.0
    %1172 = vmatpush1.msra.mxu0 0.0
    %1173 = vmatprep.subr.mxu0 0.0
    %1174 = vmatpush1.msra.mxu0 0.0
    %1175 = vmatprep.subr.mxu0 0.0
    %1176 = vmatpush1.msra.mxu0 0.0
    %1177 = vmatprep.subr.mxu0 0.0
    %1178 = vmatpush1.msra.mxu0 0.0
    %1179 = vmatprep.subr.mxu0 0.0
    %1180 = vmatpush1.msra.mxu0 0.0
    %1181 = vmatprep.subr.mxu0 0.0
    %1182 = vmatpush1.msra.mxu0 0.0
    %1183 = vmatprep.subr.mxu0 0.0
    %1184 = vmatpush1.msra.mxu0 0.0
    %1185 = vmatprep.subr.mxu0 0.0
    %1186 = vmatpush1.msra.mxu0 0.0
    %1187 = vmatprep.subr.mxu0 0.0
    %1188 = vmatpush1.msra.mxu0 0.0
    %1189 = vmatprep.subr.mxu0 0.0
    %1190 = vmatpush1.msra.mxu0 0.0
    %1191 = vmatprep.subr.mxu0 0.0
    %1192 = vmatpush1.msra.mxu0 0.0
    %1193 = vmatprep.subr.mxu0 0.0
    %1194 = vmatpush1.msra.mxu0 0.0
    %1195 = vmatprep.subr.mxu0 0.0
    %1196 = vmatpush1.msra.mxu0 0.0
    %1197 = vmatprep.subr.mxu0 0.0
    %1198 = vmatpush1.msra.mxu0 0.0
    %1199 = vmatprep.subr.mxu0 0.0
    %1200 = vmatpush1.msra.mxu0 0.0
    %1201 = vmatprep.subr.mxu0 0.0
    %1202 = vmatpush1.msra.mxu0 0.0
    %1203 = vmatprep.subr.mxu0 0.0
    %1204 = vmatpush1.msra.mxu0 0.0
    %1205 = vmatprep.subr.mxu0 0.0
    %1206 = vmatpush1.msra.mxu0 0.0
    %1207 = vmatprep.subr.mxu0 0.0
    %1208 = vmatpush1.msra.mxu0 0.0
    %1209 = vmatprep.subr.mxu0 0.0
    %1210 = vmatpush1.msra.mxu0 0.0
    %1211 = vmatprep.subr.mxu0 0.0
    %1212 = vmatpush1.msra.mxu0 0.0
    %1213 = vmatprep.mubr.f32.mxu0 0.0
    %1214 = vmatmul.mubr.f32.gmra.mrb[0].mxu0 %v1144
    %v1215 = vpop.f32.mrb[0].mxu0
    %v1216 = vadd.f32 %v1141, %v1215
    %v1217 = vpop.f32.mrb[0].mxu0
    %1218 = vmatprep.mubr.f32.mxu0 0.0
    %1219 = vmatmul.mubr.f32.gmra.mrb[0].mxu0 %v1147
    %v1220 = vpop.f32.mrb[0].mxu0
    %v1221 = vadd.f32 %v1141, %v1220
    %v1222 = vpop.f32.mrb[0].mxu0
    %1223 = vdwg.mxu0
    %v1224 = vxor.u32 %v1216, 2147483648
    %v1225 = vxor.u32 %v1221, 2147483648
    %v1226 = vmul.f32 %v1224, 1.442695
    %v1227 = vpow.pop %v1226
    %v1228 = vmul.f32 %v1225, 1.442695
    %v1229 = vpow.pop %v1228
    %v1230 = vadd.f32 %v1227, 1.0
    %v1231 = vadd.f32 %v1229, 1.0
    %v1232 = vrcp.pop %v1230
    %v1233 = vmul.f32 1.0, %v1232
    %v1234 = vrcp.pop %v1231
    %v1235 = vmul.f32 1.0, %v1234
    %v1236 = vmul.f32 %v1233, %v1130
    %v1237 = vmul.f32 %v1235, %v1131
    %1238 = vxpose.xlu0.b32.start [1/16] %v1236, 128
    %1239 = vxpose.xlu0.b32.cont [2/16] 0.0, 128
    %1240 = vxpose.xlu0.b32.cont [3/16] 0.0, 128
    %1241 = vxpose.xlu0.b32.cont [4/16] 0.0, 128
    %1242 = vxpose.xlu0.b32.cont [5/16] 0.0, 128
    %1243 = vxpose.xlu0.b32.cont [6/16] 0.0, 128
    %1244 = vxpose.xlu0.b32.cont [7/16] 0.0, 128
    %1245 = vxpose.xlu0.b32.cont [8/16] 0.0, 128
    %1246 = vxpose.xlu0.b32.cont [9/16] 0.0, 128
    %1247 = vxpose.xlu0.b32.cont [10/16] 0.0, 128
    %1248 = vxpose.xlu0.b32.cont [11/16] 0.0, 128
    %1249 = vxpose.xlu0.b32.cont [12/16] 0.0, 128
    %1250 = vxpose.xlu0.b32.cont [13/16] 0.0, 128
    %1251 = vxpose.xlu0.b32.cont [14/16] 0.0, 128
    %1252 = vxpose.xlu0.b32.cont [15/16] 0.0, 128
    %1253 = vxpose.xlu0.b32.end [16/16] 0.0, 128
    %v1254 = vpop.trf.xlu0
    %v1255 = vpop.trf.xlu0
    %v1256 = vpop.trf.xlu0
    %v1257 = vpop.trf.xlu0
    %v1258 = vpop.trf.xlu0
    %v1259 = vpop.trf.xlu0
    %v1260 = vpop.trf.xlu0
    %v1261 = vpop.trf.xlu0
    %v1262 = vpop.trf.xlu0
    %v1263 = vpop.trf.xlu0
    %v1264 = vpop.trf.xlu0
    %v1265 = vpop.trf.xlu0
    %v1266 = vpop.trf.xlu0
    %v1267 = vpop.trf.xlu0
    %v1268 = vpop.trf.xlu0
    %v1269 = vpop.trf.xlu0
    %1270 = vxpose.xlu0.b32.start [1/16] %v1237, 128
    %1271 = vxpose.xlu0.b32.cont [2/16] 0.0, 128
    %1272 = vxpose.xlu0.b32.cont [3/16] 0.0, 128
    %1273 = vxpose.xlu0.b32.cont [4/16] 0.0, 128
    %1274 = vxpose.xlu0.b32.cont [5/16] 0.0, 128
    %1275 = vxpose.xlu0.b32.cont [6/16] 0.0, 128
    %1276 = vxpose.xlu0.b32.cont [7/16] 0.0, 128
    %1277 = vxpose.xlu0.b32.cont [8/16] 0.0, 128
    %1278 = vxpose.xlu0.b32.cont [9/16] 0.0, 128
    %1279 = vxpose.xlu0.b32.cont [10/16] 0.0, 128
    %1280 = vxpose.xlu0.b32.cont [11/16] 0.0, 128
    %1281 = vxpose.xlu0.b32.cont [12/16] 0.0, 128
    %1282 = vxpose.xlu0.b32.cont [13/16] 0.0, 128
    %1283 = vxpose.xlu0.b32.cont [14/16] 0.0, 128
    %1284 = vxpose.xlu0.b32.cont [15/16] 0.0, 128
    %1285 = vxpose.xlu0.b32.end [16/16] 0.0, 128
    %v1286 = vpop.trf.xlu0
    %v1287 = vpop.trf.xlu0
    %v1288 = vpop.trf.xlu0
    %v1289 = vpop.trf.xlu0
    %v1290 = vpop.trf.xlu0
    %v1291 = vpop.trf.xlu0
    %v1292 = vpop.trf.xlu0
    %v1293 = vpop.trf.xlu0
    %v1294 = vpop.trf.xlu0
    %v1295 = vpop.trf.xlu0
    %v1296 = vpop.trf.xlu0
    %v1297 = vpop.trf.xlu0
    %v1298 = vpop.trf.xlu0
    %v1299 = vpop.trf.xlu0
    %v1300 = vpop.trf.xlu0
    %v1301 = vpop.trf.xlu0
    %v1302 = vadd.f32 %v869, %v1254
    %v1303 = vadd.f32 %v870, %v1255
    %v1304 = vadd.f32 %v871, %v1256
    %v1305 = vadd.f32 %v872, %v1257
    %v1306 = vadd.f32 %v873, %v1286
    %v1307 = vadd.f32 %v874, %v1287
    %v1308 = vadd.f32 %v875, %v1288
    %v1309 = vadd.f32 %v876, %v1289
    %v1310 = vld [vmem:[%s31] sm:$0x1]
    %v1311 = vld [vmem:[%s33] sm:$0x1]
    %v1312 = vsel %vm240, %v1302, 0.0
    %1313 = vadd.xlane.f32.xlu0 %v1312
    %v1314 = vpop.xlane.xlu0 %1313
    %v1315 = vsel %vm240, %v1303, 0.0
    %1316 = vadd.xlane.f32.xlu0 %v1315
    %v1317 = vpop.xlane.xlu0 %1316
    %v1318 = vsel %vm240, %v1304, 0.0
    %1319 = vadd.xlane.f32.xlu0 %v1318
    %v1320 = vpop.xlane.xlu0 %1319
    %v1321 = vsel %vm240, %v1305, 0.0
    %1322 = vadd.xlane.f32.xlu0 %v1321
    %v1323 = vpop.xlane.xlu0 %1322
    %v1324 = vsel %vm240, %v1306, 0.0
    %1325 = vadd.xlane.f32.xlu0 %v1324
    %v1326 = vpop.xlane.xlu0 %1325
    %v1327 = vsel %vm240, %v1307, 0.0
    %1328 = vadd.xlane.f32.xlu0 %v1327
    %v1329 = vpop.xlane.xlu0 %1328
    %v1330 = vsel %vm240, %v1308, 0.0
    %1331 = vadd.xlane.f32.xlu0 %v1330
    %v1332 = vpop.xlane.xlu0 %1331
    %v1333 = vsel %vm240, %v1309, 0.0
    %1334 = vadd.xlane.f32.xlu0 %v1333
    %v1335 = vpop.xlane.xlu0 %1334
    %v1336 = vmul.f32 %v1314, %v768
    %v1337 = vmul.f32 %v1317, %v768
    %v1338 = vmul.f32 %v1320, %v768
    %v1339 = vmul.f32 %v1323, %v768
    %v1340 = vmul.f32 %v1326, %v768
    %v1341 = vmul.f32 %v1329, %v768
    %v1342 = vmul.f32 %v1332, %v768
    %v1343 = vmul.f32 %v1335, %v768
    %v1344 = vsub.f32 %v1302, %v1336
    %v1345 = vsub.f32 %v1303, %v1337
    %v1346 = vsub.f32 %v1304, %v1338
    %v1347 = vsub.f32 %v1305, %v1339
    %v1348 = vsub.f32 %v1306, %v1340
    %v1349 = vsub.f32 %v1307, %v1341
    %v1350 = vsub.f32 %v1308, %v1342
    %v1351 = vsub.f32 %v1309, %v1343
    %v1352 = vmul.f32 %v1344, %v1344
    %v1353 = vmul.f32 %v1345, %v1345
    %v1354 = vmul.f32 %v1346, %v1346
    %v1355 = vmul.f32 %v1347, %v1347
    %v1356 = vmul.f32 %v1348, %v1348
    %v1357 = vmul.f32 %v1349, %v1349
    %v1358 = vmul.f32 %v1350, %v1350
    %v1359 = vmul.f32 %v1351, %v1351
    %v1360 = vsel %vm240, %v1352, 0.0
    %1361 = vadd.xlane.f32.xlu0 %v1360
    %v1362 = vpop.xlane.xlu0 %1361
    %v1363 = vsel %vm240, %v1353, 0.0
    %1364 = vadd.xlane.f32.xlu0 %v1363
    %v1365 = vpop.xlane.xlu0 %1364
    %v1366 = vsel %vm240, %v1354, 0.0
    %1367 = vadd.xlane.f32.xlu0 %v1366
    %v1368 = vpop.xlane.xlu0 %1367
    %v1369 = vsel %vm240, %v1355, 0.0
    %1370 = vadd.xlane.f32.xlu0 %v1369
    %v1371 = vpop.xlane.xlu0 %1370
    %v1372 = vsel %vm240, %v1356, 0.0
    %1373 = vadd.xlane.f32.xlu0 %v1372
    %v1374 = vpop.xlane.xlu0 %1373
    %v1375 = vsel %vm240, %v1357, 0.0
    %1376 = vadd.xlane.f32.xlu0 %v1375
    %v1377 = vpop.xlane.xlu0 %1376
    %v1378 = vsel %vm240, %v1358, 0.0
    %1379 = vadd.xlane.f32.xlu0 %v1378
    %v1380 = vpop.xlane.xlu0 %1379
    %v1381 = vsel %vm240, %v1359, 0.0
    %1382 = vadd.xlane.f32.xlu0 %v1381
    %v1383 = vpop.xlane.xlu0 %1382
    %v1384 = vmul.f32 %v1362, %v768
    %v1385 = vmul.f32 %v1365, %v768
    %v1386 = vmul.f32 %v1368, %v768
    %v1387 = vmul.f32 %v1371, %v768
    %v1388 = vmul.f32 %v1374, %v768
    %v1389 = vmul.f32 %v1377, %v768
    %v1390 = vmul.f32 %v1380, %v768
    %v1391 = vmul.f32 %v1383, %v768
    %v1392 = vadd.f32 %v1384, 1e-05
    %v1393 = vadd.f32 %v1385, 1e-05
    %v1394 = vadd.f32 %v1386, 1e-05
    %v1395 = vadd.f32 %v1387, 1e-05
    %v1396 = vadd.f32 %v1388, 1e-05
    %v1397 = vadd.f32 %v1389, 1e-05
    %v1398 = vadd.f32 %v1390, 1e-05
    %v1399 = vadd.f32 %v1391, 1e-05
    %v1400 = vrsqrt.pop %v1392
    %v1401 = vrsqrt.pop %v1393
    %v1402 = vrsqrt.pop %v1394
    %v1403 = vrsqrt.pop %v1395
    %v1404 = vrsqrt.pop %v1396
    %v1405 = vrsqrt.pop %v1397
    %v1406 = vrsqrt.pop %v1398
    %v1407 = vrsqrt.pop %v1399
    %v1408 = vmul.f32 %v1344, %v1400
    %v1409 = vmul.f32 %v1345, %v1401
    %v1410 = vmul.f32 %v1346, %v1402
    %v1411 = vmul.f32 %v1347, %v1403
    %v1412 = vmul.f32 %v1348, %v1404
    %v1413 = vmul.f32 %v1349, %v1405
    %v1414 = vmul.f32 %v1350, %v1406
    %v1415 = vmul.f32 %v1351, %v1407
    %v1417 = vlaneseq
    %v1418 = vshrl.u32 %v1417, 7
    %v1419 = vsub.s32 0, %v1418
    %v1420 = vrot.slane %v1310, %v1419
    %v1422 = vmul.f32 %v1408, %v1420
    %v1423 = vmul.f32 %v1409, %v1420
    %v1424 = vmul.f32 %v1410, %v1420
    %v1425 = vmul.f32 %v1411, %v1420
    %v1426 = vmul.f32 %v1412, %v1420
    %v1427 = vmul.f32 %v1413, %v1420
    %v1428 = vmul.f32 %v1414, %v1420
    %v1429 = vmul.f32 %v1415, %v1420
    %v1431 = vlaneseq
    %v1432 = vshrl.u32 %v1431, 7
    %v1433 = vsub.s32 0, %v1432
    %v1434 = vrot.slane %v1311, %v1433
    %v1436 = vadd.f32 %v1422, %v1434
    %v1437 = vadd.f32 %v1423, %v1434
    %v1438 = vadd.f32 %v1424, %v1434
    %v1439 = vadd.f32 %v1425, %v1434
    %v1440 = vadd.f32 %v1426, %v1434
    %v1441 = vadd.f32 %v1427, %v1434
    %v1442 = vadd.f32 %v1428, %v1434
    %v1443 = vadd.f32 %v1429, %v1434
    %v1444 = vld [vmem:[%s39] sm:$0xff]
    %v1445 = vld [vmem:[%s41] sm:$0x1]
    %v1447 = vlaneseq
    %v1448 = vshrl.u32 %v1447, 7
    %v1449 = vsub.s32 0, %v1448
    %v1450 = vrot.slane %v1445, %v1449
    %v1453 = vsel %vm240, %v1436, 0
    %v1456 = vsel %vm240, %v1437, 0
    %v1459 = vsel %vm240, %v1438, 0
    %v1462 = vsel %vm240, %v1439, 0
    %v1465 = vsel %vm240, %v1440, 0
    %v1468 = vsel %vm240, %v1441, 0
    %v1471 = vsel %vm240, %v1442, 0
    %v1474 = vsel %vm240, %v1443, 0
    %1476 = vmatprep.subr.mxu0 0.0
    %1477 = vmatpush1.msra.mxu0 %v1444
    %1478 = vmatprep.subr.mxu0 0.0
    %1479 = vmatpush1.msra.mxu0 0.0
    %1480 = vmatprep.subr.mxu0 0.0
    %1481 = vmatpush1.msra.mxu0 0.0
    %1482 = vmatprep.subr.mxu0 0.0
    %1483 = vmatpush1.msra.mxu0 0.0
    %1484 = vmatprep.subr.mxu0 0.0
    %1485 = vmatpush1.msra.mxu0 0.0
    %1486 = vmatprep.subr.mxu0 0.0
    %1487 = vmatpush1.msra.mxu0 0.0
    %1488 = vmatprep.subr.mxu0 0.0
    %1489 = vmatpush1.msra.mxu0 0.0
    %1490 = vmatprep.subr.mxu0 0.0
    %1491 = vmatpush1.msra.mxu0 0.0
    %1492 = vmatprep.subr.mxu0 0.0
    %1493 = vmatpush1.msra.mxu0 0.0
    %1494 = vmatprep.subr.mxu0 0.0
    %1495 = vmatpush1.msra.mxu0 0.0
    %1496 = vmatprep.subr.mxu0 0.0
    %1497 = vmatpush1.msra.mxu0 0.0
    %1498 = vmatprep.subr.mxu0 0.0
    %1499 = vmatpush1.msra.mxu0 0.0
    %1500 = vmatprep.subr.mxu0 0.0
    %1501 = vmatpush1.msra.mxu0 0.0
    %1502 = vmatprep.subr.mxu0 0.0
    %1503 = vmatpush1.msra.mxu0 0.0
    %1504 = vmatprep.subr.mxu0 0.0
    %1505 = vmatpush1.msra.mxu0 0.0
    %1506 = vmatprep.subr.mxu0 0.0
    %1507 = vmatpush1.msra.mxu0 0.0
    %1508 = vmatprep.subr.mxu0 0.0
    %1509 = vmatpush1.msra.mxu0 0.0
    %1510 = vmatprep.subr.mxu0 0.0
    %1511 = vmatpush1.msra.mxu0 0.0
    %1512 = vmatprep.subr.mxu0 0.0
    %1513 = vmatpush1.msra.mxu0 0.0
    %1514 = vmatprep.subr.mxu0 0.0
    %1515 = vmatpush1.msra.mxu0 0.0
    %1516 = vmatprep.subr.mxu0 0.0
    %1517 = vmatpush1.msra.mxu0 0.0
    %1518 = vmatprep.subr.mxu0 0.0
    %1519 = vmatpush1.msra.mxu0 0.0
    %1520 = vmatprep.subr.mxu0 0.0
    %1521 = vmatpush1.msra.mxu0 0.0
    %1522 = vmatprep.subr.mxu0 0.0
    %1523 = vmatpush1.msra.mxu0 0.0
    %1524 = vmatprep.subr.mxu0 0.0
    %1525 = vmatpush1.msra.mxu0 0.0
    %1526 = vmatprep.subr.mxu0 0.0
    %1527 = vmatpush1.msra.mxu0 0.0
    %1528 = vmatprep.subr.mxu0 0.0
    %1529 = vmatpush1.msra.mxu0 0.0
    %1530 = vmatprep.subr.mxu0 0.0
    %1531 = vmatpush1.msra.mxu0 0.0
    %1532 = vmatprep.subr.mxu0 0.0
    %1533 = vmatpush1.msra.mxu0 0.0
    %1534 = vmatprep.subr.mxu0 0.0
    %1535 = vmatpush1.msra.mxu0 0.0
    %1536 = vmatprep.subr.mxu0 0.0
    %1537 = vmatpush1.msra.mxu0 0.0
    %1538 = vmatprep.subr.mxu0 0.0
    %1539 = vmatpush1.msra.mxu0 0.0
    %1540 = vmatprep.mubr.f32.mxu0 0.0
    %1541 = vmatmul.mubr.f32.gmra.mrb[0].mxu0 %v1453
    %v1542 = vpop.f32.mrb[0].mxu0
    %v1543 = vadd.f32 %v1450, %v1542
    %v1544 = vpop.f32.mrb[0].mxu0
    %1545 = vmatprep.mubr.f32.mxu0 0.0
    %1546 = vmatmul.mubr.f32.gmra.mrb[0].mxu0 %v1456
    %v1547 = vpop.f32.mrb[0].mxu0
    %v1548 = vadd.f32 %v1450, %v1547
    %v1549 = vpop.f32.mrb[0].mxu0
    %1550 = vmatprep.mubr.f32.mxu0 0.0
    %1551 = vmatmul.mubr.f32.gmra.mrb[0].mxu0 %v1459
    %v1552 = vpop.f32.mrb[0].mxu0
    %v1553 = vadd.f32 %v1450, %v1552
    %v1554 = vpop.f32.mrb[0].mxu0
    %1555 = vmatprep.mubr.f32.mxu0 0.0
    %1556 = vmatmul.mubr.f32.gmra.mrb[0].mxu0 %v1462
    %v1557 = vpop.f32.mrb[0].mxu0
    %v1558 = vadd.f32 %v1450, %v1557
    %v1559 = vpop.f32.mrb[0].mxu0
    %1560 = vmatprep.mubr.f32.mxu0 0.0
    %1561 = vmatmul.mubr.f32.gmra.mrb[0].mxu0 %v1465
    %v1562 = vpop.f32.mrb[0].mxu0
    %v1563 = vadd.f32 %v1450, %v1562
    %v1564 = vpop.f32.mrb[0].mxu0
    %1565 = vmatprep.mubr.f32.mxu0 0.0
    %1566 = vmatmul.mubr.f32.gmra.mrb[0].mxu0 %v1468
    %v1567 = vpop.f32.mrb[0].mxu0
    %v1568 = vadd.f32 %v1450, %v1567
    %v1569 = vpop.f32.mrb[0].mxu0
    %1570 = vmatprep.mubr.f32.mxu0 0.0
    %1571 = vmatmul.mubr.f32.gmra.mrb[0].mxu0 %v1471
    %v1572 = vpop.f32.mrb[0].mxu0
    %v1573 = vadd.f32 %v1450, %v1572
    %v1574 = vpop.f32.mrb[0].mxu0
    %1575 = vmatprep.mubr.f32.mxu0 0.0
    %1576 = vmatmul.mubr.f32.gmra.mrb[0].mxu0 %v1474
    %v1577 = vpop.f32.mrb[0].mxu0
    %v1578 = vadd.f32 %v1450, %v1577
    %v1579 = vpop.f32.mrb[0].mxu0
    %1580 = vdwg.mxu0
    %v1581 = vxor.u32 %v1543, 2147483648
    %v1582 = vxor.u32 %v1548, 2147483648
    %v1583 = vxor.u32 %v1553, 2147483648
    %v1584 = vxor.u32 %v1558, 2147483648
    %v1585 = vxor.u32 %v1563, 2147483648
    %v1586 = vxor.u32 %v1568, 2147483648
    %v1587 = vxor.u32 %v1573, 2147483648
    %v1588 = vxor.u32 %v1578, 2147483648
    %v1589 = vmul.f32 %v1581, 1.442695
    %v1590 = vpow.pop %v1589
    %v1591 = vmul.f32 %v1582, 1.442695
    %v1592 = vpow.pop %v1591
    %v1593 = vmul.f32 %v1583, 1.442695
    %v1594 = vpow.pop %v1593
    %v1595 = vmul.f32 %v1584, 1.442695
    %v1596 = vpow.pop %v1595
    %v1597 = vmul.f32 %v1585, 1.442695
    %v1598 = vpow.pop %v1597
    %v1599 = vmul.f32 %v1586, 1.442695
    %v1600 = vpow.pop %v1599
    %v1601 = vmul.f32 %v1587, 1.442695
    %v1602 = vpow.pop %v1601
    %v1603 = vmul.f32 %v1588, 1.442695
    %v1604 = vpow.pop %v1603
    %v1605 = vadd.f32 %v1590, 1.0
    %v1606 = vadd.f32 %v1592, 1.0
    %v1607 = vadd.f32 %v1594, 1.0
    %v1608 = vadd.f32 %v1596, 1.0
    %v1609 = vadd.f32 %v1598, 1.0
    %v1610 = vadd.f32 %v1600, 1.0
    %v1611 = vadd.f32 %v1602, 1.0
    %v1612 = vadd.f32 %v1604, 1.0
    %v1613 = vrcp.pop %v1605
    %v1614 = vmul.f32 1.0, %v1613
    %v1615 = vrcp.pop %v1606
    %v1616 = vmul.f32 1.0, %v1615
    %v1617 = vrcp.pop %v1607
    %v1618 = vmul.f32 1.0, %v1617
    %v1619 = vrcp.pop %v1608
    %v1620 = vmul.f32 1.0, %v1619
    %v1621 = vrcp.pop %v1609
    %v1622 = vmul.f32 1.0, %v1621
    %v1623 = vrcp.pop %v1610
    %v1624 = vmul.f32 1.0, %v1623
    %v1625 = vrcp.pop %v1611
    %v1626 = vmul.f32 1.0, %v1625
    %v1627 = vrcp.pop %v1612
    %v1628 = vmul.f32 1.0, %v1627
    %v1629 = vmul.f32 %v1614, %v1436
    %v1630 = vmul.f32 %v1616, %v1437
    %v1631 = vmul.f32 %v1618, %v1438
    %v1632 = vmul.f32 %v1620, %v1439
    %v1633 = vmul.f32 %v1622, %v1440
    %v1634 = vmul.f32 %v1624, %v1441
    %v1635 = vmul.f32 %v1626, %v1442
    %v1636 = vmul.f32 %v1628, %v1443
    %1637 = vxpose.xlu0.b32.start [1/16] %v1629, 128
    %1638 = vxpose.xlu0.b32.cont [2/16] %v1630, 128
    %1639 = vxpose.xlu0.b32.cont [3/16] %v1631, 128
    %1640 = vxpose.xlu0.b32.cont [4/16] %v1632, 128
    %1641 = vxpose.xlu0.b32.cont [5/16] 0.0, 128
    %1642 = vxpose.xlu0.b32.cont [6/16] 0.0, 128
    %1643 = vxpose.xlu0.b32.cont [7/16] 0.0, 128
    %1644 = vxpose.xlu0.b32.cont [8/16] 0.0, 128
    %1645 = vxpose.xlu0.b32.cont [9/16] 0.0, 128
    %1646 = vxpose.xlu0.b32.cont [10/16] 0.0, 128
    %1647 = vxpose.xlu0.b32.cont [11/16] 0.0, 128
    %1648 = vxpose.xlu0.b32.cont [12/16] 0.0, 128
    %1649 = vxpose.xlu0.b32.cont [13/16] 0.0, 128
    %1650 = vxpose.xlu0.b32.cont [14/16] 0.0, 128
    %1651 = vxpose.xlu0.b32.cont [15/16] 0.0, 128
    %1652 = vxpose.xlu0.b32.end [16/16] 0.0, 128
    %v1653 = vpop.trf.xlu0
    %v1654 = vpop.trf.xlu0
    %v1655 = vpop.trf.xlu0
    %v1656 = vpop.trf.xlu0
    %v1657 = vpop.trf.xlu0
    %v1658 = vpop.trf.xlu0
    %v1659 = vpop.trf.xlu0
    %v1660 = vpop.trf.xlu0
    %v1661 = vpop.trf.xlu0
    %v1662 = vpop.trf.xlu0
    %v1663 = vpop.trf.xlu0
    %v1664 = vpop.trf.xlu0
    %v1665 = vpop.trf.xlu0
    %v1666 = vpop.trf.xlu0
    %v1667 = vpop.trf.xlu0
    %v1668 = vpop.trf.xlu0
    %1669 = vxpose.xlu0.b32.start [1/16] %v1633, 128
    %1670 = vxpose.xlu0.b32.cont [2/16] %v1634, 128
    %1671 = vxpose.xlu0.b32.cont [3/16] %v1635, 128
    %1672 = vxpose.xlu0.b32.cont [4/16] %v1636, 128
    %1673 = vxpose.xlu0.b32.cont [5/16] 0.0, 128
    %1674 = vxpose.xlu0.b32.cont [6/16] 0.0, 128
    %1675 = vxpose.xlu0.b32.cont [7/16] 0.0, 128
    %1676 = vxpose.xlu0.b32.cont [8/16] 0.0, 128
    %1677 = vxpose.xlu0.b32.cont [9/16] 0.0, 128
    %1678 = vxpose.xlu0.b32.cont [10/16] 0.0, 128
    %1679 = vxpose.xlu0.b32.cont [11/16] 0.0, 128
    %1680 = vxpose.xlu0.b32.cont [12/16] 0.0, 128
    %1681 = vxpose.xlu0.b32.cont [13/16] 0.0, 128
    %1682 = vxpose.xlu0.b32.cont [14/16] 0.0, 128
    %1683 = vxpose.xlu0.b32.cont [15/16] 0.0, 128
    %1684 = vxpose.xlu0.b32.end [16/16] 0.0, 128
    %v1685 = vpop.trf.xlu0
    %v1686 = vpop.trf.xlu0
    %v1687 = vpop.trf.xlu0
    %v1688 = vpop.trf.xlu0
    %v1689 = vpop.trf.xlu0
    %v1690 = vpop.trf.xlu0
    %v1691 = vpop.trf.xlu0
    %v1692 = vpop.trf.xlu0
    %v1693 = vpop.trf.xlu0
    %v1694 = vpop.trf.xlu0
    %v1695 = vpop.trf.xlu0
    %v1696 = vpop.trf.xlu0
    %v1697 = vpop.trf.xlu0
    %v1698 = vpop.trf.xlu0
    %v1699 = vpop.trf.xlu0
    %v1700 = vpop.trf.xlu0
    %v1701 = vadd.f32 %v1130, %v1653
    %v1702 = vadd.f32 %v1131, %v1685
    %v1703 = vld [vmem:[%s35] sm:$0x1]
    %v1704 = vld [vmem:[%s37] sm:$0x1]
    %v1705 = vsel %vm888, %v1701, 0.0
    %1706 = vadd.xlane.f32.xlu0 %v1705
    %v1707 = vpop.xlane.xlu0 %1706
    %v1708 = vsel %vm888, %v1702, 0.0
    %1709 = vadd.xlane.f32.xlu0 %v1708
    %v1710 = vpop.xlane.xlu0 %1709
    %v1711 = vmul.f32 %v1707, %v1095
    %v1712 = vmul.f32 %v1710, %v1095
    %v1713 = vsub.f32 %v1701, %v1711
    %v1714 = vsub.f32 %v1702, %v1712
    %v1715 = vmul.f32 %v1713, %v1713
    %v1716 = vmul.f32 %v1714, %v1714
    %v1717 = vsel %vm888, %v1715, 0.0
    %1718 = vadd.xlane.f32.xlu0 %v1717
    %v1719 = vpop.xlane.xlu0 %1718
    %v1720 = vsel %vm888, %v1716, 0.0
    %1721 = vadd.xlane.f32.xlu0 %v1720
    %v1722 = vpop.xlane.xlu0 %1721
    %v1723 = vmul.f32 %v1719, %v1095
    %v1724 = vmul.f32 %v1722, %v1095
    %v1725 = vadd.f32 %v1723, 1e-05
    %v1726 = vadd.f32 %v1724, 1e-05
    %v1727 = vrsqrt.pop %v1725
    %v1728 = vrsqrt.pop %v1726
    %v1729 = vmul.f32 %v1713, %v1727
    %v1730 = vmul.f32 %v1714, %v1728
    %v1732 = vlaneseq
    %v1733 = vshrl.u32 %v1732, 7
    %v1734 = vsub.s32 0, %v1733
    %v1735 = vrot.slane %v1703, %v1734
    %v1737 = vmul.f32 %v1729, %v1735
    %v1738 = vmul.f32 %v1730, %v1735
    %v1740 = vlaneseq
    %v1741 = vshrl.u32 %v1740, 7
    %v1742 = vsub.s32 0, %v1741
    %v1743 = vrot.slane %v1704, %v1742
    %v1745 = vadd.f32 %v1737, %v1743
    %v1746 = vadd.f32 %v1738, %v1743
    %s1747 = scalar_lea.vmem %s7, 8
    %v1748 = vld [vmem:[%s1747] sm:$0xff]
    %s1749 = scalar_lea.vmem [#allocation7], 1
    %v1750 = vld [vmem:[%s1749] sm:$0x1]
    %v1752 = vlaneseq
    %v1753 = vshrl.u32 %v1752, 7
    %v1754 = vsub.s32 0, %v1753
    %v1755 = vrot.slane %v1750, %v1754
    %1757 = vmatprep.subr.mxu0 0.0
    %1758 = vmatpush1.msra.mxu0 %v1748
    %1759 = vmatprep.subr.mxu0 0.0
    %1760 = vmatpush1.msra.mxu0 0.0
    %1761 = vmatprep.subr.mxu0 0.0
    %1762 = vmatpush1.msra.mxu0 0.0
    %1763 = vmatprep.subr.mxu0 0.0
    %1764 = vmatpush1.msra.mxu0 0.0
    %1765 = vmatprep.subr.mxu0 0.0
    %1766 = vmatpush1.msra.mxu0 0.0
    %1767 = vmatprep.subr.mxu0 0.0
    %1768 = vmatpush1.msra.mxu0 0.0
    %1769 = vmatprep.subr.mxu0 0.0
    %1770 = vmatpush1.msra.mxu0 0.0
    %1771 = vmatprep.subr.mxu0 0.0
    %1772 = vmatpush1.msra.mxu0 0.0
    %1773 = vmatprep.subr.mxu0 0.0
    %1774 = vmatpush1.msra.mxu0 0.0
    %1775 = vmatprep.subr.mxu0 0.0
    %1776 = vmatpush1.msra.mxu0 0.0
    %1777 = vmatprep.subr.mxu0 0.0
    %1778 = vmatpush1.msra.mxu0 0.0
    %1779 = vmatprep.subr.mxu0 0.0
    %1780 = vmatpush1.msra.mxu0 0.0
    %1781 = vmatprep.subr.mxu0 0.0
    %1782 = vmatpush1.msra.mxu0 0.0
    %1783 = vmatprep.subr.mxu0 0.0
    %1784 = vmatpush1.msra.mxu0 0.0
    %1785 = vmatprep.subr.mxu0 0.0
    %1786 = vmatpush1.msra.mxu0 0.0
    %1787 = vmatprep.subr.mxu0 0.0
    %1788 = vmatpush1.msra.mxu0 0.0
    %1789 = vmatprep.subr.mxu0 0.0
    %1790 = vmatpush1.msra.mxu0 0.0
    %1791 = vmatprep.subr.mxu0 0.0
    %1792 = vmatpush1.msra.mxu0 0.0
    %1793 = vmatprep.subr.mxu0 0.0
    %1794 = vmatpush1.msra.mxu0 0.0
    %1795 = vmatprep.subr.mxu0 0.0
    %1796 = vmatpush1.msra.mxu0 0.0
    %1797 = vmatprep.subr.mxu0 0.0
    %1798 = vmatpush1.msra.mxu0 0.0
    %1799 = vmatprep.subr.mxu0 0.0
    %1800 = vmatpush1.msra.mxu0 0.0
    %1801 = vmatprep.subr.mxu0 0.0
    %1802 = vmatpush1.msra.mxu0 0.0
    %1803 = vmatprep.subr.mxu0 0.0
    %1804 = vmatpush1.msra.mxu0 0.0
    %1805 = vmatprep.subr.mxu0 0.0
    %1806 = vmatpush1.msra.mxu0 0.0
    %1807 = vmatprep.subr.mxu0 0.0
    %1808 = vmatpush1.msra.mxu0 0.0
    %1809 = vmatprep.subr.mxu0 0.0
    %1810 = vmatpush1.msra.mxu0 0.0
    %1811 = vmatprep.subr.mxu0 0.0
    %1812 = vmatpush1.msra.mxu0 0.0
    %1813 = vmatprep.subr.mxu0 0.0
    %1814 = vmatpush1.msra.mxu0 0.0
    %1815 = vmatprep.subr.mxu0 0.0
    %1816 = vmatpush1.msra.mxu0 0.0
    %1817 = vmatprep.subr.mxu0 0.0
    %1818 = vmatpush1.msra.mxu0 0.0
    %1819 = vmatprep.subr.mxu0 0.0
    %1820 = vmatpush1.msra.mxu0 0.0
    %1821 = vmatprep.mubr.f32.mxu0 0.0
    %1822 = vmatmul.mubr.f32.gmra.mrb[0].mxu0 %v1453
    %v1823 = vpop.f32.mrb[0].mxu0
    %v1824 = vadd.f32 %v1755, %v1823
    %v1825 = vpop.f32.mrb[0].mxu0
    %1826 = vmatprep.mubr.f32.mxu0 0.0
    %1827 = vmatmul.mubr.f32.gmra.mrb[0].mxu0 %v1456
    %v1828 = vpop.f32.mrb[0].mxu0
    %v1829 = vadd.f32 %v1755, %v1828
    %v1830 = vpop.f32.mrb[0].mxu0
    %1831 = vmatprep.mubr.f32.mxu0 0.0
    %1832 = vmatmul.mubr.f32.gmra.mrb[0].mxu0 %v1459
    %v1833 = vpop.f32.mrb[0].mxu0
    %v1834 = vadd.f32 %v1755, %v1833
    %v1835 = vpop.f32.mrb[0].mxu0
    %1836 = vmatprep.mubr.f32.mxu0 0.0
    %1837 = vmatmul.mubr.f32.gmra.mrb[0].mxu0 %v1462
    %v1838 = vpop.f32.mrb[0].mxu0
    %v1839 = vadd.f32 %v1755, %v1838
    %v1840 = vpop.f32.mrb[0].mxu0
    %1841 = vmatprep.mubr.f32.mxu0 0.0
    %1842 = vmatmul.mubr.f32.gmra.mrb[0].mxu0 %v1465
    %v1843 = vpop.f32.mrb[0].mxu0
    %v1844 = vadd.f32 %v1755, %v1843
    %v1845 = vpop.f32.mrb[0].mxu0
    %1846 = vmatprep.mubr.f32.mxu0 0.0
    %1847 = vmatmul.mubr.f32.gmra.mrb[0].mxu0 %v1468
    %v1848 = vpop.f32.mrb[0].mxu0
    %v1849 = vadd.f32 %v1755, %v1848
    %v1850 = vpop.f32.mrb[0].mxu0
    %1851 = vmatprep.mubr.f32.mxu0 0.0
    %1852 = vmatmul.mubr.f32.gmra.mrb[0].mxu0 %v1471
    %v1853 = vpop.f32.mrb[0].mxu0
    %v1854 = vadd.f32 %v1755, %v1853
    %v1855 = vpop.f32.mrb[0].mxu0
    %1856 = vmatprep.mubr.f32.mxu0 0.0
    %1857 = vmatmul.mubr.f32.gmra.mrb[0].mxu0 %v1474
    %v1858 = vpop.f32.mrb[0].mxu0
    %v1859 = vadd.f32 %v1755, %v1858
    %v1860 = vpop.f32.mrb[0].mxu0
    %1861 = vdwg.mxu0
    %v1862 = vmul.f32 %v1824, 0.5
    %v1863 = vmul.f32 %v1829, 0.5
    %v1864 = vmul.f32 %v1834, 0.5
    %v1865 = vmul.f32 %v1839, 0.5
    %v1866 = vmul.f32 %v1844, 0.5
    %v1867 = vmul.f32 %v1849, 0.5
    %v1868 = vmul.f32 %v1854, 0.5
    %v1869 = vmul.f32 %v1859, 0.5
    %v1870 = vmul.f32 %v1824, 0.044715
    %v1871 = vmul.f32 %v1829, 0.044715
    %v1872 = vmul.f32 %v1834, 0.044715
    %v1873 = vmul.f32 %v1839, 0.044715
    %v1874 = vmul.f32 %v1844, 0.044715
    %v1875 = vmul.f32 %v1849, 0.044715
    %v1876 = vmul.f32 %v1854, 0.044715
    %v1877 = vmul.f32 %v1859, 0.044715
    %v1878 = vmul.f32 %v1870, %v1824
    %v1879 = vmul.f32 %v1871, %v1829
    %v1880 = vmul.f32 %v1872, %v1834
    %v1881 = vmul.f32 %v1873, %v1839
    %v1882 = vmul.f32 %v1874, %v1844
    %v1883 = vmul.f32 %v1875, %v1849
    %v1884 = vmul.f32 %v1876, %v1854
    %v1885 = vmul.f32 %v1877, %v1859
    %v1886 = vmul.f32 %v1878, %v1824
    %v1887 = vmul.f32 %v1879, %v1829
    %v1888 = vmul.f32 %v1880, %v1834
    %v1889 = vmul.f32 %v1881, %v1839
    %v1890 = vmul.f32 %v1882, %v1844
    %v1891 = vmul.f32 %v1883, %v1849
    %v1892 = vmul.f32 %v1884, %v1854
    %v1893 = vmul.f32 %v1885, %v1859
    %v1894 = vadd.f32 %v1824, %v1886
    %v1895 = vadd.f32 %v1829, %v1887
    %v1896 = vadd.f32 %v1834, %v1888
    %v1897 = vadd.f32 %v1839, %v1889
    %v1898 = vadd.f32 %v1844, %v1890
    %v1899 = vadd.f32 %v1849, %v1891
    %v1900 = vadd.f32 %v1854, %v1892
    %v1901 = vadd.f32 %v1859, %v1893
    %v1902 = vmul.f32 %v1894, 0.7978846
    %v1903 = vmul.f32 %v1895, 0.7978846
    %v1904 = vmul.f32 %v1896, 0.7978846
    %v1905 = vmul.f32 %v1897, 0.7978846
    %v1906 = vmul.f32 %v1898, 0.7978846
    %v1907 = vmul.f32 %v1899, 0.7978846
    %v1908 = vmul.f32 %v1900, 0.7978846
    %v1909 = vmul.f32 %v1901, 0.7978846
    %v1910 = vtanh.pop %v1902
    %v1911 = vtanh.pop %v1903
    %v1912 = vtanh.pop %v1904
    %v1913 = vtanh.pop %v1905
    %v1914 = vtanh.pop %v1906
    %v1915 = vtanh.pop %v1907
    %v1916 = vtanh.pop %v1908
    %v1917 = vtanh.pop %v1909
    %v1918 = vadd.f32 %v1910, 1.0
    %v1919 = vadd.f32 %v1911, 1.0
    %v1920 = vadd.f32 %v1912, 1.0
    %v1921 = vadd.f32 %v1913, 1.0
    %v1922 = vadd.f32 %v1914, 1.0
    %v1923 = vadd.f32 %v1915, 1.0
    %v1924 = vadd.f32 %v1916, 1.0
    %v1925 = vadd.f32 %v1917, 1.0
    %v1926 = vmul.f32 %v1862, %v1918
    %v1927 = vmul.f32 %v1863, %v1919
    %v1928 = vmul.f32 %v1864, %v1920
    %v1929 = vmul.f32 %v1865, %v1921
    %v1930 = vmul.f32 %v1866, %v1922
    %v1931 = vmul.f32 %v1867, %v1923
    %v1932 = vmul.f32 %v1868, %v1924
    %v1933 = vmul.f32 %v1869, %v1925
    %s1934 = scalar_lea.vmem %s11, 16
    %v1935 = vld [vmem:[%s1934] sm:$0xff]
    %v1936 = vld [vmem:[%s1934 + $0x8] sm:$0xff]
    %s1937 = scalar_lea.vmem [#allocation8], 1
    %v1938 = vld [vmem:[%s1937] sm:$0x1]
    %v1940 = vlaneseq
    %v1941 = vshrl.u32 %v1940, 7
    %v1942 = vsub.s32 0, %v1941
    %v1943 = vrot.slane %v1938, %v1942
    %v1946 = vsel %vm604, %v1926, 0
    %v1949 = vsel %vm604, %v1927, 0
    %v1952 = vsel %vm604, %v1928, 0
    %v1955 = vsel %vm604, %v1929, 0
    %v1958 = vsel %vm604, %v1930, 0
    %v1961 = vsel %vm604, %v1931, 0
    %v1964 = vsel %vm604, %v1932, 0
    %v1967 = vsel %vm604, %v1933, 0
    %1969 = vmatprep.subr.mxu0 0.0
    %1970 = vmatpush1.msra.mxu0 %v1935
    %1971 = vmatprep.subr.mxu0 0.0
    %1972 = vmatpush1.msra.mxu0 %v1936
    %1973 = vmatprep.subr.mxu0 0.0
    %1974 = vmatpush1.msra.mxu0 0.0
    %1975 = vmatprep.subr.mxu0 0.0
    %1976 = vmatpush1.msra.mxu0 0.0
    %1977 = vmatprep.subr.mxu0 0.0
    %1978 = vmatpush1.msra.mxu0 0.0
    %1979 = vmatprep.subr.mxu0 0.0
    %1980 = vmatpush1.msra.mxu0 0.0
    %1981 = vmatprep.subr.mxu0 0.0
    %1982 = vmatpush1.msra.mxu0 0.0
    %1983 = vmatprep.subr.mxu0 0.0
    %1984 = vmatpush1.msra.mxu0 0.0
    %1985 = vmatprep.subr.mxu0 0.0
    %1986 = vmatpush1.msra.mxu0 0.0
    %1987 = vmatprep.subr.mxu0 0.0
    %1988 = vmatpush1.msra.mxu0 0.0
    %1989 = vmatprep.subr.mxu0 0.0
    %1990 = vmatpush1.msra.mxu0 0.0
    %1991 = vmatprep.subr.mxu0 0.0
    %1992 = vmatpush1.msra.mxu0 0.0
    %1993 = vmatprep.subr.mxu0 0.0
    %1994 = vmatpush1.msra.mxu0 0.0
    %1995 = vmatprep.subr.mxu0 0.0
    %1996 = vmatpush1.msra.mxu0 0.0
    %1997 = vmatprep.subr.mxu0 0.0
    %1998 = vmatpush1.msra.mxu0 0.0
    %1999 = vmatprep.subr.mxu0 0.0
    %2000 = vmatpush1.msra.mxu0 0.0
    %2001 = vmatprep.subr.mxu0 0.0
    %2002 = vmatpush1.msra.mxu0 0.0
    %2003 = vmatprep.subr.mxu0 0.0
    %2004 = vmatpush1.msra.mxu0 0.0
    %2005 = vmatprep.subr.mxu0 0.0
    %2006 = vmatpush1.msra.mxu0 0.0
    %2007 = vmatprep.subr.mxu0 0.0
    %2008 = vmatpush1.msra.mxu0 0.0
    %2009 = vmatprep.subr.mxu0 0.0
    %2010 = vmatpush1.msra.mxu0 0.0
    %2011 = vmatprep.subr.mxu0 0.0
    %2012 = vmatpush1.msra.mxu0 0.0
    %2013 = vmatprep.subr.mxu0 0.0
    %2014 = vmatpush1.msra.mxu0 0.0
    %2015 = vmatprep.subr.mxu0 0.0
    %2016 = vmatpush1.msra.mxu0 0.0
    %2017 = vmatprep.subr.mxu0 0.0
    %2018 = vmatpush1.msra.mxu0 0.0
    %2019 = vmatprep.subr.mxu0 0.0
    %2020 = vmatpush1.msra.mxu0 0.0
    %2021 = vmatprep.subr.mxu0 0.0
    %2022 = vmatpush1.msra.mxu0 0.0
    %2023 = vmatprep.subr.mxu0 0.0
    %2024 = vmatpush1.msra.mxu0 0.0
    %2025 = vmatprep.subr.mxu0 0.0
    %2026 = vmatpush1.msra.mxu0 0.0
    %2027 = vmatprep.subr.mxu0 0.0
    %2028 = vmatpush1.msra.mxu0 0.0
    %2029 = vmatprep.subr.mxu0 0.0
    %2030 = vmatpush1.msra.mxu0 0.0
    %2031 = vmatprep.subr.mxu0 0.0
    %2032 = vmatpush1.msra.mxu0 0.0
    %2033 = vmatprep.mubr.f32.mxu0 0.0
    %2034 = vmatmul.mubr.f32.gmra.mrb[0].mxu0 %v1946
    %v2035 = vpop.f32.mrb[0].mxu0
    %v2036 = vadd.f32 %v1943, %v2035
    %v2037 = vpop.f32.mrb[0].mxu0
    %2038 = vmatprep.mubr.f32.mxu0 0.0
    %2039 = vmatmul.mubr.f32.gmra.mrb[0].mxu0 %v1949
    %v2040 = vpop.f32.mrb[0].mxu0
    %v2041 = vadd.f32 %v1943, %v2040
    %v2042 = vpop.f32.mrb[0].mxu0
    %2043 = vmatprep.mubr.f32.mxu0 0.0
    %2044 = vmatmul.mubr.f32.gmra.mrb[0].mxu0 %v1952
    %v2045 = vpop.f32.mrb[0].mxu0
    %v2046 = vadd.f32 %v1943, %v2045
    %v2047 = vpop.f32.mrb[0].mxu0
    %2048 = vmatprep.mubr.f32.mxu0 0.0
    %2049 = vmatmul.mubr.f32.gmra.mrb[0].mxu0 %v1955
    %v2050 = vpop.f32.mrb[0].mxu0
    %v2051 = vadd.f32 %v1943, %v2050
    %v2052 = vpop.f32.mrb[0].mxu0
    %2053 = vmatprep.mubr.f32.mxu0 0.0
    %2054 = vmatmul.mubr.f32.gmra.mrb[0].mxu0 %v1958
    %v2055 = vpop.f32.mrb[0].mxu0
    %v2056 = vadd.f32 %v1943, %v2055
    %v2057 = vpop.f32.mrb[0].mxu0
    %2058 = vmatprep.mubr.f32.mxu0 0.0
    %2059 = vmatmul.mubr.f32.gmra.mrb[0].mxu0 %v1961
    %v2060 = vpop.f32.mrb[0].mxu0
    %v2061 = vadd.f32 %v1943, %v2060
    %v2062 = vpop.f32.mrb[0].mxu0
    %2063 = vmatprep.mubr.f32.mxu0 0.0
    %2064 = vmatmul.mubr.f32.gmra.mrb[0].mxu0 %v1964
    %v2065 = vpop.f32.mrb[0].mxu0
    %v2066 = vadd.f32 %v1943, %v2065
    %v2067 = vpop.f32.mrb[0].mxu0
    %2068 = vmatprep.mubr.f32.mxu0 0.0
    %2069 = vmatmul.mubr.f32.gmra.mrb[0].mxu0 %v1967
    %v2070 = vpop.f32.mrb[0].mxu0
    %v2071 = vadd.f32 %v1943, %v2070
    %v2072 = vpop.f32.mrb[0].mxu0
    %2073 = vdwg.mxu0
    %v2074 = vadd.f32 %v2036, %v1436
    %v2075 = vadd.f32 %v2041, %v1437
    %v2076 = vadd.f32 %v2046, %v1438
    %v2077 = vadd.f32 %v2051, %v1439
    %v2078 = vadd.f32 %v2056, %v1440
    %v2079 = vadd.f32 %v2061, %v1441
    %v2080 = vadd.f32 %v2066, %v1442
    %v2081 = vadd.f32 %v2071, %v1443
    %s2082 = scalar_lea.vmem [#allocation13], 1
    %v2083 = vld [vmem:[%s2082] sm:$0x1]
    %s2084 = scalar_lea.vmem [#allocation14], 1
    %v2085 = vld [vmem:[%s2084] sm:$0x1]
    %v2086 = vsel %vm240, %v2074, 0.0
    %2087 = vadd.xlane.f32.xlu0 %v2086
    %v2088 = vpop.xlane.xlu0 %2087
    %v2089 = vsel %vm240, %v2075, 0.0
    %2090 = vadd.xlane.f32.xlu0 %v2089
    %v2091 = vpop.xlane.xlu0 %2090
    %v2092 = vsel %vm240, %v2076, 0.0
    %2093 = vadd.xlane.f32.xlu0 %v2092
    %v2094 = vpop.xlane.xlu0 %2093
    %v2095 = vsel %vm240, %v2077, 0.0
    %2096 = vadd.xlane.f32.xlu0 %v2095
    %v2097 = vpop.xlane.xlu0 %2096
    %v2098 = vsel %vm240, %v2078, 0.0
    %2099 = vadd.xlane.f32.xlu0 %v2098
    %v2100 = vpop.xlane.xlu0 %2099
    %v2101 = vsel %vm240, %v2079, 0.0
    %2102 = vadd.xlane.f32.xlu0 %v2101
    %v2103 = vpop.xlane.xlu0 %2102
    %v2104 = vsel %vm240, %v2080, 0.0
    %2105 = vadd.xlane.f32.xlu0 %v2104
    %v2106 = vpop.xlane.xlu0 %2105
    %v2107 = vsel %vm240, %v2081, 0.0
    %2108 = vadd.xlane.f32.xlu0 %v2107
    %v2109 = vpop.xlane.xlu0 %2108
    %v2110 = vmul.f32 %v2088, %v768
    %v2111 = vmul.f32 %v2091, %v768
    %v2112 = vmul.f32 %v2094, %v768
    %v2113 = vmul.f32 %v2097, %v768
    %v2114 = vmul.f32 %v2100, %v768
    %v2115 = vmul.f32 %v2103, %v768
    %v2116 = vmul.f32 %v2106, %v768
    %v2117 = vmul.f32 %v2109, %v768
    %v2118 = vsub.f32 %v2074, %v2110
    %v2119 = vsub.f32 %v2075, %v2111
    %v2120 = vsub.f32 %v2076, %v2112
    %v2121 = vsub.f32 %v2077, %v2113
    %v2122 = vsub.f32 %v2078, %v2114
    %v2123 = vsub.f32 %v2079, %v2115
    %v2124 = vsub.f32 %v2080, %v2116
    %v2125 = vsub.f32 %v2081, %v2117
    %v2126 = vmul.f32 %v2118, %v2118
    %v2127 = vmul.f32 %v2119, %v2119
    %v2128 = vmul.f32 %v2120, %v2120
    %v2129 = vmul.f32 %v2121, %v2121
    %v2130 = vmul.f32 %v2122, %v2122
    %v2131 = vmul.f32 %v2123, %v2123
    %v2132 = vmul.f32 %v2124, %v2124
    %v2133 = vmul.f32 %v2125, %v2125
    %v2134 = vsel %vm240, %v2126, 0.0
    %2135 = vadd.xlane.f32.xlu0 %v2134
    %v2136 = vpop.xlane.xlu0 %2135
    %v2137 = vsel %vm240, %v2127, 0.0
    %2138 = vadd.xlane.f32.xlu0 %v2137
    %v2139 = vpop.xlane.xlu0 %2138
    %v2140 = vsel %vm240, %v2128, 0.0
    %2141 = vadd.xlane.f32.xlu0 %v2140
    %v2142 = vpop.xlane.xlu0 %2141
    %v2143 = vsel %vm240, %v2129, 0.0
    %2144 = vadd.xlane.f32.xlu0 %v2143
    %v2145 = vpop.xlane.xlu0 %2144
    %v2146 = vsel %vm240, %v2130, 0.0
    %2147 = vadd.xlane.f32.xlu0 %v2146
    %v2148 = vpop.xlane.xlu0 %2147
    %v2149 = vsel %vm240, %v2131, 0.0
    %2150 = vadd.xlane.f32.xlu0 %v2149
    %v2151 = vpop.xlane.xlu0 %2150
    %v2152 = vsel %vm240, %v2132, 0.0
    %2153 = vadd.xlane.f32.xlu0 %v2152
    %v2154 = vpop.xlane.xlu0 %2153
    %v2155 = vsel %vm240, %v2133, 0.0
    %2156 = vadd.xlane.f32.xlu0 %v2155
    %v2157 = vpop.xlane.xlu0 %2156
    %v2158 = vmul.f32 %v2136, %v768
    %v2159 = vmul.f32 %v2139, %v768
    %v2160 = vmul.f32 %v2142, %v768
    %v2161 = vmul.f32 %v2145, %v768
    %v2162 = vmul.f32 %v2148, %v768
    %v2163 = vmul.f32 %v2151, %v768
    %v2164 = vmul.f32 %v2154, %v768
    %v2165 = vmul.f32 %v2157, %v768
    %v2166 = vadd.f32 %v2158, 1e-05
    %v2167 = vadd.f32 %v2159, 1e-05
    %v2168 = vadd.f32 %v2160, 1e-05
    %v2169 = vadd.f32 %v2161, 1e-05
    %v2170 = vadd.f32 %v2162, 1e-05
    %v2171 = vadd.f32 %v2163, 1e-05
    %v2172 = vadd.f32 %v2164, 1e-05
    %v2173 = vadd.f32 %v2165, 1e-05
    %v2174 = vrsqrt.pop %v2166
    %v2175 = vrsqrt.pop %v2167
    %v2176 = vrsqrt.pop %v2168
    %v2177 = vrsqrt.pop %v2169
    %v2178 = vrsqrt.pop %v2170
    %v2179 = vrsqrt.pop %v2171
    %v2180 = vrsqrt.pop %v2172
    %v2181 = vrsqrt.pop %v2173
    %v2182 = vmul.f32 %v2118, %v2174
    %v2183 = vmul.f32 %v2119, %v2175
    %v2184 = vmul.f32 %v2120, %v2176
    %v2185 = vmul.f32 %v2121, %v2177
    %v2186 = vmul.f32 %v2122, %v2178
    %v2187 = vmul.f32 %v2123, %v2179
    %v2188 = vmul.f32 %v2124, %v2180
    %v2189 = vmul.f32 %v2125, %v2181
    %v2191 = vlaneseq
    %v2192 = vshrl.u32 %v2191, 7
    %v2193 = vsub.s32 0, %v2192
    %v2194 = vrot.slane %v2083, %v2193
    %v2196 = vmul.f32 %v2182, %v2194
    %v2197 = vmul.f32 %v2183, %v2194
    %v2198 = vmul.f32 %v2184, %v2194
    %v2199 = vmul.f32 %v2185, %v2194
    %v2200 = vmul.f32 %v2186, %v2194
    %v2201 = vmul.f32 %v2187, %v2194
    %v2202 = vmul.f32 %v2188, %v2194
    %v2203 = vmul.f32 %v2189, %v2194
    %v2205 = vlaneseq
    %v2206 = vshrl.u32 %v2205, 7
    %v2207 = vsub.s32 0, %v2206
    %v2208 = vrot.slane %v2085, %v2207
    %v2210 = vadd.f32 %v2196, %v2208
    %v2211 = vadd.f32 %v2197, %v2208
    %v2212 = vadd.f32 %v2198, %v2208
    %v2213 = vadd.f32 %v2199, %v2208
    %v2214 = vadd.f32 %v2200, %v2208
    %v2215 = vadd.f32 %v2201, %v2208
    %v2216 = vadd.f32 %v2202, %v2208
    %v2217 = vadd.f32 %v2203, %v2208
    %s2218 = scalar_lea.vmem %s15, 32
    %v2219 = vld [vmem:[%s2218] sm:$0xff]
    %v2220 = vld [vmem:[%s2218 + $0x8] sm:$0xff]
    %v2221 = vld [vmem:[%s2218 + $0x10] sm:$0xff]
    %v2222 = vld [vmem:[%s2218 + $0x18] sm:$0xff]
    %s2223 = scalar_lea.vmem [#allocation10], 1
    %v2224 = vld [vmem:[%s2223] sm:$0x1]
    %v2226 = vlaneseq
    %v2227 = vshrl.u32 %v2226, 7
    %v2228 = vsub.s32 0, %v2227
    %v2229 = vrot.slane %v2224, %v2228
    %v2232 = vsel %vm888, %v1745, 0
    %v2235 = vsel %vm888, %v1746, 0
    %2237 = vmatprep.subr.mxu0 0.0
    %2238 = vmatpush1.msra.mxu0 %v2219
    %2239 = vmatprep.subr.mxu0 0.0
    %2240 = vmatpush1.msra.mxu0 %v2220
    %2241 = vmatprep.subr.mxu0 0.0
    %2242 = vmatpush1.msra.mxu0 %v2221
    %2243 = vmatprep.subr.mxu0 0.0
    %2244 = vmatpush1.msra.mxu0 %v2222
    %2245 = vmatprep.subr.mxu0 0.0
    %2246 = vmatpush1.msra.mxu0 0.0
    %2247 = vmatprep.subr.mxu0 0.0
    %2248 = vmatpush1.msra.mxu0 0.0
    %2249 = vmatprep.subr.mxu0 0.0
    %2250 = vmatpush1.msra.mxu0 0.0
    %2251 = vmatprep.subr.mxu0 0.0
    %2252 = vmatpush1.msra.mxu0 0.0
    %2253 = vmatprep.subr.mxu0 0.0
    %2254 = vmatpush1.msra.mxu0 0.0
    %2255 = vmatprep.subr.mxu0 0.0
    %2256 = vmatpush1.msra.mxu0 0.0
    %2257 = vmatprep.subr.mxu0 0.0
    %2258 = vmatpush1.msra.mxu0 0.0
    %2259 = vmatprep.subr.mxu0 0.0
    %2260 = vmatpush1.msra.mxu0 0.0
    %2261 = vmatprep.subr.mxu0 0.0
    %2262 = vmatpush1.msra.mxu0 0.0
    %2263 = vmatprep.subr.mxu0 0.0
    %2264 = vmatpush1.msra.mxu0 0.0
    %2265 = vmatprep.subr.mxu0 0.0
    %2266 = vmatpush1.msra.mxu0 0.0
    %2267 = vmatprep.subr.mxu0 0.0
    %2268 = vmatpush1.msra.mxu0 0.0
    %2269 = vmatprep.subr.mxu0 0.0
    %2270 = vmatpush1.msra.mxu0 0.0
    %2271 = vmatprep.subr.mxu0 0.0
    %2272 = vmatpush1.msra.mxu0 0.0
    %2273 = vmatprep.subr.mxu0 0.0
    %2274 = vmatpush1.msra.mxu0 0.0
    %2275 = vmatprep.subr.mxu0 0.0
    %2276 = vmatpush1.msra.mxu0 0.0
    %2277 = vmatprep.subr.mxu0 0.0
    %2278 = vmatpush1.msra.mxu0 0.0
    %2279 = vmatprep.subr.mxu0 0.0
    %2280 = vmatpush1.msra.mxu0 0.0
    %2281 = vmatprep.subr.mxu0 0.0
    %2282 = vmatpush1.msra.mxu0 0.0
    %2283 = vmatprep.subr.mxu0 0.0
    %2284 = vmatpush1.msra.mxu0 0.0
    %2285 = vmatprep.subr.mxu0 0.0
    %2286 = vmatpush1.msra.mxu0 0.0
    %2287 = vmatprep.subr.mxu0 0.0
    %2288 = vmatpush1.msra.mxu0 0.0
    %2289 = vmatprep.subr.mxu0 0.0
    %2290 = vmatpush1.msra.mxu0 0.0
    %2291 = vmatprep.subr.mxu0 0.0
    %2292 = vmatpush1.msra.mxu0 0.0
    %2293 = vmatprep.subr.mxu0 0.0
    %2294 = vmatpush1.msra.mxu0 0.0
    %2295 = vmatprep.subr.mxu0 0.0
    %2296 = vmatpush1.msra.mxu0 0.0
    %2297 = vmatprep.subr.mxu0 0.0
    %2298 = vmatpush1.msra.mxu0 0.0
    %2299 = vmatprep.subr.mxu0 0.0
    %2300 = vmatpush1.msra.mxu0 0.0
    %2301 = vmatprep.mubr.f32.mxu0 0.0
    %2302 = vmatmul.mubr.f32.gmra.mrb[0].mxu0 %v2232
    %v2303 = vpop.f32.mrb[0].mxu0
    %v2304 = vadd.f32 %v2229, %v2303
    %v2305 = vpop.f32.mrb[0].mxu0
    %2306 = vmatprep.mubr.f32.mxu0 0.0
    %2307 = vmatmul.mubr.f32.gmra.mrb[0].mxu0 %v2235
    %v2308 = vpop.f32.mrb[0].mxu0
    %v2309 = vadd.f32 %v2229, %v2308
    %v2310 = vpop.f32.mrb[0].mxu0
    %2311 = vdwg.mxu0
    %v2312 = vmul.f32 %v2304, 0.5
    %v2313 = vmul.f32 %v2309, 0.5
    %v2314 = vmul.f32 %v2304, 0.044715
    %v2315 = vmul.f32 %v2309, 0.044715
    %v2316 = vmul.f32 %v2314, %v2304
    %v2317 = vmul.f32 %v2315, %v2309
    %v2318 = vmul.f32 %v2316, %v2304
    %v2319 = vmul.f32 %v2317, %v2309
    %v2320 = vadd.f32 %v2304, %v2318
    %v2321 = vadd.f32 %v2309, %v2319
    %v2322 = vmul.f32 %v2320, 0.7978846
    %v2323 = vmul.f32 %v2321, 0.7978846
    %v2324 = vtanh.pop %v2322
    %v2325 = vtanh.pop %v2323
    %v2326 = vadd.f32 %v2324, 1.0
    %v2327 = vadd.f32 %v2325, 1.0
    %v2328 = vmul.f32 %v2312, %v2326
    %v2329 = vmul.f32 %v2313, %v2327
    %s2330 = scalar_lea.vmem %s19, 64
    %v2331 = vld [vmem:[%s2330] sm:$0xff]
    %v2332 = vld [vmem:[%s2330 + $0x8] sm:$0xff]
    %v2333 = vld [vmem:[%s2330 + $0x10] sm:$0xff]
    %v2334 = vld [vmem:[%s2330 + $0x18] sm:$0xff]
    %v2335 = vld [vmem:[%s2330 + $0x20] sm:$0xff]
    %v2336 = vld [vmem:[%s2330 + $0x28] sm:$0xff]
    %v2337 = vld [vmem:[%s2330 + $0x30] sm:$0xff]
    %v2338 = vld [vmem:[%s2330 + $0x38] sm:$0xff]
    %s2339 = scalar_lea.vmem [#allocation11], 1
    %v2340 = vld [vmem:[%s2339] sm:$0x1]
    %v2342 = vlaneseq
    %v2343 = vshrl.u32 %v2342, 7
    %v2344 = vsub.s32 0, %v2343
    %v2345 = vrot.slane %v2340, %v2344
    %v2348 = vsel %vm1003, %v2328, 0
    %v2351 = vsel %vm1003, %v2329, 0
    %2353 = vmatprep.subr.mxu0 0.0
    %2354 = vmatpush1.msra.mxu0 %v2331
    %2355 = vmatprep.subr.mxu0 0.0
    %2356 = vmatpush1.msra.mxu0 %v2332
    %2357 = vmatprep.subr.mxu0 0.0
    %2358 = vmatpush1.msra.mxu0 %v2333
    %2359 = vmatprep.subr.mxu0 0.0
    %2360 = vmatpush1.msra.mxu0 %v2334
    %2361 = vmatprep.subr.mxu0 0.0
    %2362 = vmatpush1.msra.mxu0 %v2335
    %2363 = vmatprep.subr.mxu0 0.0
    %2364 = vmatpush1.msra.mxu0 %v2336
    %2365 = vmatprep.subr.mxu0 0.0
    %2366 = vmatpush1.msra.mxu0 %v2337
    %2367 = vmatprep.subr.mxu0 0.0
    %2368 = vmatpush1.msra.mxu0 %v2338
    %2369 = vmatprep.subr.mxu0 0.0
    %2370 = vmatpush1.msra.mxu0 0.0
    %2371 = vmatprep.subr.mxu0 0.0
    %2372 = vmatpush1.msra.mxu0 0.0
    %2373 = vmatprep.subr.mxu0 0.0
    %2374 = vmatpush1.msra.mxu0 0.0
    %2375 = vmatprep.subr.mxu0 0.0
    %2376 = vmatpush1.msra.mxu0 0.0
    %2377 = vmatprep.subr.mxu0 0.0
    %2378 = vmatpush1.msra.mxu0 0.0
    %2379 = vmatprep.subr.mxu0 0.0
    %2380 = vmatpush1.msra.mxu0 0.0
    %2381 = vmatprep.subr.mxu0 0.0
    %2382 = vmatpush1.msra.mxu0 0.0
    %2383 = vmatprep.subr.mxu0 0.0
    %2384 = vmatpush1.msra.mxu0 0.0
    %2385 = vmatprep.subr.mxu0 0.0
    %2386 = vmatpush1.msra.mxu0 0.0
    %2387 = vmatprep.subr.mxu0 0.0
    %2388 = vmatpush1.msra.mxu0 0.0
    %2389 = vmatprep.subr.mxu0 0.0
    %2390 = vmatpush1.msra.mxu0 0.0
    %2391 = vmatprep.subr.mxu0 0.0
    %2392 = vmatpush1.msra.mxu0 0.0
    %2393 = vmatprep.subr.mxu0 0.0
    %2394 = vmatpush1.msra.mxu0 0.0
    %2395 = vmatprep.subr.mxu0 0.0
    %2396 = vmatpush1.msra.mxu0 0.0
    %2397 = vmatprep.subr.mxu0 0.0
    %2398 = vmatpush1.msra.mxu0 0.0
    %2399 = vmatprep.subr.mxu0 0.0
    %2400 = vmatpush1.msra.mxu0 0.0
    %2401 = vmatprep.subr.mxu0 0.0
    %2402 = vmatpush1.msra.mxu0 0.0
    %2403 = vmatprep.subr.mxu0 0.0
    %2404 = vmatpush1.msra.mxu0 0.0
    %2405 = vmatprep.subr.mxu0 0.0
    %2406 = vmatpush1.msra.mxu0 0.0
    %2407 = vmatprep.subr.mxu0 0.0
    %2408 = vmatpush1.msra.mxu0 0.0
    %2409 = vmatprep.subr.mxu0 0.0
    %2410 = vmatpush1.msra.mxu0 0.0
    %2411 = vmatprep.subr.mxu0 0.0
    %2412 = vmatpush1.msra.mxu0 0.0
    %2413 = vmatprep.subr.mxu0 0.0
    %2414 = vmatpush1.msra.mxu0 0.0
    %2415 = vmatprep.subr.mxu0 0.0
    %2416 = vmatpush1.msra.mxu0 0.0
    %2417 = vmatprep.mubr.f32.mxu0 0.0
    %2418 = vmatmul.mubr.f32.gmra.mrb[0].mxu0 %v2348
    %v2419 = vpop.f32.mrb[0].mxu0
    %v2420 = vadd.f32 %v2345, %v2419
    %v2421 = vpop.f32.mrb[0].mxu0
    %2422 = vmatprep.mubr.f32.mxu0 0.0
    %2423 = vmatmul.mubr.f32.gmra.mrb[0].mxu0 %v2351
    %v2424 = vpop.f32.mrb[0].mxu0
    %v2425 = vadd.f32 %v2345, %v2424
    %v2426 = vpop.f32.mrb[0].mxu0
    %2427 = vdwg.mxu0
    %v2428 = vadd.f32 %v2420, %v1745
    %v2429 = vadd.f32 %v2425, %v1746
    %s2430 = scalar_lea.vmem %s27, 1
    %v2431 = vld [vmem:[%s2430] sm:$0x1]
    %s2432 = scalar_lea.vmem %s29, 1
    %v2433 = vld [vmem:[%s2432] sm:$0x1]
    %v2434 = vsel %vm888, %v2428, 0.0
    %2435 = vadd.xlane.f32.xlu0 %v2434
    %v2436 = vpop.xlane.xlu0 %2435
    %v2437 = vsel %vm888, %v2429, 0.0
    %2438 = vadd.xlane.f32.xlu0 %v2437
    %v2439 = vpop.xlane.xlu0 %2438
    %v2440 = vmul.f32 %v2436, %v1095
    %v2441 = vmul.f32 %v2439, %v1095
    %v2442 = vsub.f32 %v2428, %v2440
    %v2443 = vsub.f32 %v2429, %v2441
    %v2444 = vmul.f32 %v2442, %v2442
    %v2445 = vmul.f32 %v2443, %v2443
    %v2446 = vsel %vm888, %v2444, 0.0
    %2447 = vadd.xlane.f32.xlu0 %v2446
    %v2448 = vpop.xlane.xlu0 %2447
    %v2449 = vsel %vm888, %v2445, 0.0
    %2450 = vadd.xlane.f32.xlu0 %v2449
    %v2451 = vpop.xlane.xlu0 %2450
    %v2452 = vmul.f32 %v2448, %v1095
    %v2453 = vmul.f32 %v2451, %v1095
    %v2454 = vadd.f32 %v2452, 1e-05
    %v2455 = vadd.f32 %v2453, 1e-05
    %v2456 = vrsqrt.pop %v2454
    %v2457 = vrsqrt.pop %v2455
    %v2458 = vmul.f32 %v2442, %v2456
    %v2459 = vmul.f32 %v2443, %v2457
    %v2461 = vlaneseq
    %v2462 = vshrl.u32 %v2461, 7
    %v2463 = vsub.s32 0, %v2462
    %v2464 = vrot.slane %v2431, %v2463
    %v2466 = vmul.f32 %v2458, %v2464
    %v2467 = vmul.f32 %v2459, %v2464
    %v2469 = vlaneseq
    %v2470 = vshrl.u32 %v2469, 7
    %v2471 = vsub.s32 0, %v2470
    %v2472 = vrot.slane %v2433, %v2471
    %v2474 = vadd.f32 %v2466, %v2472
    %v2475 = vadd.f32 %v2467, %v2472
    %s2476 = scalar_lea.vmem %s43, 32
    %v2477 = vld [vmem:[%s2476] sm:$0xff]
    %v2478 = vld [vmem:[%s2476 + $0x8] sm:$0xff]
    %v2479 = vld [vmem:[%s2476 + $0x10] sm:$0xff]
    %v2480 = vld [vmem:[%s2476 + $0x18] sm:$0xff]
    %s2481 = scalar_lea.vmem %s45, 1
    %v2482 = vld [vmem:[%s2481] sm:$0x1]
    %v2484 = vlaneseq
    %v2485 = vshrl.u32 %v2484, 7
    %v2486 = vsub.s32 0, %v2485
    %v2487 = vrot.slane %v2482, %v2486
    %v2490 = vsel %vm888, %v2474, 0
    %v2493 = vsel %vm888, %v2475, 0
    %2495 = vmatprep.subr.mxu0 0.0
    %2496 = vmatpush1.msra.mxu0 %v2477
    %2497 = vmatprep.subr.mxu0 0.0
    %2498 = vmatpush1.msra.mxu0 %v2478
    %2499 = vmatprep.subr.mxu0 0.0
    %2500 = vmatpush1.msra.mxu0 %v2479
    %2501 = vmatprep.subr.mxu0 0.0
    %2502 = vmatpush1.msra.mxu0 %v2480
    %2503 = vmatprep.subr.mxu0 0.0
    %2504 = vmatpush1.msra.mxu0 0.0
    %2505 = vmatprep.subr.mxu0 0.0
    %2506 = vmatpush1.msra.mxu0 0.0
    %2507 = vmatprep.subr.mxu0 0.0
    %2508 = vmatpush1.msra.mxu0 0.0
    %2509 = vmatprep.subr.mxu0 0.0
    %2510 = vmatpush1.msra.mxu0 0.0
    %2511 = vmatprep.subr.mxu0 0.0
    %2512 = vmatpush1.msra.mxu0 0.0
    %2513 = vmatprep.subr.mxu0 0.0
    %2514 = vmatpush1.msra.mxu0 0.0
    %2515 = vmatprep.subr.mxu0 0.0
    %2516 = vmatpush1.msra.mxu0 0.0
    %2517 = vmatprep.subr.mxu0 0.0
    %2518 = vmatpush1.msra.mxu0 0.0
    %2519 = vmatprep.subr.mxu0 0.0
    %2520 = vmatpush1.msra.mxu0 0.0
    %2521 = vmatprep.subr.mxu0 0.0
    %2522 = vmatpush1.msra.mxu0 0.0
    %2523 = vmatprep.subr.mxu0 0.0
    %2524 = vmatpush1.msra.mxu0 0.0
    %2525 = vmatprep.subr.mxu0 0.0
    %2526 = vmatpush1.msra.mxu0 0.0
    %2527 = vmatprep.subr.mxu0 0.0
    %2528 = vmatpush1.msra.mxu0 0.0
    %2529 = vmatprep.subr.mxu0 0.0
    %2530 = vmatpush1.msra.mxu0 0.0
    %2531 = vmatprep.subr.mxu0 0.0
    %2532 = vmatpush1.msra.mxu0 0.0
    %2533 = vmatprep.subr.mxu0 0.0
    %2534 = vmatpush1.msra.mxu0 0.0
    %2535 = vmatprep.subr.mxu0 0.0
    %2536 = vmatpush1.msra.mxu0 0.0
    %2537 = vmatprep.subr.mxu0 0.0
    %2538 = vmatpush1.msra.mxu0 0.0
    %2539 = vmatprep.subr.mxu0 0.0
    %2540 = vmatpush1.msra.mxu0 0.0
    %2541 = vmatprep.subr.mxu0 0.0
    %2542 = vmatpush1.msra.mxu0 0.0
    %2543 = vmatprep.subr.mxu0 0.0
    %2544 = vmatpush1.msra.mxu0 0.0
    %2545 = vmatprep.subr.mxu0 0.0
    %2546 = vmatpush1.msra.mxu0 0.0
    %2547 = vmatprep.subr.mxu0 0.0
    %2548 = vmatpush1.msra.mxu0 0.0
    %2549 = vmatprep.subr.mxu0 0.0
    %2550 = vmatpush1.msra.mxu0 0.0
    %2551 = vmatprep.subr.mxu0 0.0
    %2552 = vmatpush1.msra.mxu0 0.0
    %2553 = vmatprep.subr.mxu0 0.0
    %2554 = vmatpush1.msra.mxu0 0.0
    %2555 = vmatprep.subr.mxu0 0.0
    %2556 = vmatpush1.msra.mxu0 0.0
    %2557 = vmatprep.subr.mxu0 0.0
    %2558 = vmatpush1.msra.mxu0 0.0
    %2559 = vmatprep.mubr.f32.mxu0 0.0
    %2560 = vmatmul.mubr.f32.gmra.mrb[0].mxu0 %v2490
    %v2561 = vpop.f32.mrb[0].mxu0
    %v2562 = vadd.f32 %v2487, %v2561
    %v2563 = vpop.f32.mrb[0].mxu0
    %2564 = vmatprep.mubr.f32.mxu0 0.0
    %2565 = vmatmul.mubr.f32.gmra.mrb[0].mxu0 %v2493
    %v2566 = vpop.f32.mrb[0].mxu0
    %v2567 = vadd.f32 %v2487, %v2566
    %v2568 = vpop.f32.mrb[0].mxu0
    %2569 = vdwg.mxu0
    %v2570 = vxor.u32 %v2562, 2147483648
    %v2571 = vxor.u32 %v2567, 2147483648
    %v2572 = vmul.f32 %v2570, 1.442695
    %v2573 = vpow.pop %v2572
    %v2574 = vmul.f32 %v2571, 1.442695
    %v2575 = vpow.pop %v2574
    %v2576 = vadd.f32 %v2573, 1.0
    %v2577 = vadd.f32 %v2575, 1.0
    %v2578 = vrcp.pop %v2576
    %v2579 = vmul.f32 1.0, %v2578
    %v2580 = vrcp.pop %v2577
    %v2581 = vmul.f32 1.0, %v2580
    %v2582 = vmul.f32 %v2579, %v2474
    %v2583 = vmul.f32 %v2581, %v2475
    %2584 = vxpose.xlu0.b32.start [1/16] %v2582, 128
    %2585 = vxpose.xlu0.b32.cont [2/16] 0.0, 128
    %2586 = vxpose.xlu0.b32.cont [3/16] 0.0, 128
    %2587 = vxpose.xlu0.b32.cont [4/16] 0.0, 128
    %2588 = vxpose.xlu0.b32.cont [5/16] 0.0, 128
    %2589 = vxpose.xlu0.b32.cont [6/16] 0.0, 128
    %2590 = vxpose.xlu0.b32.cont [7/16] 0.0, 128
    %2591 = vxpose.xlu0.b32.cont [8/16] 0.0, 128
    %2592 = vxpose.xlu0.b32.cont [9/16] 0.0, 128
    %2593 = vxpose.xlu0.b32.cont [10/16] 0.0, 128
    %2594 = vxpose.xlu0.b32.cont [11/16] 0.0, 128
    %2595 = vxpose.xlu0.b32.cont [12/16] 0.0, 128
    %2596 = vxpose.xlu0.b32.cont [13/16] 0.0, 128
    %2597 = vxpose.xlu0.b32.cont [14/16] 0.0, 128
    %2598 = vxpose.xlu0.b32.cont [15/16] 0.0, 128
    %2599 = vxpose.xlu0.b32.end [16/16] 0.0, 128
    %v2600 = vpop.trf.xlu0
    %v2601 = vpop.trf.xlu0
    %v2602 = vpop.trf.xlu0
    %v2603 = vpop.trf.xlu0
    %v2604 = vpop.trf.xlu0
    %v2605 = vpop.trf.xlu0
    %v2606 = vpop.trf.xlu0
    %v2607 = vpop.trf.xlu0
    %v2608 = vpop.trf.xlu0
    %v2609 = vpop.trf.xlu0
    %v2610 = vpop.trf.xlu0
    %v2611 = vpop.trf.xlu0
    %v2612 = vpop.trf.xlu0
    %v2613 = vpop.trf.xlu0
    %v2614 = vpop.trf.xlu0
    %v2615 = vpop.trf.xlu0
    %2616 = vxpose.xlu0.b32.start [1/16] %v2583, 128
    %2617 = vxpose.xlu0.b32.cont [2/16] 0.0, 128
    %2618 = vxpose.xlu0.b32.cont [3/16] 0.0, 128
    %2619 = vxpose.xlu0.b32.cont [4/16] 0.0, 128
    %2620 = vxpose.xlu0.b32.cont [5/16] 0.0, 128
    %2621 = vxpose.xlu0.b32.cont [6/16] 0.0, 128
    %2622 = vxpose.xlu0.b32.cont [7/16] 0.0, 128
    %2623 = vxpose.xlu0.b32.cont [8/16] 0.0, 128
    %2624 = vxpose.xlu0.b32.cont [9/16] 0.0, 128
    %2625 = vxpose.xlu0.b32.cont [10/16] 0.0, 128
    %2626 = vxpose.xlu0.b32.cont [11/16] 0.0, 128
    %2627 = vxpose.xlu0.b32.cont [12/16] 0.0, 128
    %2628 = vxpose.xlu0.b32.cont [13/16] 0.0, 128
    %2629 = vxpose.xlu0.b32.cont [14/16] 0.0, 128
    %2630 = vxpose.xlu0.b32.cont [15/16] 0.0, 128
    %2631 = vxpose.xlu0.b32.end [16/16] 0.0, 128
    %v2632 = vpop.trf.xlu0
    %v2633 = vpop.trf.xlu0
    %v2634 = vpop.trf.xlu0
    %v2635 = vpop.trf.xlu0
    %v2636 = vpop.trf.xlu0
    %v2637 = vpop.trf.xlu0
    %v2638 = vpop.trf.xlu0
    %v2639 = vpop.trf.xlu0
    %v2640 = vpop.trf.xlu0
    %v2641 = vpop.trf.xlu0
    %v2642 = vpop.trf.xlu0
    %v2643 = vpop.trf.xlu0
    %v2644 = vpop.trf.xlu0
    %v2645 = vpop.trf.xlu0
    %v2646 = vpop.trf.xlu0
    %v2647 = vpop.trf.xlu0
    %v2648 = vadd.f32 %v2210, %v2600
    %v2649 = vadd.f32 %v2211, %v2601
    %v2650 = vadd.f32 %v2212, %v2602
    %v2651 = vadd.f32 %v2213, %v2603
    %v2652 = vadd.f32 %v2214, %v2632
    %v2653 = vadd.f32 %v2215, %v2633
    %v2654 = vadd.f32 %v2216, %v2634
    %v2655 = vadd.f32 %v2217, %v2635
    %s2656 = scalar_lea.vmem %s31, 1
    %v2657 = vld [vmem:[%s2656] sm:$0x1]
    %s2658 = scalar_lea.vmem %s33, 1
    %v2659 = vld [vmem:[%s2658] sm:$0x1]
    %v2660 = vsel %vm240, %v2648, 0.0
    %2661 = vadd.xlane.f32.xlu0 %v2660
    %v2662 = vpop.xlane.xlu0 %2661
    %v2663 = vsel %vm240, %v2649, 0.0
    %2664 = vadd.xlane.f32.xlu0 %v2663
    %v2665 = vpop.xlane.xlu0 %2664
    %v2666 = vsel %vm240, %v2650, 0.0
    %2667 = vadd.xlane.f32.xlu0 %v2666
    %v2668 = vpop.xlane.xlu0 %2667
    %v2669 = vsel %vm240, %v2651, 0.0
    %2670 = vadd.xlane.f32.xlu0 %v2669
    %v2671 = vpop.xlane.xlu0 %2670
    %v2672 = vsel %vm240, %v2652, 0.0
    %2673 = vadd.xlane.f32.xlu0 %v2672
    %v2674 = vpop.xlane.xlu0 %2673
    %v2675 = vsel %vm240, %v2653, 0.0
    %2676 = vadd.xlane.f32.xlu0 %v2675
    %v2677 = vpop.xlane.xlu0 %2676
    %v2678 = vsel %vm240, %v2654, 0.0
    %2679 = vadd.xlane.f32.xlu0 %v2678
    %v2680 = vpop.xlane.xlu0 %2679
    %v2681 = vsel %vm240, %v2655, 0.0
    %2682 = vadd.xlane.f32.xlu0 %v2681
    %v2683 = vpop.xlane.xlu0 %2682
    %v2684 = vmul.f32 %v2662, %v768
    %v2685 = vmul.f32 %v2665, %v768
    %v2686 = vmul.f32 %v2668, %v768
    %v2687 = vmul.f32 %v2671, %v768
    %v2688 = vmul.f32 %v2674, %v768
    %v2689 = vmul.f32 %v2677, %v768
    %v2690 = vmul.f32 %v2680, %v768
    %v2691 = vmul.f32 %v2683, %v768
    %v2692 = vsub.f32 %v2648, %v2684
    %v2693 = vsub.f32 %v2649, %v2685
    %v2694 = vsub.f32 %v2650, %v2686
    %v2695 = vsub.f32 %v2651, %v2687
    %v2696 = vsub.f32 %v2652, %v2688
    %v2697 = vsub.f32 %v2653, %v2689
    %v2698 = vsub.f32 %v2654, %v2690
    %v2699 = vsub.f32 %v2655, %v2691
    %v2700 = vmul.f32 %v2692, %v2692
    %v2701 = vmul.f32 %v2693, %v2693
    %v2702 = vmul.f32 %v2694, %v2694
    %v2703 = vmul.f32 %v2695, %v2695
    %v2704 = vmul.f32 %v2696, %v2696
    %v2705 = vmul.f32 %v2697, %v2697
    %v2706 = vmul.f32 %v2698, %v2698
    %v2707 = vmul.f32 %v2699, %v2699
    %v2708 = vsel %vm240, %v2700, 0.0
    %2709 = vadd.xlane.f32.xlu0 %v2708
    %v2710 = vpop.xlane.xlu0 %2709
    %v2711 = vsel %vm240, %v2701, 0.0
    %2712 = vadd.xlane.f32.xlu0 %v2711
    %v2713 = vpop.xlane.xlu0 %2712
    %v2714 = vsel %vm240, %v2702, 0.0
    %2715 = vadd.xlane.f32.xlu0 %v2714
    %v2716 = vpop.xlane.xlu0 %2715
    %v2717 = vsel %vm240, %v2703, 0.0
    %2718 = vadd.xlane.f32.xlu0 %v2717
    %v2719 = vpop.xlane.xlu0 %2718
    %v2720 = vsel %vm240, %v2704, 0.0
    %2721 = vadd.xlane.f32.xlu0 %v2720
    %v2722 = vpop.xlane.xlu0 %2721
    %v2723 = vsel %vm240, %v2705, 0.0
    %2724 = vadd.xlane.f32.xlu0 %v2723
    %v2725 = vpop.xlane.xlu0 %2724
    %v2726 = vsel %vm240, %v2706, 0.0
    %2727 = vadd.xlane.f32.xlu0 %v2726
    %v2728 = vpop.xlane.xlu0 %2727
    %v2729 = vsel %vm240, %v2707, 0.0
    %2730 = vadd.xlane.f32.xlu0 %v2729
    %v2731 = vpop.xlane.xlu0 %2730
    %v2732 = vmul.f32 %v2710, %v768
    %v2733 = vmul.f32 %v2713, %v768
    %v2734 = vmul.f32 %v2716, %v768
    %v2735 = vmul.f32 %v2719, %v768
    %v2736 = vmul.f32 %v2722, %v768
    %v2737 = vmul.f32 %v2725, %v768
    %v2738 = vmul.f32 %v2728, %v768
    %v2739 = vmul.f32 %v2731, %v768
    %v2740 = vadd.f32 %v2732, 1e-05
    %v2741 = vadd.f32 %v2733, 1e-05
    %v2742 = vadd.f32 %v2734, 1e-05
    %v2743 = vadd.f32 %v2735, 1e-05
    %v2744 = vadd.f32 %v2736, 1e-05
    %v2745 = vadd.f32 %v2737, 1e-05
    %v2746 = vadd.f32 %v2738, 1e-05
    %v2747 = vadd.f32 %v2739, 1e-05
    %v2748 = vrsqrt.pop %v2740
    %v2749 = vrsqrt.pop %v2741
    %v2750 = vrsqrt.pop %v2742
    %v2751 = vrsqrt.pop %v2743
    %v2752 = vrsqrt.pop %v2744
    %v2753 = vrsqrt.pop %v2745
    %v2754 = vrsqrt.pop %v2746
    %v2755 = vrsqrt.pop %v2747
    %v2756 = vmul.f32 %v2692, %v2748
    %v2757 = vmul.f32 %v2693, %v2749
    %v2758 = vmul.f32 %v2694, %v2750
    %v2759 = vmul.f32 %v2695, %v2751
    %v2760 = vmul.f32 %v2696, %v2752
    %v2761 = vmul.f32 %v2697, %v2753
    %v2762 = vmul.f32 %v2698, %v2754
    %v2763 = vmul.f32 %v2699, %v2755
    %v2765 = vlaneseq
    %v2766 = vshrl.u32 %v2765, 7
    %v2767 = vsub.s32 0, %v2766
    %v2768 = vrot.slane %v2657, %v2767
    %v2770 = vmul.f32 %v2756, %v2768
    %v2771 = vmul.f32 %v2757, %v2768
    %v2772 = vmul.f32 %v2758, %v2768
    %v2773 = vmul.f32 %v2759, %v2768
    %v2774 = vmul.f32 %v2760, %v2768
    %v2775 = vmul.f32 %v2761, %v2768
    %v2776 = vmul.f32 %v2762, %v2768
    %v2777 = vmul.f32 %v2763, %v2768
    %v2779 = vlaneseq
    %v2780 = vshrl.u32 %v2779, 7
    %v2781 = vsub.s32 0, %v2780
    %v2782 = vrot.slane %v2659, %v2781
    %v2784 = vadd.f32 %v2770, %v2782
    %v2785 = vadd.f32 %v2771, %v2782
    %v2786 = vadd.f32 %v2772, %v2782
    %v2787 = vadd.f32 %v2773, %v2782
    %v2788 = vadd.f32 %v2774, %v2782
    %v2789 = vadd.f32 %v2775, %v2782
    %v2790 = vadd.f32 %v2776, %v2782
    %v2791 = vadd.f32 %v2777, %v2782
    %s2792 = scalar_lea.vmem %s39, 8
    %v2793 = vld [vmem:[%s2792] sm:$0xff]
    %s2794 = scalar_lea.vmem %s41, 1
    %v2795 = vld [vmem:[%s2794] sm:$0x1]
    %v2797 = vlaneseq
    %v2798 = vshrl.u32 %v2797, 7
    %v2799 = vsub.s32 0, %v2798
    %v2800 = vrot.slane %v2795, %v2799
    %v2803 = vsel %vm240, %v2784, 0
    %v2806 = vsel %vm240, %v2785, 0
    %v2809 = vsel %vm240, %v2786, 0
    %v2812 = vsel %vm240, %v2787, 0
    %v2815 = vsel %vm240, %v2788, 0
    %v2818 = vsel %vm240, %v2789, 0
    %v2821 = vsel %vm240, %v2790, 0
    %v2824 = vsel %vm240, %v2791, 0
    %2826 = vmatprep.subr.mxu0 0.0
    %2827 = vmatpush1.msra.mxu0 %v2793
    %2828 = vmatprep.subr.mxu0 0.0
    %2829 = vmatpush1.msra.mxu0 0.0
    %2830 = vmatprep.subr.mxu0 0.0
    %2831 = vmatpush1.msra.mxu0 0.0
    %2832 = vmatprep.subr.mxu0 0.0
    %2833 = vmatpush1.msra.mxu0 0.0
    %2834 = vmatprep.subr.mxu0 0.0
    %2835 = vmatpush1.msra.mxu0 0.0
    %2836 = vmatprep.subr.mxu0 0.0
    %2837 = vmatpush1.msra.mxu0 0.0
    %2838 = vmatprep.subr.mxu0 0.0
    %2839 = vmatpush1.msra.mxu0 0.0
    %2840 = vmatprep.subr.mxu0 0.0
    %2841 = vmatpush1.msra.mxu0 0.0
    %2842 = vmatprep.subr.mxu0 0.0
    %2843 = vmatpush1.msra.mxu0 0.0
    %2844 = vmatprep.subr.mxu0 0.0
    %2845 = vmatpush1.msra.mxu0 0.0
    %2846 = vmatprep.subr.mxu0 0.0
    %2847 = vmatpush1.msra.mxu0 0.0
    %2848 = vmatprep.subr.mxu0 0.0
    %2849 = vmatpush1.msra.mxu0 0.0
    %2850 = vmatprep.subr.mxu0 0.0
    %2851 = vmatpush1.msra.mxu0 0.0
    %2852 = vmatprep.subr.mxu0 0.0
    %2853 = vmatpush1.msra.mxu0 0.0
    %2854 = vmatprep.subr.mxu0 0.0
    %2855 = vmatpush1.msra.mxu0 0.0
    %2856 = vmatprep.subr.mxu0 0.0
    %2857 = vmatpush1.msra.mxu0 0.0
    %2858 = vmatprep.subr.mxu0 0.0
    %2859 = vmatpush1.msra.mxu0 0.0
    %2860 = vmatprep.subr.mxu0 0.0
    %2861 = vmatpush1.msra.mxu0 0.0
    %2862 = vmatprep.subr.mxu0 0.0
    %2863 = vmatpush1.msra.mxu0 0.0
    %2864 = vmatprep.subr.mxu0 0.0
    %2865 = vmatpush1.msra.mxu0 0.0
    %2866 = vmatprep.subr.mxu0 0.0
    %2867 = vmatpush1.msra.mxu0 0.0
    %2868 = vmatprep.subr.mxu0 0.0
    %2869 = vmatpush1.msra.mxu0 0.0
    %2870 = vmatprep.subr.mxu0 0.0
    %2871 = vmatpush1.msra.mxu0 0.0
    %2872 = vmatprep.subr.mxu0 0.0
    %2873 = vmatpush1.msra.mxu0 0.0
    %2874 = vmatprep.subr.mxu0 0.0
    %2875 = vmatpush1.msra.mxu0 0.0
    %2876 = vmatprep.subr.mxu0 0.0
    %2877 = vmatpush1.msra.mxu0 0.0
    %2878 = vmatprep.subr.mxu0 0.0
    %2879 = vmatpush1.msra.mxu0 0.0
    %2880 = vmatprep.subr.mxu0 0.0
    %2881 = vmatpush1.msra.mxu0 0.0
    %2882 = vmatprep.subr.mxu0 0.0
    %2883 = vmatpush1.msra.mxu0 0.0
    %2884 = vmatprep.subr.mxu0 0.0
    %2885 = vmatpush1.msra.mxu0 0.0
    %2886 = vmatprep.subr.mxu0 0.0
    %2887 = vmatpush1.msra.mxu0 0.0
    %2888 = vmatprep.subr.mxu0 0.0
    %2889 = vmatpush1.msra.mxu0 0.0
    %2890 = vmatprep.mubr.f32.mxu0 0.0
    %2891 = vmatmul.mubr.f32.gmra.mrb[0].mxu0 %v2803
    %v2892 = vpop.f32.mrb[0].mxu0
    %v2893 = vadd.f32 %v2800, %v2892
    %v2894 = vpop.f32.mrb[0].mxu0
    %2895 = vmatprep.mubr.f32.mxu0 0.0
    %2896 = vmatmul.mubr.f32.gmra.mrb[0].mxu0 %v2806
    %v2897 = vpop.f32.mrb[0].mxu0
    %v2898 = vadd.f32 %v2800, %v2897
    %v2899 = vpop.f32.mrb[0].mxu0
    %2900 = vmatprep.mubr.f32.mxu0 0.0
    %2901 = vmatmul.mubr.f32.gmra.mrb[0].mxu0 %v2809
    %v2902 = vpop.f32.mrb[0].mxu0
    %v2903 = vadd.f32 %v2800, %v2902
    %v2904 = vpop.f32.mrb[0].mxu0
    %2905 = vmatprep.mubr.f32.mxu0 0.0
    %2906 = vmatmul.mubr.f32.gmra.mrb[0].mxu0 %v2812
    %v2907 = vpop.f32.mrb[0].mxu0
    %v2908 = vadd.f32 %v2800, %v2907
    %v2909 = vpop.f32.mrb[0].mxu0
    %2910 = vmatprep.mubr.f32.mxu0 0.0
    %2911 = vmatmul.mubr.f32.gmra.mrb[0].mxu0 %v2815
    %v2912 = vpop.f32.mrb[0].mxu0
    %v2913 = vadd.f32 %v2800, %v2912
    %v2914 = vpop.f32.mrb[0].mxu0
    %2915 = vmatprep.mubr.f32.mxu0 0.0
    %2916 = vmatmul.mubr.f32.gmra.mrb[0].mxu0 %v2818
    %v2917 = vpop.f32.mrb[0].mxu0
    %v2918 = vadd.f32 %v2800, %v2917
    %v2919 = vpop.f32.mrb[0].mxu0
    %2920 = vmatprep.mubr.f32.mxu0 0.0
    %2921 = vmatmul.mubr.f32.gmra.mrb[0].mxu0 %v2821
    %v2922 = vpop.f32.mrb[0].mxu0
    %v2923 = vadd.f32 %v2800, %v2922
    %v2924 = vpop.f32.mrb[0].mxu0
    %2925 = vmatprep.mubr.f32.mxu0 0.0
    %2926 = vmatmul.mubr.f32.gmra.mrb[0].mxu0 %v2824
    %v2927 = vpop.f32.mrb[0].mxu0
    %v2928 = vadd.f32 %v2800, %v2927
    %v2929 = vpop.f32.mrb[0].mxu0
    %2930 = vdwg.mxu0
    %v2931 = vxor.u32 %v2893, 2147483648
    %v2932 = vxor.u32 %v2898, 2147483648
    %v2933 = vxor.u32 %v2903, 2147483648
    %v2934 = vxor.u32 %v2908, 2147483648
    %v2935 = vxor.u32 %v2913, 2147483648
    %v2936 = vxor.u32 %v2918, 2147483648
    %v2937 = vxor.u32 %v2923, 2147483648
    %v2938 = vxor.u32 %v2928, 2147483648
    %v2939 = vmul.f32 %v2931, 1.442695
    %v2940 = vpow.pop %v2939
    %v2941 = vmul.f32 %v2932, 1.442695
    %v2942 = vpow.pop %v2941
    %v2943 = vmul.f32 %v2933, 1.442695
    %v2944 = vpow.pop %v2943
    %v2945 = vmul.f32 %v2934, 1.442695
    %v2946 = vpow.pop %v2945
    %v2947 = vmul.f32 %v2935, 1.442695
    %v2948 = vpow.pop %v2947
    %v2949 = vmul.f32 %v2936, 1.442695
    %v2950 = vpow.pop %v2949
    %v2951 = vmul.f32 %v2937, 1.442695
    %v2952 = vpow.pop %v2951
    %v2953 = vmul.f32 %v2938, 1.442695
    %v2954 = vpow.pop %v2953
    %v2955 = vadd.f32 %v2940, 1.0
    %v2956 = vadd.f32 %v2942, 1.0
    %v2957 = vadd.f32 %v2944, 1.0
    %v2958 = vadd.f32 %v2946, 1.0
    %v2959 = vadd.f32 %v2948, 1.0
    %v2960 = vadd.f32 %v2950, 1.0
    %v2961 = vadd.f32 %v2952, 1.0
    %v2962 = vadd.f32 %v2954, 1.0
    %v2963 = vrcp.pop %v2955
    %v2964 = vmul.f32 1.0, %v2963
    %v2965 = vrcp.pop %v2956
    %v2966 = vmul.f32 1.0, %v2965
    %v2967 = vrcp.pop %v2957
    %v2968 = vmul.f32 1.0, %v2967
    %v2969 = vrcp.pop %v2958
    %v2970 = vmul.f32 1.0, %v2969
    %v2971 = vrcp.pop %v2959
    %v2972 = vmul.f32 1.0, %v2971
    %v2973 = vrcp.pop %v2960
    %v2974 = vmul.f32 1.0, %v2973
    %v2975 = vrcp.pop %v2961
    %v2976 = vmul.f32 1.0, %v2975
    %v2977 = vrcp.pop %v2962
    %v2978 = vmul.f32 1.0, %v2977
    %v2979 = vmul.f32 %v2964, %v2784
    %v2980 = vmul.f32 %v2966, %v2785
    %v2981 = vmul.f32 %v2968, %v2786
    %v2982 = vmul.f32 %v2970, %v2787
    %v2983 = vmul.f32 %v2972, %v2788
    %v2984 = vmul.f32 %v2974, %v2789
    %v2985 = vmul.f32 %v2976, %v2790
    %v2986 = vmul.f32 %v2978, %v2791
    %2987 = vxpose.xlu0.b32.start [1/16] %v2979, 128
    %2988 = vxpose.xlu0.b32.cont [2/16] %v2980, 128
    %2989 = vxpose.xlu0.b32.cont [3/16] %v2981, 128
    %2990 = vxpose.xlu0.b32.cont [4/16] %v2982, 128
    %2991 = vxpose.xlu0.b32.cont [5/16] 0.0, 128
    %2992 = vxpose.xlu0.b32.cont [6/16] 0.0, 128
    %2993 = vxpose.xlu0.b32.cont [7/16] 0.0, 128
    %2994 = vxpose.xlu0.b32.cont [8/16] 0.0, 128
    %2995 = vxpose.xlu0.b32.cont [9/16] 0.0, 128
    %2996 = vxpose.xlu0.b32.cont [10/16] 0.0, 128
    %2997 = vxpose.xlu0.b32.cont [11/16] 0.0, 128
    %2998 = vxpose.xlu0.b32.cont [12/16] 0.0, 128
    %2999 = vxpose.xlu0.b32.cont [13/16] 0.0, 128
    %3000 = vxpose.xlu0.b32.cont [14/16] 0.0, 128
    %3001 = vxpose.xlu0.b32.cont [15/16] 0.0, 128
    %3002 = vxpose.xlu0.b32.end [16/16] 0.0, 128
    %v3003 = vpop.trf.xlu0
    %v3004 = vpop.trf.xlu0
    %v3005 = vpop.trf.xlu0
    %v3006 = vpop.trf.xlu0
    %v3007 = vpop.trf.xlu0
    %v3008 = vpop.trf.xlu0
    %v3009 = vpop.trf.xlu0
    %v3010 = vpop.trf.xlu0
    %v3011 = vpop.trf.xlu0
    %v3012 = vpop.trf.xlu0
    %v3013 = vpop.trf.xlu0
    %v3014 = vpop.trf.xlu0
    %v3015 = vpop.trf.xlu0
    %v3016 = vpop.trf.xlu0
    %v3017 = vpop.trf.xlu0
    %v3018 = vpop.trf.xlu0
    %3019 = vxpose.xlu0.b32.start [1/16] %v2983, 128
    %3020 = vxpose.xlu0.b32.cont [2/16] %v2984, 128
    %3021 = vxpose.xlu0.b32.cont [3/16] %v2985, 128
    %3022 = vxpose.xlu0.b32.cont [4/16] %v2986, 128
    %3023 = vxpose.xlu0.b32.cont [5/16] 0.0, 128
    %3024 = vxpose.xlu0.b32.cont [6/16] 0.0, 128
    %3025 = vxpose.xlu0.b32.cont [7/16] 0.0, 128
    %3026 = vxpose.xlu0.b32.cont [8/16] 0.0, 128
    %3027 = vxpose.xlu0.b32.cont [9/16] 0.0, 128
    %3028 = vxpose.xlu0.b32.cont [10/16] 0.0, 128
    %3029 = vxpose.xlu0.b32.cont [11/16] 0.0, 128
    %3030 = vxpose.xlu0.b32.cont [12/16] 0.0, 128
    %3031 = vxpose.xlu0.b32.cont [13/16] 0.0, 128
    %3032 = vxpose.xlu0.b32.cont [14/16] 0.0, 128
    %3033 = vxpose.xlu0.b32.cont [15/16] 0.0, 128
    %3034 = vxpose.xlu0.b32.end [16/16] 0.0, 128
    %v3035 = vpop.trf.xlu0
    %v3036 = vpop.trf.xlu0
    %v3037 = vpop.trf.xlu0
    %v3038 = vpop.trf.xlu0
    %v3039 = vpop.trf.xlu0
    %v3040 = vpop.trf.xlu0
    %v3041 = vpop.trf.xlu0
    %v3042 = vpop.trf.xlu0
    %v3043 = vpop.trf.xlu0
    %v3044 = vpop.trf.xlu0
    %v3045 = vpop.trf.xlu0
    %v3046 = vpop.trf.xlu0
    %v3047 = vpop.trf.xlu0
    %v3048 = vpop.trf.xlu0
    %v3049 = vpop.trf.xlu0
    %v3050 = vpop.trf.xlu0
    %v3051 = vadd.f32 %v2474, %v3003
    %v3052 = vadd.f32 %v2475, %v3035
    %s3053 = scalar_lea.vmem %s35, 1
    %v3054 = vld [vmem:[%s3053] sm:$0x1]
    %s3055 = scalar_lea.vmem %s37, 1
    %v3056 = vld [vmem:[%s3055] sm:$0x1]
    %v3057 = vsel %vm888, %v3051, 0.0
    %3058 = vadd.xlane.f32.xlu0 %v3057
    %v3059 = vpop.xlane.xlu0 %3058
    %v3060 = vsel %vm888, %v3052, 0.0
    %3061 = vadd.xlane.f32.xlu0 %v3060
    %v3062 = vpop.xlane.xlu0 %3061
    %v3063 = vmul.f32 %v3059, %v1095
    %v3064 = vmul.f32 %v3062, %v1095
    %v3065 = vsub.f32 %v3051, %v3063
    %v3066 = vsub.f32 %v3052, %v3064
    %v3067 = vmul.f32 %v3065, %v3065
    %v3068 = vmul.f32 %v3066, %v3066
    %v3069 = vsel %vm888, %v3067, 0.0
    %3070 = vadd.xlane.f32.xlu0 %v3069
    %v3071 = vpop.xlane.xlu0 %3070
    %v3072 = vsel %vm888, %v3068, 0.0
    %3073 = vadd.xlane.f32.xlu0 %v3072
    %v3074 = vpop.xlane.xlu0 %3073
    %v3075 = vmul.f32 %v3071, %v1095
    %v3076 = vmul.f32 %v3074, %v1095
    %v3077 = vadd.f32 %v3075, 1e-05
    %v3078 = vadd.f32 %v3076, 1e-05
    %v3079 = vrsqrt.pop %v3077
    %v3080 = vrsqrt.pop %v3078
    %v3081 = vmul.f32 %v3065, %v3079
    %v3082 = vmul.f32 %v3066, %v3080
    %v3084 = vlaneseq
    %v3085 = vshrl.u32 %v3084, 7
    %v3086 = vsub.s32 0, %v3085
    %v3087 = vrot.slane %v3054, %v3086
    %v3089 = vmul.f32 %v3081, %v3087
    %v3090 = vmul.f32 %v3082, %v3087
    %v3092 = vlaneseq
    %v3093 = vshrl.u32 %v3092, 7
    %v3094 = vsub.s32 0, %v3093
    %v3095 = vrot.slane %v3056, %v3094
    %v3097 = vadd.f32 %v3089, %v3095
    %v3098 = vadd.f32 %v3090, %v3095
    %v3099 = vld [vmem:[%s47] sm:$0xff]
    %v3100 = vld [vmem:[%s49] sm:$0x1]
    %v3102 = vlaneseq
    %v3103 = vshrl.u32 %v3102, 7
    %v3104 = vsub.s32 0, %v3103
    %v3105 = vrot.slane %v3100, %v3104
    %3107 = vmatprep.subr.mxu0 0.0
    %3108 = vmatpush1.msra.mxu0 %v3099
    %3109 = vmatprep.subr.mxu0 0.0
    %3110 = vmatpush1.msra.mxu0 0.0
    %3111 = vmatprep.subr.mxu0 0.0
    %3112 = vmatpush1.msra.mxu0 0.0
    %3113 = vmatprep.subr.mxu0 0.0
    %3114 = vmatpush1.msra.mxu0 0.0
    %3115 = vmatprep.subr.mxu0 0.0
    %3116 = vmatpush1.msra.mxu0 0.0
    %3117 = vmatprep.subr.mxu0 0.0
    %3118 = vmatpush1.msra.mxu0 0.0
    %3119 = vmatprep.subr.mxu0 0.0
    %3120 = vmatpush1.msra.mxu0 0.0
    %3121 = vmatprep.subr.mxu0 0.0
    %3122 = vmatpush1.msra.mxu0 0.0
    %3123 = vmatprep.subr.mxu0 0.0
    %3124 = vmatpush1.msra.mxu0 0.0
    %3125 = vmatprep.subr.mxu0 0.0
    %3126 = vmatpush1.msra.mxu0 0.0
    %3127 = vmatprep.subr.mxu0 0.0
    %3128 = vmatpush1.msra.mxu0 0.0
    %3129 = vmatprep.subr.mxu0 0.0
    %3130 = vmatpush1.msra.mxu0 0.0
    %3131 = vmatprep.subr.mxu0 0.0
    %3132 = vmatpush1.msra.mxu0 0.0
    %3133 = vmatprep.subr.mxu0 0.0
    %3134 = vmatpush1.msra.mxu0 0.0
    %3135 = vmatprep.subr.mxu0 0.0
    %3136 = vmatpush1.msra.mxu0 0.0
    %3137 = vmatprep.subr.mxu0 0.0
    %3138 = vmatpush1.msra.mxu0 0.0
    %3139 = vmatprep.subr.mxu0 0.0
    %3140 = vmatpush1.msra.mxu0 0.0
    %3141 = vmatprep.subr.mxu0 0.0
    %3142 = vmatpush1.msra.mxu0 0.0
    %3143 = vmatprep.subr.mxu0 0.0
    %3144 = vmatpush1.msra.mxu0 0.0
    %3145 = vmatprep.subr.mxu0 0.0
    %3146 = vmatpush1.msra.mxu0 0.0
    %3147 = vmatprep.subr.mxu0 0.0
    %3148 = vmatpush1.msra.mxu0 0.0
    %3149 = vmatprep.subr.mxu0 0.0
    %3150 = vmatpush1.msra.mxu0 0.0
    %3151 = vmatprep.subr.mxu0 0.0
    %3152 = vmatpush1.msra.mxu0 0.0
    %3153 = vmatprep.subr.mxu0 0.0
    %3154 = vmatpush1.msra.mxu0 0.0
    %3155 = vmatprep.subr.mxu0 0.0
    %3156 = vmatpush1.msra.mxu0 0.0
    %3157 = vmatprep.subr.mxu0 0.0
    %3158 = vmatpush1.msra.mxu0 0.0
    %3159 = vmatprep.subr.mxu0 0.0
    %3160 = vmatpush1.msra.mxu0 0.0
    %3161 = vmatprep.subr.mxu0 0.0
    %3162 = vmatpush1.msra.mxu0 0.0
    %3163 = vmatprep.subr.mxu0 0.0
    %3164 = vmatpush1.msra.mxu0 0.0
    %3165 = vmatprep.subr.mxu0 0.0
    %3166 = vmatpush1.msra.mxu0 0.0
    %3167 = vmatprep.subr.mxu0 0.0
    %3168 = vmatpush1.msra.mxu0 0.0
    %3169 = vmatprep.subr.mxu0 0.0
    %3170 = vmatpush1.msra.mxu0 0.0
    %3171 = vmatprep.mubr.f32.mxu0 0.0
    %3172 = vmatmul.mubr.f32.gmra.mrb[0].mxu0 %v2803
    %v3173 = vpop.f32.mrb[0].mxu0
    %v3174 = vadd.f32 %v3105, %v3173
    %v3175 = vpop.f32.mrb[0].mxu0
    %3176 = vmatprep.mubr.f32.mxu0 0.0
    %3177 = vmatmul.mubr.f32.gmra.mrb[0].mxu0 %v2806
    %v3178 = vpop.f32.mrb[0].mxu0
    %v3179 = vadd.f32 %v3105, %v3178
    %v3180 = vpop.f32.mrb[0].mxu0
    %3181 = vmatprep.mubr.f32.mxu0 0.0
    %3182 = vmatmul.mubr.f32.gmra.mrb[0].mxu0 %v2809
    %v3183 = vpop.f32.mrb[0].mxu0
    %v3184 = vadd.f32 %v3105, %v3183
    %v3185 = vpop.f32.mrb[0].mxu0
    %3186 = vmatprep.mubr.f32.mxu0 0.0
    %3187 = vmatmul.mubr.f32.gmra.mrb[0].mxu0 %v2812
    %v3188 = vpop.f32.mrb[0].mxu0
    %v3189 = vadd.f32 %v3105, %v3188
    %v3190 = vpop.f32.mrb[0].mxu0
    %3191 = vmatprep.mubr.f32.mxu0 0.0
    %3192 = vmatmul.mubr.f32.gmra.mrb[0].mxu0 %v2815
    %v3193 = vpop.f32.mrb[0].mxu0
    %v3194 = vadd.f32 %v3105, %v3193
    %v3195 = vpop.f32.mrb[0].mxu0
    %3196 = vmatprep.mubr.f32.mxu0 0.0
    %3197 = vmatmul.mubr.f32.gmra.mrb[0].mxu0 %v2818
    %v3198 = vpop.f32.mrb[0].mxu0
    %v3199 = vadd.f32 %v3105, %v3198
    %v3200 = vpop.f32.mrb[0].mxu0
    %3201 = vmatprep.mubr.f32.mxu0 0.0
    %3202 = vmatmul.mubr.f32.gmra.mrb[0].mxu0 %v2821
    %v3203 = vpop.f32.mrb[0].mxu0
    %v3204 = vadd.f32 %v3105, %v3203
    %v3205 = vpop.f32.mrb[0].mxu0
    %3206 = vmatprep.mubr.f32.mxu0 0.0
    %3207 = vmatmul.mubr.f32.gmra.mrb[0].mxu0 %v2824
    %v3208 = vpop.f32.mrb[0].mxu0
    %v3209 = vadd.f32 %v3105, %v3208
    %v3210 = vpop.f32.mrb[0].mxu0
    %3211 = vdwg.mxu0
    %v3212 = vxor.u32 %v3174, 2147483648
    %v3213 = vxor.u32 %v3179, 2147483648
    %v3214 = vxor.u32 %v3184, 2147483648
    %v3215 = vxor.u32 %v3189, 2147483648
    %v3216 = vxor.u32 %v3194, 2147483648
    %v3217 = vxor.u32 %v3199, 2147483648
    %v3218 = vxor.u32 %v3204, 2147483648
    %v3219 = vxor.u32 %v3209, 2147483648
    %v3220 = vmul.f32 %v3212, 1.442695
    %v3221 = vpow.pop %v3220
    %v3222 = vmul.f32 %v3213, 1.442695
    %v3223 = vpow.pop %v3222
    %v3224 = vmul.f32 %v3214, 1.442695
    %v3225 = vpow.pop %v3224
    %v3226 = vmul.f32 %v3215, 1.442695
    %v3227 = vpow.pop %v3226
    %v3228 = vmul.f32 %v3216, 1.442695
    %v3229 = vpow.pop %v3228
    %v3230 = vmul.f32 %v3217, 1.442695
    %v3231 = vpow.pop %v3230
    %v3232 = vmul.f32 %v3218, 1.442695
    %v3233 = vpow.pop %v3232
    %v3234 = vmul.f32 %v3219, 1.442695
    %v3235 = vpow.pop %v3234
    %v3236 = vadd.f32 %v3221, 1.0
    %v3237 = vadd.f32 %v3223, 1.0
    %v3238 = vadd.f32 %v3225, 1.0
    %v3239 = vadd.f32 %v3227, 1.0
    %v3240 = vadd.f32 %v3229, 1.0
    %v3241 = vadd.f32 %v3231, 1.0
    %v3242 = vadd.f32 %v3233, 1.0
    %v3243 = vadd.f32 %v3235, 1.0
    %v3244 = vrcp.pop %v3236
    %v3245 = vmul.f32 1.0, %v3244
    %v3246 = vrcp.pop %v3237
    %v3247 = vmul.f32 1.0, %v3246
    %v3248 = vrcp.pop %v3238
    %v3249 = vmul.f32 1.0, %v3248
    %v3250 = vrcp.pop %v3239
    %v3251 = vmul.f32 1.0, %v3250
    %v3252 = vrcp.pop %v3240
    %v3253 = vmul.f32 1.0, %v3252
    %v3254 = vrcp.pop %v3241
    %v3255 = vmul.f32 1.0, %v3254
    %v3256 = vrcp.pop %v3242
    %v3257 = vmul.f32 1.0, %v3256
    %v3258 = vrcp.pop %v3243
    %v3259 = vmul.f32 1.0, %v3258
    %v3260 = vmul.f32 %v3245, %v2784
    %v3261 = vmul.f32 %v3247, %v2785
    %v3262 = vmul.f32 %v3249, %v2786
    %v3263 = vmul.f32 %v3251, %v2787
    %v3264 = vmul.f32 %v3253, %v2788
    %v3265 = vmul.f32 %v3255, %v2789
    %v3266 = vmul.f32 %v3257, %v2790
    %v3267 = vmul.f32 %v3259, %v2791
    %v3268 = vld [vmem:[%s51] sm:$0xff]
    %v3269 = vld [vmem:[%s51 + $0x8] sm:$0xff]
    %v3270 = vld [vmem:[%s51 + $0x10] sm:$0xff]
    %v3271 = vld [vmem:[%s51 + $0x18] sm:$0xff]
    %v3272 = vld [vmem:[%s53] sm:$0x1]
    %v3274 = vlaneseq
    %v3275 = vshrl.u32 %v3274, 7
    %v3276 = vsub.s32 0, %v3275
    %v3277 = vrot.slane %v3272, %v3276
    %v3280 = vsel %vm888, %v3097, 0
    %v3283 = vsel %vm888, %v3098, 0
    %3285 = vmatprep.subr.mxu0 0.0
    %3286 = vmatpush1.msra.mxu0 %v3268
    %3287 = vmatprep.subr.mxu0 0.0
    %3288 = vmatpush1.msra.mxu0 %v3269
    %3289 = vmatprep.subr.mxu0 0.0
    %3290 = vmatpush1.msra.mxu0 %v3270
    %3291 = vmatprep.subr.mxu0 0.0
    %3292 = vmatpush1.msra.mxu0 %v3271
    %3293 = vmatprep.subr.mxu0 0.0
    %3294 = vmatpush1.msra.mxu0 0.0
    %3295 = vmatprep.subr.mxu0 0.0
    %3296 = vmatpush1.msra.mxu0 0.0
    %3297 = vmatprep.subr.mxu0 0.0
    %3298 = vmatpush1.msra.mxu0 0.0
    %3299 = vmatprep.subr.mxu0 0.0
    %3300 = vmatpush1.msra.mxu0 0.0
    %3301 = vmatprep.subr.mxu0 0.0
    %3302 = vmatpush1.msra.mxu0 0.0
    %3303 = vmatprep.subr.mxu0 0.0
    %3304 = vmatpush1.msra.mxu0 0.0
    %3305 = vmatprep.subr.mxu0 0.0
    %3306 = vmatpush1.msra.mxu0 0.0
    %3307 = vmatprep.subr.mxu0 0.0
    %3308 = vmatpush1.msra.mxu0 0.0
    %3309 = vmatprep.subr.mxu0 0.0
    %3310 = vmatpush1.msra.mxu0 0.0
    %3311 = vmatprep.subr.mxu0 0.0
    %3312 = vmatpush1.msra.mxu0 0.0
    %3313 = vmatprep.subr.mxu0 0.0
    %3314 = vmatpush1.msra.mxu0 0.0
    %3315 = vmatprep.subr.mxu0 0.0
    %3316 = vmatpush1.msra.mxu0 0.0
    %3317 = vmatprep.subr.mxu0 0.0
    %3318 = vmatpush1.msra.mxu0 0.0
    %3319 = vmatprep.subr.mxu0 0.0
    %3320 = vmatpush1.msra.mxu0 0.0
    %3321 = vmatprep.subr.mxu0 0.0
    %3322 = vmatpush1.msra.mxu0 0.0
    %3323 = vmatprep.subr.mxu0 0.0
    %3324 = vmatpush1.msra.mxu0 0.0
    %3325 = vmatprep.subr.mxu0 0.0
    %3326 = vmatpush1.msra.mxu0 0.0
    %3327 = vmatprep.subr.mxu0 0.0
    %3328 = vmatpush1.msra.mxu0 0.0
    %3329 = vmatprep.subr.mxu0 0.0
    %3330 = vmatpush1.msra.mxu0 0.0
    %3331 = vmatprep.subr.mxu0 0.0
    %3332 = vmatpush1.msra.mxu0 0.0
    %3333 = vmatprep.subr.mxu0 0.0
    %3334 = vmatpush1.msra.mxu0 0.0
    %3335 = vmatprep.subr.mxu0 0.0
    %3336 = vmatpush1.msra.mxu0 0.0
    %3337 = vmatprep.subr.mxu0 0.0
    %3338 = vmatpush1.msra.mxu0 0.0
    %3339 = vmatprep.subr.mxu0 0.0
    %3340 = vmatpush1.msra.mxu0 0.0
    %3341 = vmatprep.subr.mxu0 0.0
    %3342 = vmatpush1.msra.mxu0 0.0
    %3343 = vmatprep.subr.mxu0 0.0
    %3344 = vmatpush1.msra.mxu0 0.0
    %3345 = vmatprep.subr.mxu0 0.0
    %3346 = vmatpush1.msra.mxu0 0.0
    %3347 = vmatprep.subr.mxu0 0.0
    %3348 = vmatpush1.msra.mxu0 0.0
    %3349 = vmatprep.mubr.f32.mxu0 0.0
    %3350 = vmatmul.mubr.f32.gmra.mrb[0].mxu0 %v3280
    %v3351 = vpop.f32.mrb[0].mxu0
    %v3352 = vadd.f32 %v3277, %v3351
    %v3353 = vpop.f32.mrb[0].mxu0
    %3354 = vmatprep.mubr.f32.mxu0 0.0
    %3355 = vmatmul.mubr.f32.gmra.mrb[0].mxu0 %v3283
    %v3356 = vpop.f32.mrb[0].mxu0
    %v3357 = vadd.f32 %v3277, %v3356
    %v3358 = vpop.f32.mrb[0].mxu0
    %3359 = vdwg.mxu0
    %v3360 = vxor.u32 %v3352, 2147483648
    %v3361 = vxor.u32 %v3357, 2147483648
    %v3362 = vmul.f32 %v3360, 1.442695
    %v3363 = vpow.pop %v3362
    %v3364 = vmul.f32 %v3361, 1.442695
    %v3365 = vpow.pop %v3364
    %v3366 = vadd.f32 %v3363, 1.0
    %v3367 = vadd.f32 %v3365, 1.0
    %v3368 = vrcp.pop %v3366
    %v3369 = vmul.f32 1.0, %v3368
    %v3370 = vrcp.pop %v3367
    %v3371 = vmul.f32 1.0, %v3370
    %v3372 = vmul.f32 %v3369, %v3097
    %v3373 = vmul.f32 %v3371, %v3098
    %3374 = vxpose.xlu0.b32.start [1/16] %v3260, 128
    %3375 = vxpose.xlu0.b32.cont [2/16] %v3261, 128
    %3376 = vxpose.xlu0.b32.cont [3/16] %v3262, 128
    %3377 = vxpose.xlu0.b32.cont [4/16] %v3263, 128
    %3378 = vxpose.xlu0.b32.cont [5/16] 0.0, 128
    %3379 = vxpose.xlu0.b32.cont [6/16] 0.0, 128
    %3380 = vxpose.xlu0.b32.cont [7/16] 0.0, 128
    %3381 = vxpose.xlu0.b32.cont [8/16] 0.0, 128
    %3382 = vxpose.xlu0.b32.cont [9/16] 0.0, 128
    %3383 = vxpose.xlu0.b32.cont [10/16] 0.0, 128
    %3384 = vxpose.xlu0.b32.cont [11/16] 0.0, 128
    %3385 = vxpose.xlu0.b32.cont [12/16] 0.0, 128
    %3386 = vxpose.xlu0.b32.cont [13/16] 0.0, 128
    %3387 = vxpose.xlu0.b32.cont [14/16] 0.0, 128
    %3388 = vxpose.xlu0.b32.cont [15/16] 0.0, 128
    %3389 = vxpose.xlu0.b32.end [16/16] 0.0, 128
    %v3390 = vpop.trf.xlu0
    %v3391 = vpop.trf.xlu0
    %v3392 = vpop.trf.xlu0
    %v3393 = vpop.trf.xlu0
    %v3394 = vpop.trf.xlu0
    %v3395 = vpop.trf.xlu0
    %v3396 = vpop.trf.xlu0
    %v3397 = vpop.trf.xlu0
    %v3398 = vpop.trf.xlu0
    %v3399 = vpop.trf.xlu0
    %v3400 = vpop.trf.xlu0
    %v3401 = vpop.trf.xlu0
    %v3402 = vpop.trf.xlu0
    %v3403 = vpop.trf.xlu0
    %v3404 = vpop.trf.xlu0
    %v3405 = vpop.trf.xlu0
    %3406 = vxpose.xlu0.b32.start [1/16] %v3264, 128
    %3407 = vxpose.xlu0.b32.cont [2/16] %v3265, 128
    %3408 = vxpose.xlu0.b32.cont [3/16] %v3266, 128
    %3409 = vxpose.xlu0.b32.cont [4/16] %v3267, 128
    %3410 = vxpose.xlu0.b32.cont [5/16] 0.0, 128
    %3411 = vxpose.xlu0.b32.cont [6/16] 0.0, 128
    %3412 = vxpose.xlu0.b32.cont [7/16] 0.0, 128
    %3413 = vxpose.xlu0.b32.cont [8/16] 0.0, 128
    %3414 = vxpose.xlu0.b32.cont [9/16] 0.0, 128
    %3415 = vxpose.xlu0.b32.cont [10/16] 0.0, 128
    %3416 = vxpose.xlu0.b32.cont [11/16] 0.0, 128
    %3417 = vxpose.xlu0.b32.cont [12/16] 0.0, 128
    %3418 = vxpose.xlu0.b32.cont [13/16] 0.0, 128
    %3419 = vxpose.xlu0.b32.cont [14/16] 0.0, 128
    %3420 = vxpose.xlu0.b32.cont [15/16] 0.0, 128
    %3421 = vxpose.xlu0.b32.end [16/16] 0.0, 128
    %v3422 = vpop.trf.xlu0
    %v3423 = vpop.trf.xlu0
    %v3424 = vpop.trf.xlu0
    %v3425 = vpop.trf.xlu0
    %v3426 = vpop.trf.xlu0
    %v3427 = vpop.trf.xlu0
    %v3428 = vpop.trf.xlu0
    %v3429 = vpop.trf.xlu0
    %v3430 = vpop.trf.xlu0
    %v3431 = vpop.trf.xlu0
    %v3432 = vpop.trf.xlu0
    %v3433 = vpop.trf.xlu0
    %v3434 = vpop.trf.xlu0
    %v3435 = vpop.trf.xlu0
    %v3436 = vpop.trf.xlu0
    %v3437 = vpop.trf.xlu0
    %v3438 = vadd.f32 %v3390, %v3372
    %v3439 = vadd.f32 %v3422, %v3373
    %v3440 = vld [vmem:[%s55] sm:$0xff]
    %v3441 = vmul.f32 %v3438, %v3440
    %v3442 = vmul.f32 %v3439, %v3440
    %v3443 = vsel %vm888, %v3441, 0.0
    %3444 = vadd.xlane.f32.xlu0 %v3443
    %v3445 = vpop.xlane.xlu0 %3444
    %v3446 = vsel %vm888, %v3442, 0.0
    %3447 = vadd.xlane.f32.xlu0 %v3446
    %v3448 = vpop.xlane.xlu0 %3447
    %v3449 = vlaneseq
    %v3450 = vand.u32 %v3449, 127
    %v3451 = vlaneseq
    %v3452 = vshrl.u32 %v3451, 7
    %v3453 = vmul.u32 %v3452, 8
    %vm3454 = vcmp.ge.s32.totalorder %v3450, %v3453
    %v3455 = vadd.s32 %v3452, 1
    %v3456 = vmul.u32 %v3455, 8
    %vm3457 = vcmp.lt.s32.totalorder %v3450, %v3456
    %vm3458 = vmand %vm3454, %vm3457
    %v3459 = vsel %vm3458, 1.0, 0.0
    %v3460 = vld [vmem:[#allocation2] sm:$0x1]
    %v3462 = vlaneseq
    %v3463 = vshrl.u32 %v3462, 7
    %v3464 = vsub.s32 0, %v3463
    %v3465 = vrot.slane %v3460, %v3464
    %v3468 = vsel %vm604, %v3459, 0
    %3470 = vmatprep.subr.mxu0 0.0
    %3471 = vmatpush1.msra.mxu0 %v3445
    %3472 = vmatprep.subr.mxu0 0.0
    %3473 = vmatpush1.msra.mxu0 %v3448
    %3474 = vmatprep.subr.mxu0 0.0
    %3475 = vmatpush1.msra.mxu0 0.0
    %3476 = vmatprep.subr.mxu0 0.0
    %3477 = vmatpush1.msra.mxu0 0.0
    %3478 = vmatprep.subr.mxu0 0.0
    %3479 = vmatpush1.msra.mxu0 0.0
    %3480 = vmatprep.subr.mxu0 0.0
    %3481 = vmatpush1.msra.mxu0 0.0
    %3482 = vmatprep.subr.mxu0 0.0
    %3483 = vmatpush1.msra.mxu0 0.0
    %3484 = vmatprep.subr.mxu0 0.0
    %3485 = vmatpush1.msra.mxu0 0.0
    %3486 = vmatprep.subr.mxu0 0.0
    %3487 = vmatpush1.msra.mxu0 0.0
    %3488 = vmatprep.subr.mxu0 0.0
    %3489 = vmatpush1.msra.mxu0 0.0
    %3490 = vmatprep.subr.mxu0 0.0
    %3491 = vmatpush1.msra.mxu0 0.0
    %3492 = vmatprep.subr.mxu0 0.0
    %3493 = vmatpush1.msra.mxu0 0.0
    %3494 = vmatprep.subr.mxu0 0.0
    %3495 = vmatpush1.msra.mxu0 0.0
    %3496 = vmatprep.subr.mxu0 0.0
    %3497 = vmatpush1.msra.mxu0 0.0
    %3498 = vmatprep.subr.mxu0 0.0
    %3499 = vmatpush1.msra.mxu0 0.0
    %3500 = vmatprep.subr.mxu0 0.0
    %3501 = vmatpush1.msra.mxu0 0.0
    %3502 = vmatprep.subr.mxu0 0.0
    %3503 = vmatpush1.msra.mxu0 0.0
    %3504 = vmatprep.subr.mxu0 0.0
    %3505 = vmatpush1.msra.mxu0 0.0
    %3506 = vmatprep.subr.mxu0 0.0
    %3507 = vmatpush1.msra.mxu0 0.0
    %3508 = vmatprep.subr.mxu0 0.0
    %3509 = vmatpush1.msra.mxu0 0.0
    %3510 = vmatprep.subr.mxu0 0.0
    %3511 = vmatpush1.msra.mxu0 0.0
    %3512 = vmatprep.subr.mxu0 0.0
    %3513 = vmatpush1.msra.mxu0 0.0
    %3514 = vmatprep.subr.mxu0 0.0
    %3515 = vmatpush1.msra.mxu0 0.0
    %3516 = vmatprep.subr.mxu0 0.0
    %3517 = vmatpush1.msra.mxu0 0.0
    %3518 = vmatprep.subr.mxu0 0.0
    %3519 = vmatpush1.msra.mxu0 0.0
    %3520 = vmatprep.subr.mxu0 0.0
    %3521 = vmatpush1.msra.mxu0 0.0
    %3522 = vmatprep.subr.mxu0 0.0
    %3523 = vmatpush1.msra.mxu0 0.0
    %3524 = vmatprep.subr.mxu0 0.0
    %3525 = vmatpush1.msra.mxu0 0.0
    %3526 = vmatprep.subr.mxu0 0.0
    %3527 = vmatpush1.msra.mxu0 0.0
    %3528 = vmatprep.subr.mxu0 0.0
    %3529 = vmatpush1.msra.mxu0 0.0
    %3530 = vmatprep.subr.mxu0 0.0
    %3531 = vmatpush1.msra.mxu0 0.0
    %3532 = vmatprep.subr.mxu0 0.0
    %3533 = vmatpush1.msra.mxu0 0.0
    %3534 = vmatprep.mubr.f32.mxu0 0.0
    %3535 = vmatmul.mubr.f32.gmra.mrb[0].mxu0 %v3468
    %v3536 = vpop.f32.mrb[0].mxu0
    %v3537 = vadd.f32 %v3465, %v3536
    %v3538 = vpop.f32.mrb[0].mxu0
    %3539 = vdwg.mxu0
    %vm3540 = vcmask 1024
    %3541 = vst.msk [vmem:[%s59] sm:$0x3] %vm3540, %v3537
    // Predicated region
    $region150: #{forward.1} parent=1 // pred_check
      _
    $region151: #{forward.1} parent=1 // pred_check_branch
      %3543 = sbr.rel (0) target = $region153
    $region152: #{forward.1} parent=1 // pred_region
      _
    $region153: #{forward.1} parent=1 // pred_fallthru
      _
    // Predicated region
    $region154: #{forward.1} parent=1 // pred_check
      _
    $region155: #{forward.1} parent=1 // pred_check_branch
      %3545 = sbr.rel (0) target = $region157
    $region156: #{forward.1} parent=1 // pred_region
      _
    $region157: #{forward.1} parent=1 // pred_fallthru
      _
    %3546 = vsyncpa [#allocation4], 1
    %3547 = vsyncpa [#allocation6], 1
    %3548 = vsyncpa [#allocation9], 1
    %3549 = vsyncpa [#allocation12], 1
    %3550 = vsyncpa [#allocation15], 1

</llo_original>
